<compile_context>
chip_gen: v5e
topology: v5e:2x2
jax: 0.10.0
libtpu: 0.0.40
codegen_flags: <defaults>
</compile_context>

<pallas_src>
import math
import functools

import numpy as np
import jax
import jax.numpy as jnp
from jax.experimental import pallas as pl
from jax.experimental.pallas import tpu as pltpu


_SQRT1_2 = 1.0 / math.sqrt(2.0)
_INV_SQRT_2PI = 1.0 / math.sqrt(2.0 * math.pi)


def _round_up(x, m):
    return ((x + m - 1) // m) * m


def _erf_approx(x):
    # Abramowitz & Stegun 7.1.26 rational approximation, |err| <= 1.5e-7.  The divide is an EUP
    # approximate reciprocal + one Newton step so the elementwise tail stays off the VALU path.
    a1, a2, a3, a4, a5 = 0.254829592, -0.284496736, 1.421413741, -1.453152027, 1.061405429
    p = 0.3275911
    ax = jnp.abs(x)
    d = 1.0 + p * ax
    r = pl.reciprocal(d, approx=True)
    t = r * (2.0 - d * r)                      # Newton refinement of 1/d
    poly = ((((a5 * t + a4) * t + a3) * t + a2) * t + a1) * t
    y = 1.0 - poly * jnp.exp(-ax * ax)
    return jnp.where(x >= 0.0, y, -y)


def _relu_moments(mu, var):
    inv_sig = jax.lax.rsqrt(var)               # EUP rsqrt replaces sqrt + divide
    sig = var * inv_sig
    alpha = mu * inv_sig
    cdf = 0.5 * (1.0 + _erf_approx(alpha * _SQRT1_2))
    pdf = _INV_SQRT_2PI * jnp.exp(-0.5 * alpha * alpha)
    relu_mean = mu * cdf + sig * pdf
    relu_var = (var + mu * mu) * cdf + mu * sig * pdf - relu_mean * relu_mean
    return relu_mean, jnp.maximum(relu_var, 1e-8)  # clamp guards cancellation; do not remove


def _clt_kernel_fullk(patches_ref, w_mu_ref, w_s2_ref, bias_ref, out_ref):
    """grid = (n_m,) [parallel].  Full (padded) K contraction per step: no zero-init store, no
    accumulator read-modify-write; weight blocks have a constant index_map so they stay resident."""
    p = patches_ref[...]                                       # [tm, k_pad] bf16
    mu = jnp.dot(p, w_mu_ref[...], preferred_element_type=jnp.float32) + bias_ref[...]
    var = jnp.dot(p * p, w_s2_ref[...], preferred_element_type=jnp.float32) + 1e-8
    relu_mean, relu_var = _relu_moments(mu, var)
    out_ref[0, :, :] = relu_mean
    out_ref[1, :, :] = relu_var


def _clt_kernel_blockk(patches_ref, w_mu_ref, w_s2_ref, bias_ref, out_ref):
    """grid = (n_m [parallel], n_k [reduction]).  The output block index is independent of k, so
    out_ref stays resident in VMEM across K and holds the f32 accumulators (mu in [0], var in [1])."""
    k = pl.program_id(1)

    @pl.when(k == 0)
    def _init():
        out_ref[...] = jnp.zeros(out_ref.shape, out_ref.dtype)

    p = patches_ref[...]                                       # [tm, tk] bf16
    out_ref[0, :, :] += jnp.dot(p, w_mu_ref[...], preferred_element_type=jnp.float32)
    out_ref[1, :, :] += jnp.dot(p * p, w_s2_ref[...], preferred_element_type=jnp.float32)

    @pl.when(k == pl.num_programs(1) - 1)
    def _finalize():
        mu = out_ref[0, :, :] + bias_ref[...]                  # bias folded in once
        var = out_ref[1, :, :] + 1e-8
        relu_mean, relu_var = _relu_moments(mu, var)
        out_ref[0, :, :] = relu_mean
        out_ref[1, :, :] = relu_var


def _im2col(x, k, stride, padding):
    """x: [B, C, H, W] -> patches [B*Ho*Wo, C*k*k]; feature order (C, kh, kw) matches PyTorch
    OIHW weight flattening."""
    B, C, H, W = x.shape
    if padding > 0:
        x = jnp.pad(x, ((0, 0), (0, 0), (padding, padding), (padding, padding)))
    Hp, Wp = H + 2 * padding, W + 2 * padding
    Ho = (Hp - k) // stride + 1
    Wo = (Wp - k) // stride + 1
    cols = []
    for i in range(k):
        for j in range(k):
            cols.append(x[:, :, i:i + stride * Ho:stride, j:j + stride * Wo:stride])
    patches = jnp.stack(cols, axis=2)                 # [B, C, k*k, Ho, Wo]
    patches = patches.reshape(B, C * k * k, Ho, Wo)   # feature idx = c*k*k + i*k + j
    patches = patches.transpose(0, 2, 3, 1).reshape(B * Ho * Wo, C * k * k)
    return patches, Ho, Wo


@functools.partial(jax.jit, static_argnames=("kernel_size", "stride", "padding"))
def clt_conv_forward(mu_inp, mu_w, logsig2_w, bias, *, kernel_size, stride=1, padding=0):
    """Forward of CLTConv (var_inp=None, relu_act=True). NCHW in / NCHW out, returns (mu, var)."""
    B, Cin, H, W = mu_inp.shape
    Cout = mu_w.shape[0]
    ksz = kernel_size
    K = Cin * ksz * ksz

    # bf16 activations/weights with f32 accumulation; casting BEFORE im2col halves the HBM
    # traffic of the k*k-inflated patches stream.
    # TODO(synk): fuse patch extraction into the kernel (memory_space=pl.ANY + manual
    # make_async_copy of the needed input rows per (B, Ho) tile) to eliminate the im2col HBM
    # round trip and the padding copy entirely.
    x = mu_inp.astype(jnp.bfloat16)
    patches, Ho, Wo = _im2col(x, ksz, stride, padding)                          # [M, K] bf16
    M = patches.shape[0]

    # ---- lane / MXU-friendly padding -------------------------------------------------------
    cout_pad = _round_up(Cout, 128)          # lane-dense output stores, full MXU N columns
    if _round_up(K, 256) <= 2048:            # K always padded to a 256 multiple (aligned feeds)
        tk = _round_up(K, 256)
        k_pad = tk
        full_k = True                        # whole contraction resident -> grid (n_m,)
    else:
        tk = 512
        k_pad = _round_up(K, tk)
        full_k = False

    # ---- M tiling ----------------------------------------------------------------------------
    # >= 2 tiles for moderate M (v7x megacore via the "parallel" axis), big tiles for large M
    # (per-step overhead amortization on v5e/v6e).  Working set stays < 32 MiB (v7x-safe).
    if M <= 256:
        tm = _round_up(M, 8)
    elif M <= 2048:
        tm = _round_up((M + 1) // 2, 8)
    else:
        tm = 1024
    m_pad = _round_up(M, tm)
    n_m = m_pad // tm
    n_k = k_pad // tk

    if m_pad != M or k_pad != K:
        patches = jnp.pad(patches, ((0, m_pad - M), (0, k_pad - K)))

    w_mu = mu_w.reshape(Cout, K).T.astype(jnp.bfloat16)                         # [K, Cout]
    # exp() FIRST, then zero-pad: padded K rows / Cout columns must contribute zero variance
    # (padding logsig2 before exp would inject exp(0)=1 into padded columns).
    w_s2 = jnp.exp(logsig2_w.astype(jnp.float32)).reshape(Cout, K).T.astype(jnp.bfloat16)
    if k_pad != K or cout_pad != Cout:
        w_mu = jnp.pad(w_mu, ((0, k_pad - K), (0, cout_pad - Cout)))
        w_s2 = jnp.pad(w_s2, ((0, k_pad - K), (0, cout_pad - Cout)))
    bias2d = jnp.pad(bias.reshape(1, Cout).astype(jnp.float32),
                     ((0, 0), (0, cout_pad - Cout)))

    out_shape = jax.ShapeDtypeStruct((2, m_pad, cout_pad), jnp.float32)
    cost = pl.CostEstimate(
        flops=int(2 * 2 * m_pad * k_pad * cout_pad),
        transcendentals=int(4 * m_pad * cout_pad),
        bytes_accessed=int(patches.size * 2
                           + (w_mu.size + w_s2.size) * 2 * (1 if full_k else n_m)
                           + 2 * m_pad * cout_pad * 4 + cout_pad * 4),
    )
    # NOTE: default double-buffering; on v5e a deeper pl.Buffered(3) on the patches spec can
    # further hide DMA jitter, but we stay generation-agnostic here.
    cparams = dict(vmem_limit_bytes=32 * 1024 * 1024)

    if full_k:
        out = pl.pallas_call(
            _clt_kernel_fullk,
            out_shape=out_shape,
            grid_spec=pltpu.PrefetchScalarGridSpec(
                num_scalar_prefetch=0,
                grid=(n_m,),
                in_specs=[
                    pl.BlockSpec((tm, tk), lambda i: (i, 0)),          # patches
                    pl.BlockSpec((tk, cout_pad), lambda i: (0, 0)),    # W_mu (resident)
                    pl.BlockSpec((tk, cout_pad), lambda i: (0, 0)),    # exp(logsig2_w) (resident)
                    pl.BlockSpec((1, cout_pad), lambda i: (0, 0)),     # bias
                ],
                out_specs=pl.BlockSpec((2, tm, cout_pad), lambda i: (0, i, 0)),
            ),
            compiler_params=pltpu.CompilerParams(
                dimension_semantics=("parallel",), **cparams),
            cost_estimate=cost,
        )(patches, w_mu, w_s2, bias2d)
    else:
        out = pl.pallas_call(
            _clt_kernel_blockk,
            out_shape=out_shape,
            grid_spec=pltpu.PrefetchScalarGridSpec(
                num_scalar_prefetch=0,
                grid=(n_m, n_k),
                in_specs=[
                    pl.BlockSpec((tm, tk), lambda i, k: (i, k)),           # patches
                    pl.BlockSpec((tk, cout_pad), lambda i, k: (k, 0)),     # W_mu
                    pl.BlockSpec((tk, cout_pad), lambda i, k: (k, 0)),     # exp(logsig2_w)
                    pl.BlockSpec((1, cout_pad), lambda i, k: (0, 0)),      # bias
                ],
                out_specs=pl.BlockSpec((2, tm, cout_pad), lambda i, k: (0, i, 0)),
            ),
            compiler_params=pltpu.CompilerParams(
                dimension_semantics=("parallel", "arbitrary"), **cparams),
            cost_estimate=cost,
        )(patches, w_mu, w_s2, bias2d)

    # Slice off M / Cout padding; return NCHW to match the PyTorch module.
    # TODO(synk): expose a channels_last option so consumers that accept NHWC skip this transpose.
    mu_out = out[0, :M, :Cout].reshape(B, Ho, Wo, Cout).transpose(0, 3, 1, 2)
    var_out = out[1, :M, :Cout].reshape(B, Ho, Wo, Cout).transpose(0, 3, 1, 2)
    return mu_out, var_out


def _ref_forward(x, mu_w, logsig2_w, bias, stride, padding):
    """Pure-JAX/XLA reference at matching precision (bf16 inputs, f32 accumulation)."""
    dn = ("NCHW", "OIHW", "NCHW")
    xb = x.astype(jnp.bfloat16)
    wb = mu_w.astype(jnp.bfloat16)
    s2b = jnp.exp(logsig2_w.astype(jnp.float32)).astype(jnp.bfloat16)
    mu = jax.lax.conv_general_dilated(
        xb, wb, (stride, stride), [(padding, padding)] * 2,
        dimension_numbers=dn, preferred_element_type=jnp.float32)
    mu = mu + bias[None, :, None, None].astype(jnp.float32)
    var = jax.lax.conv_general_dilated(
        xb * xb, s2b, (stride, stride), [(padding, padding)] * 2,
        dimension_numbers=dn, preferred_element_type=jnp.float32) + 1e-8
    sig = jnp.sqrt(var)
    alpha = mu / sig
    cdf = 0.5 * (1.0 + jax.scipy.special.erf(alpha / np.sqrt(2.0)))
    pdf = 1.0 / np.sqrt(2.0 * np.pi) * jnp.exp(-0.5 * alpha * alpha)
    relu_mean = mu * cdf + sig * pdf
    relu_var = jnp.maximum((var + mu * mu) * cdf + mu * sig * pdf - relu_mean ** 2, 1e-8)
    return relu_mean, relu_var


if __name__ == "__main__":
    key = jax.random.PRNGKey(0)
    B, Cin, H, W = 2, 4, 16, 16
    Cout, ksz = 8, 3
    k1, k2, k3 = jax.random.split(key, 3)

    x = jax.random.normal(k1, (B, Cin, H, W), jnp.float32)

    # Deterministic init mirroring CLTConv.reset_parameters():
    #   n = in_channels * prod(range(1, kernel_size)); mu_w ~ N(0, 1/sqrt(n))
    n = Cin
    for kk in range(1, ksz):
        n *= kk
    mu_w = (1.0 / math.sqrt(n)) * jax.random.normal(k2, (Cout, Cin, ksz, ksz), jnp.float32)
    logsig2_w = -9.0 + 0.001 * jax.random.normal(k3, (Cout, Cin, ksz, ksz), jnp.float32)
    bias = jnp.zeros((Cout,), jnp.float32)

    mu_out, var_out = clt_conv_forward(x, mu_w, logsig2_w, bias,
                                       kernel_size=ksz, stride=1, padding=0)
    jax.block_until_ready((mu_out, var_out))

    mu_ref, var_ref = _ref_forward(x, mu_w, logsig2_w, bias, 1, 0)
    np.testing.assert_allclose(np.asarray(mu_out), np.asarray(mu_ref), rtol=5e-3, atol=2e-5)
    np.testing.assert_allclose(np.asarray(var_out), np.asarray(var_ref), rtol=5e-3, atol=2e-5)

    print("KERNEL_OK")
</pallas_src>

<mosaic_0001>
module attributes {stable_mosaic.version = 11 : i64} {
  func.func @_clt_kernel_fullk(%arg0: i32, %arg1: memref<200x256xbf16, #tpu.memory_space<vmem>>, %arg2: memref<256x128xbf16, #tpu.memory_space<vmem>>, %arg3: memref<256x128xbf16, #tpu.memory_space<vmem>>, %arg4: memref<1x128xf32, #tpu.memory_space<vmem>>, %arg5: memref<2x200x128xf32, #tpu.memory_space<vmem>>) attributes {dimension_semantics = [#tpu.dimension_semantics<parallel>], iteration_bounds = array<i64: 2>, scalar_prefetch = 0 : i64, scratch_operands = 0 : i64, tpu.core_type = #tpu.core_type<tc>, window_params = [{transform_indices = @transform_0, window_bounds = array<i64: 200, 256>}, {pipeline_mode = #tpu.pipeline_mode<synchronous>, transform_indices = @transform_1, window_bounds = array<i64: 256, 128>}, {pipeline_mode = #tpu.pipeline_mode<synchronous>, transform_indices = @transform_2, window_bounds = array<i64: 256, 128>}, {pipeline_mode = #tpu.pipeline_mode<synchronous>, transform_indices = @transform_3, window_bounds = array<i64: 1, 128>}, {transform_indices = @transform_4, window_bounds = array<i64: 2, 200, 128>}]} {
    %c0 = arith.constant 0 : index
    %c0_0 = arith.constant 0 : index
    %0 = vector.load %arg1[%c0, %c0_0] : memref<200x256xbf16, #tpu.memory_space<vmem>>, vector<200x256xbf16>
    %c0_1 = arith.constant 0 : index
    %c0_2 = arith.constant 0 : index
    %1 = vector.load %arg2[%c0_1, %c0_2] : memref<256x128xbf16, #tpu.memory_space<vmem>>, vector<256x128xbf16>
    %cst = arith.constant dense<0.000000e+00> : vector<200x128xf32>
    %2 = tpu.matmul %0, %1, %cst {dimension_numbers = #tpu.dot_dimension_numbers<[1], [0], [0], [1], [0, 0, 1, 1], [], []>} : vector<200x256xbf16>, vector<256x128xbf16>, vector<200x128xf32> -> vector<200x128xf32>
    %c0_3 = arith.constant 0 : index
    %c0_4 = arith.constant 0 : index
    %3 = vector.load %arg4[%c0_3, %c0_4] : memref<1x128xf32, #tpu.memory_space<vmem>>, vector<1x128xf32>
    %4 = vector.broadcast %3 : vector<1x128xf32> to vector<200x128xf32>
    %5 = arith.addf %2, %4 : vector<200x128xf32>
    %6 = arith.mulf %0, %0 : vector<200x256xbf16>
    %c0_5 = arith.constant 0 : index
    %c0_6 = arith.constant 0 : index
    %7 = vector.load %arg3[%c0_5, %c0_6] : memref<256x128xbf16, #tpu.memory_space<vmem>>, vector<256x128xbf16>
    %cst_7 = arith.constant dense<0.000000e+00> : vector<200x128xf32>
    %8 = tpu.matmul %6, %7, %cst_7 {dimension_numbers = #tpu.dot_dimension_numbers<[1], [0], [0], [1], [0, 0, 1, 1], [], []>} : vector<200x256xbf16>, vector<256x128xbf16>, vector<200x128xf32> -> vector<200x128xf32>
    %cst_8 = arith.constant 9.99999993E-9 : f32
    %9 = vector.broadcast %cst_8 : f32 to vector<200x128xf32>
    %10 = arith.addf %8, %9 : vector<200x128xf32>
    %11 = math.rsqrt %10 : vector<200x128xf32>
    %12 = arith.mulf %10, %11 : vector<200x128xf32>
    %13 = arith.mulf %5, %11 : vector<200x128xf32>
    %cst_9 = arith.constant 0.707106769 : f32
    %14 = vector.broadcast %cst_9 : f32 to vector<200x128xf32>
    %15 = arith.mulf %13, %14 : vector<200x128xf32>
    %16 = math.absf %15 : vector<200x128xf32>
    %cst_10 = arith.constant 0.327591091 : f32
    %17 = vector.broadcast %cst_10 : f32 to vector<200x128xf32>
    %18 = arith.mulf %17, %16 : vector<200x128xf32>
    %cst_11 = arith.constant 1.000000e+00 : f32
    %19 = vector.broadcast %cst_11 : f32 to vector<200x128xf32>
    %20 = arith.addf %19, %18 : vector<200x128xf32>
    %21 = tpu.reciprocal %20 {approx = true} : vector<200x128xf32> -> vector<200x128xf32>
    %22 = arith.mulf %20, %21 : vector<200x128xf32>
    %cst_12 = arith.constant 2.000000e+00 : f32
    %23 = vector.broadcast %cst_12 : f32 to vector<200x128xf32>
    %24 = arith.subf %23, %22 : vector<200x128xf32>
    %25 = arith.mulf %21, %24 : vector<200x128xf32>
    %cst_13 = arith.constant 1.06140542 : f32
    %26 = vector.broadcast %cst_13 : f32 to vector<200x128xf32>
    %27 = arith.mulf %26, %25 : vector<200x128xf32>
    %cst_14 = arith.constant -1.45315206 : f32
    %28 = vector.broadcast %cst_14 : f32 to vector<200x128xf32>
    %29 = arith.addf %27, %28 : vector<200x128xf32>
    %30 = arith.mulf %29, %25 : vector<200x128xf32>
    %cst_15 = arith.constant 1.42141378 : f32
    %31 = vector.broadcast %cst_15 : f32 to vector<200x128xf32>
    %32 = arith.addf %30, %31 : vector<200x128xf32>
    %33 = arith.mulf %32, %25 : vector<200x128xf32>
    %cst_16 = arith.constant -0.284496725 : f32
    %34 = vector.broadcast %cst_16 : f32 to vector<200x128xf32>
    %35 = arith.addf %33, %34 : vector<200x128xf32>
    %36 = arith.mulf %35, %25 : vector<200x128xf32>
    %cst_17 = arith.constant 0.254829586 : f32
    %37 = vector.broadcast %cst_17 : f32 to vector<200x128xf32>
    %38 = arith.addf %36, %37 : vector<200x128xf32>
    %39 = arith.mulf %38, %25 : vector<200x128xf32>
    %cst_18 = arith.constant 0.000000e+00 : f32
    %40 = vector.broadcast %cst_18 : f32 to vector<200x128xf32>
    %41 = arith.subf %40, %16 : vector<200x128xf32>
    %42 = arith.mulf %41, %16 : vector<200x128xf32>
    %43 = math.exp %42 : vector<200x128xf32>
    %44 = arith.mulf %39, %43 : vector<200x128xf32>
    %cst_19 = arith.constant 1.000000e+00 : f32
    %45 = vector.broadcast %cst_19 : f32 to vector<200x128xf32>
    %46 = arith.subf %45, %44 : vector<200x128xf32>
    %cst_20 = arith.constant 0.000000e+00 : f32
    %47 = vector.broadcast %cst_20 : f32 to vector<200x128xf32>
    %48 = arith.cmpf oge, %15, %47 : vector<200x128xf32>
    %cst_21 = arith.constant 0.000000e+00 : f32
    %49 = vector.broadcast %cst_21 : f32 to vector<200x128xf32>
    %50 = arith.subf %49, %46 : vector<200x128xf32>
    %51 = arith.select %48, %46, %50 : vector<200x128xi1>, vector<200x128xf32>
    %cst_22 = arith.constant 1.000000e+00 : f32
    %52 = vector.broadcast %cst_22 : f32 to vector<200x128xf32>
    %53 = arith.addf %52, %51 : vector<200x128xf32>
    %cst_23 = arith.constant 5.000000e-01 : f32
    %54 = vector.broadcast %cst_23 : f32 to vector<200x128xf32>
    %55 = arith.mulf %54, %53 : vector<200x128xf32>
    %cst_24 = arith.constant -5.000000e-01 : f32
    %56 = vector.broadcast %cst_24 : f32 to vector<200x128xf32>
    %57 = arith.mulf %56, %13 : vector<200x128xf32>
    %58 = arith.mulf %57, %13 : vector<200x128xf32>
    %59 = math.exp %58 : vector<200x128xf32>
    %cst_25 = arith.constant 0.398942292 : f32
    %60 = vector.broadcast %cst_25 : f32 to vector<200x128xf32>
    %61 = arith.mulf %60, %59 : vector<200x128xf32>
    %62 = arith.mulf %5, %55 : vector<200x128xf32>
    %63 = arith.mulf %12, %61 : vector<200x128xf32>
    %64 = arith.addf %62, %63 : vector<200x128xf32>
    %65 = arith.mulf %5, %5 : vector<200x128xf32>
    %66 = arith.addf %10, %65 : vector<200x128xf32>
    %67 = arith.mulf %66, %55 : vector<200x128xf32>
    %68 = arith.mulf %5, %12 : vector<200x128xf32>
    %69 = arith.mulf %68, %61 : vector<200x128xf32>
    %70 = arith.addf %67, %69 : vector<200x128xf32>
    %71 = arith.mulf %64, %64 : vector<200x128xf32>
    %72 = arith.subf %70, %71 : vector<200x128xf32>
    %cst_26 = arith.constant 9.99999993E-9 : f32
    %73 = vector.broadcast %cst_26 : f32 to vector<200x128xf32>
    %74 = arith.maximumf %72, %73 : vector<200x128xf32>
    %c0_27 = arith.constant 0 : index
    %c0_28 = arith.constant 0 : index
    %c0_29 = arith.constant 0 : index
    %75 = vector.load %arg5[%c0_27, %c0_28, %c0_29] : memref<2x200x128xf32, #tpu.memory_space<vmem>>, vector<1x200x128xf32>
    %76 = vector.shape_cast %75 : vector<1x200x128xf32> to vector<200x128xf32>
    %77 = vector.shape_cast %64 : vector<200x128xf32> to vector<1x200x128xf32>
    tpu.vector_store %arg5[%c0_27, %c0_28, %c0_29], %77 {strides = array<i32>} : memref<2x200x128xf32, #tpu.memory_space<vmem>>, vector<1x200x128xf32>,
    %c1 = arith.constant 1 : index
    %c0_30 = arith.constant 0 : index
    %c0_31 = arith.constant 0 : index
    %78 = vector.load %arg5[%c1, %c0_30, %c0_31] : memref<2x200x128xf32, #tpu.memory_space<vmem>>, vector<1x200x128xf32>
    %79 = vector.shape_cast %78 : vector<1x200x128xf32> to vector<200x128xf32>
    %80 = vector.shape_cast %74 : vector<200x128xf32> to vector<1x200x128xf32>
    tpu.vector_store %arg5[%c1, %c0_30, %c0_31], %80 {strides = array<i32>} : memref<2x200x128xf32, #tpu.memory_space<vmem>>, vector<1x200x128xf32>,
    return
  }
  func.func @transform_0(%arg0: i32) -> (i32, i32) {
    %c0_i32 = arith.constant 0 : i32
    %c0_i32_0 = arith.constant 0 : i32
    return %arg0, %c0_i32 : i32, i32
  }
  func.func @transform_1(%arg0: i32) -> (i32, i32) {
    %c0_i32 = arith.constant 0 : i32
    %c0_i32_0 = arith.constant 0 : i32
    %c0_i32_1 = arith.constant 0 : i32
    return %c0_i32, %c0_i32_0 : i32, i32
  }
  func.func @transform_2(%arg0: i32) -> (i32, i32) {
    %c0_i32 = arith.constant 0 : i32
    %c0_i32_0 = arith.constant 0 : i32
    %c0_i32_1 = arith.constant 0 : i32
    return %c0_i32, %c0_i32_0 : i32, i32
  }
  func.func @transform_3(%arg0: i32) -> (i32, i32) {
    %c0_i32 = arith.constant 0 : i32
    %c0_i32_0 = arith.constant 0 : i32
    %c0_i32_1 = arith.constant 0 : i32
    return %c0_i32, %c0_i32_0 : i32, i32
  }
  func.func @transform_4(%arg0: i32) -> (i32, i32, i32) {
    %c0_i32 = arith.constant 0 : i32
    %c0_i32_0 = arith.constant 0 : i32
    %c0_i32_1 = arith.constant 0 : i32
    return %c0_i32, %arg0, %c0_i32_0 : i32, i32, i32
  }
}

</mosaic_0001>

<llo_original>
// kernel: squeeze.2
$region0: #{squeeze.2}
  %s0 = inlined_call_operand.vmem [shape: f32[1,392,8], index: 0, kind: input, shape index: {}]
  %s1 = inlined_call_operand.vmem [shape: f32[2,14,14,8], index: 1, kind: output, shape index: {}]
  %v2 = vld [vmem:[%s0] sm:$0xff]
  %vm3 = vcmask 113664
  %4 = vst.msk [vmem:[%s1] sm:$0x1] %vm3, %v2
  %s5 = scalar_lea.vmem %s1, 31
  %6 = vst.msk [vmem:[%s5] sm:$0x2] %vm3, %v2
  %s7 = scalar_lea.vmem %s1, 62
  %8 = vst.msk [vmem:[%s7] sm:$0x4] %vm3, %v2
  %s9 = scalar_lea.vmem %s1, 93
  %10 = vst.msk [vmem:[%s9] sm:$0x8] %vm3, %v2
  %s11 = scalar_lea.vmem %s1, 124
  %12 = vst.msk [vmem:[%s11] sm:$0x10] %vm3, %v2
  %s13 = scalar_lea.vmem %s1, 155
  %14 = vst.msk [vmem:[%s13] sm:$0x20] %vm3, %v2
  %s15 = scalar_lea.vmem %s1, 186
  %16 = vst.msk [vmem:[%s15] sm:$0x40] %vm3, %v2
  %s17 = scalar_lea.vmem %s1, 217
  %18 = vst.msk [vmem:[%s17] sm:$0x80] %vm3, %v2
  %s19 = scalar_lea.vmem %s0, 16
  %v20 = vld [vmem:[%s19] sm:$0xff]
  %21 = vrot.lane.b32.xlu0 %v20, 118
  %v22 = vpop.permute.xlu0 %21
  %vm23 = vcmask 113664
  %s24 = scalar_lea.vmem %s1, 21
  %25 = vst.msk [vmem:[%s24] sm:$0x1] %vm23, %v22
  %s26 = scalar_lea.vmem %s1, 52
  %27 = vst.msk [vmem:[%s26] sm:$0x2] %vm23, %v22
  %s28 = scalar_lea.vmem %s1, 83
  %29 = vst.msk [vmem:[%s28] sm:$0x4] %vm23, %v22
  %s30 = scalar_lea.vmem %s1, 114
  %31 = vst.msk [vmem:[%s30] sm:$0x8] %vm23, %v22
  %s32 = scalar_lea.vmem %s1, 145
  %33 = vst.msk [vmem:[%s32] sm:$0x10] %vm23, %v22
  %s34 = scalar_lea.vmem %s1, 176
  %35 = vst.msk [vmem:[%s34] sm:$0x20] %vm23, %v22
  %s36 = scalar_lea.vmem %s1, 207
  %37 = vst.msk [vmem:[%s36] sm:$0x40] %vm23, %v22
  %s38 = scalar_lea.vmem %s1, 238
  %39 = vst.msk [vmem:[%s38] sm:$0x80] %vm23, %v22
  %s40 = scalar_lea.vmem %s0, 8
  %v41 = vld [vmem:[%s40] sm:$0xff]
  %42 = vrot.lane.b32.xlu0 %v41, 116
  %v43 = vpop.permute.xlu0 %42
  %vm44 = vcmask 113664
  %s45 = scalar_lea.vmem %s1, 10
  %46 = vst.msk [vmem:[%s45] sm:$0x1] %vm44, %v43
  %s47 = scalar_lea.vmem %s1, 41
  %48 = vst.msk [vmem:[%s47] sm:$0x2] %vm44, %v43
  %s49 = scalar_lea.vmem %s1, 72
  %50 = vst.msk [vmem:[%s49] sm:$0x4] %vm44, %v43
  %s51 = scalar_lea.vmem %s1, 103
  %52 = vst.msk [vmem:[%s51] sm:$0x8] %vm44, %v43
  %s53 = scalar_lea.vmem %s1, 134
  %54 = vst.msk [vmem:[%s53] sm:$0x10] %vm44, %v43
  %s55 = scalar_lea.vmem %s1, 165
  %56 = vst.msk [vmem:[%s55] sm:$0x20] %vm44, %v43
  %s57 = scalar_lea.vmem %s1, 196
  %58 = vst.msk [vmem:[%s57] sm:$0x40] %vm44, %v43
  %s59 = scalar_lea.vmem %s1, 227
  %60 = vst.msk [vmem:[%s59] sm:$0x80] %vm44, %v43
  %v61 = vld [vmem:[%s0] sm:$0xff]
  %62 = vrot.lane.b32.xlu0 %v61, 114
  %v63 = vpop.permute.xlu0 %62
  %vm64 = vcmask 113664
  %s65 = scalar_lea.vmem %s1, 1
  %66 = vst.msk [vmem:[%s65] sm:$0x1] %vm64, %v63
  %s67 = scalar_lea.vmem %s1, 32
  %68 = vst.msk [vmem:[%s67] sm:$0x2] %vm64, %v63
  %s69 = scalar_lea.vmem %s1, 63
  %70 = vst.msk [vmem:[%s69] sm:$0x4] %vm64, %v63
  %s71 = scalar_lea.vmem %s1, 94
  %72 = vst.msk [vmem:[%s71] sm:$0x8] %vm64, %v63
  %s73 = scalar_lea.vmem %s1, 125
  %74 = vst.msk [vmem:[%s73] sm:$0x10] %vm64, %v63
  %s75 = scalar_lea.vmem %s1, 156
  %76 = vst.msk [vmem:[%s75] sm:$0x20] %vm64, %v63
  %s77 = scalar_lea.vmem %s1, 187
  %78 = vst.msk [vmem:[%s77] sm:$0x40] %vm64, %v63
  %s79 = scalar_lea.vmem %s1, 218
  %80 = vst.msk [vmem:[%s79] sm:$0x80] %vm64, %v63
  %s81 = scalar_lea.vmem %s0, 16
  %v82 = vld [vmem:[%s81] sm:$0xff]
  %83 = vrot.lane.b32.xlu0 %v82, 104
  %v84 = vpop.permute.xlu0 %83
  %vm85 = vcmask 113664
  %s86 = scalar_lea.vmem %s1, 22
  %87 = vst.msk [vmem:[%s86] sm:$0x1] %vm85, %v84
  %s88 = scalar_lea.vmem %s1, 53
  %89 = vst.msk [vmem:[%s88] sm:$0x2] %vm85, %v84
  %s90 = scalar_lea.vmem %s1, 84
  %91 = vst.msk [vmem:[%s90] sm:$0x4] %vm85, %v84
  %s92 = scalar_lea.vmem %s1, 115
  %93 = vst.msk [vmem:[%s92] sm:$0x8] %vm85, %v84
  %s94 = scalar_lea.vmem %s1, 146
  %95 = vst.msk [vmem:[%s94] sm:$0x10] %vm85, %v84
  %s96 = scalar_lea.vmem %s1, 177
  %97 = vst.msk [vmem:[%s96] sm:$0x20] %vm85, %v84
  %s98 = scalar_lea.vmem %s1, 208
  %99 = vst.msk [vmem:[%s98] sm:$0x40] %vm85, %v84
  %s100 = scalar_lea.vmem %s1, 239
  %101 = vst.msk [vmem:[%s100] sm:$0x80] %vm85, %v84
  %s102 = scalar_lea.vmem %s0, 8
  %v103 = vld [vmem:[%s102] sm:$0xff]
  %104 = vrot.lane.b32.xlu0 %v103, 102
  %v105 = vpop.permute.xlu0 %104
  %vm106 = vcmask 113664
  %s107 = scalar_lea.vmem %s1, 11
  %108 = vst.msk [vmem:[%s107] sm:$0x1] %vm106, %v105
  %s109 = scalar_lea.vmem %s1, 42
  %110 = vst.msk [vmem:[%s109] sm:$0x2] %vm106, %v105
  %s111 = scalar_lea.vmem %s1, 73
  %112 = vst.msk [vmem:[%s111] sm:$0x4] %vm106, %v105
  %s113 = scalar_lea.vmem %s1, 104
  %114 = vst.msk [vmem:[%s113] sm:$0x8] %vm106, %v105
  %s115 = scalar_lea.vmem %s1, 135
  %116 = vst.msk [vmem:[%s115] sm:$0x10] %vm106, %v105
  %s117 = scalar_lea.vmem %s1, 166
  %118 = vst.msk [vmem:[%s117] sm:$0x20] %vm106, %v105
  %s119 = scalar_lea.vmem %s1, 197
  %120 = vst.msk [vmem:[%s119] sm:$0x40] %vm106, %v105
  %s121 = scalar_lea.vmem %s1, 228
  %122 = vst.msk [vmem:[%s121] sm:$0x80] %vm106, %v105
  %v123 = vld [vmem:[%s0] sm:$0xff]
  %124 = vrot.lane.b32.xlu0 %v123, 100
  %v125 = vpop.permute.xlu0 %124
  %vm126 = vcmask 113664
  %s127 = scalar_lea.vmem %s1, 2
  %128 = vst.msk [vmem:[%s127] sm:$0x1] %vm126, %v125
  %s129 = scalar_lea.vmem %s1, 33
  %130 = vst.msk [vmem:[%s129] sm:$0x2] %vm126, %v125
  %s131 = scalar_lea.vmem %s1, 64
  %132 = vst.msk [vmem:[%s131] sm:$0x4] %vm126, %v125
  %s133 = scalar_lea.vmem %s1, 95
  %134 = vst.msk [vmem:[%s133] sm:$0x8] %vm126, %v125
  %s135 = scalar_lea.vmem %s1, 126
  %136 = vst.msk [vmem:[%s135] sm:$0x10] %vm126, %v125
  %s137 = scalar_lea.vmem %s1, 157
  %138 = vst.msk [vmem:[%s137] sm:$0x20] %vm126, %v125
  %s139 = scalar_lea.vmem %s1, 188
  %140 = vst.msk [vmem:[%s139] sm:$0x40] %vm126, %v125
  %s141 = scalar_lea.vmem %s1, 219
  %142 = vst.msk [vmem:[%s141] sm:$0x80] %vm126, %v125
  %s143 = scalar_lea.vmem %s0, 16
  %v144 = vld [vmem:[%s143] sm:$0xff]
  %145 = vrot.lane.b32.xlu0 %v144, 90
  %v146 = vpop.permute.xlu0 %145
  %vm147 = vcmask 113664
  %s148 = scalar_lea.vmem %s1, 23
  %149 = vst.msk [vmem:[%s148] sm:$0x1] %vm147, %v146
  %s150 = scalar_lea.vmem %s1, 54
  %151 = vst.msk [vmem:[%s150] sm:$0x2] %vm147, %v146
  %s152 = scalar_lea.vmem %s1, 85
  %153 = vst.msk [vmem:[%s152] sm:$0x4] %vm147, %v146
  %s154 = scalar_lea.vmem %s1, 116
  %155 = vst.msk [vmem:[%s154] sm:$0x8] %vm147, %v146
  %s156 = scalar_lea.vmem %s1, 147
  %157 = vst.msk [vmem:[%s156] sm:$0x10] %vm147, %v146
  %s158 = scalar_lea.vmem %s1, 178
  %159 = vst.msk [vmem:[%s158] sm:$0x20] %vm147, %v146
  %s160 = scalar_lea.vmem %s1, 209
  %161 = vst.msk [vmem:[%s160] sm:$0x40] %vm147, %v146
  %s162 = scalar_lea.vmem %s1, 240
  %163 = vst.msk [vmem:[%s162] sm:$0x80] %vm147, %v146
  %s164 = scalar_lea.vmem %s0, 8
  %v165 = vld [vmem:[%s164] sm:$0xff]
  %166 = vrot.lane.b32.xlu0 %v165, 88
  %v167 = vpop.permute.xlu0 %166
  %vm168 = vcmask 113664
  %s169 = scalar_lea.vmem %s1, 12
  %170 = vst.msk [vmem:[%s169] sm:$0x1] %vm168, %v167
  %s171 = scalar_lea.vmem %s1, 43
  %172 = vst.msk [vmem:[%s171] sm:$0x2] %vm168, %v167
  %s173 = scalar_lea.vmem %s1, 74
  %174 = vst.msk [vmem:[%s173] sm:$0x4] %vm168, %v167
  %s175 = scalar_lea.vmem %s1, 105
  %176 = vst.msk [vmem:[%s175] sm:$0x8] %vm168, %v167
  %s177 = scalar_lea.vmem %s1, 136
  %178 = vst.msk [vmem:[%s177] sm:$0x10] %vm168, %v167
  %s179 = scalar_lea.vmem %s1, 167
  %180 = vst.msk [vmem:[%s179] sm:$0x20] %vm168, %v167
  %s181 = scalar_lea.vmem %s1, 198
  %182 = vst.msk [vmem:[%s181] sm:$0x40] %vm168, %v167
  %s183 = scalar_lea.vmem %s1, 229
  %184 = vst.msk [vmem:[%s183] sm:$0x80] %vm168, %v167
  %v185 = vld [vmem:[%s0] sm:$0xff]
  %186 = vrot.lane.b32.xlu0 %v185, 86
  %v187 = vpop.permute.xlu0 %186
  %vm188 = vcmask 113664
  %s189 = scalar_lea.vmem %s1, 3
  %190 = vst.msk [vmem:[%s189] sm:$0x1] %vm188, %v187
  %s191 = scalar_lea.vmem %s1, 34
  %192 = vst.msk [vmem:[%s191] sm:$0x2] %vm188, %v187
  %s193 = scalar_lea.vmem %s1, 65
  %194 = vst.msk [vmem:[%s193] sm:$0x4] %vm188, %v187
  %s195 = scalar_lea.vmem %s1, 96
  %196 = vst.msk [vmem:[%s195] sm:$0x8] %vm188, %v187
  %s197 = scalar_lea.vmem %s1, 127
  %198 = vst.msk [vmem:[%s197] sm:$0x10] %vm188, %v187
  %s199 = scalar_lea.vmem %s1, 158
  %200 = vst.msk [vmem:[%s199] sm:$0x20] %vm188, %v187
  %s201 = scalar_lea.vmem %s1, 189
  %202 = vst.msk [vmem:[%s201] sm:$0x40] %vm188, %v187
  %s203 = scalar_lea.vmem %s1, 220
  %204 = vst.msk [vmem:[%s203] sm:$0x80] %vm188, %v187
  %s205 = scalar_lea.vmem %s0, 16
  %v206 = vld [vmem:[%s205] sm:$0xff]
  %207 = vrot.lane.b32.xlu0 %v206, 76
  %v208 = vpop.permute.xlu0 %207
  %vm209 = vcmask 113664
  %s210 = scalar_lea.vmem %s1, 24
  %211 = vst.msk [vmem:[%s210] sm:$0x1] %vm209, %v208
  %s212 = scalar_lea.vmem %s1, 55
  %213 = vst.msk [vmem:[%s212] sm:$0x2] %vm209, %v208
  %s214 = scalar_lea.vmem %s1, 86
  %215 = vst.msk [vmem:[%s214] sm:$0x4] %vm209, %v208
  %s216 = scalar_lea.vmem %s1, 117
  %217 = vst.msk [vmem:[%s216] sm:$0x8] %vm209, %v208
  %s218 = scalar_lea.vmem %s1, 148
  %219 = vst.msk [vmem:[%s218] sm:$0x10] %vm209, %v208
  %s220 = scalar_lea.vmem %s1, 179
  %221 = vst.msk [vmem:[%s220] sm:$0x20] %vm209, %v208
  %s222 = scalar_lea.vmem %s1, 210
  %223 = vst.msk [vmem:[%s222] sm:$0x40] %vm209, %v208
  %s224 = scalar_lea.vmem %s1, 241
  %225 = vst.msk [vmem:[%s224] sm:$0x80] %vm209, %v208
  %s226 = scalar_lea.vmem %s0, 8
  %v227 = vld [vmem:[%s226] sm:$0xff]
  %228 = vrot.lane.b32.xlu0 %v227, 74
  %v229 = vpop.permute.xlu0 %228
  %vm230 = vcmask 113664
  %s231 = scalar_lea.vmem %s1, 13
  %232 = vst.msk [vmem:[%s231] sm:$0x1] %vm230, %v229
  %s233 = scalar_lea.vmem %s1, 44
  %234 = vst.msk [vmem:[%s233] sm:$0x2] %vm230, %v229
  %s235 = scalar_lea.vmem %s1, 75
  %236 = vst.msk [vmem:[%s235] sm:$0x4] %vm230, %v229
  %s237 = scalar_lea.vmem %s1, 106
  %238 = vst.msk [vmem:[%s237] sm:$0x8] %vm230, %v229
  %s239 = scalar_lea.vmem %s1, 137
  %240 = vst.msk [vmem:[%s239] sm:$0x10] %vm230, %v229
  %s241 = scalar_lea.vmem %s1, 168
  %242 = vst.msk [vmem:[%s241] sm:$0x20] %vm230, %v229
  %s243 = scalar_lea.vmem %s1, 199
  %244 = vst.msk [vmem:[%s243] sm:$0x40] %vm230, %v229
  %s245 = scalar_lea.vmem %s1, 230
  %246 = vst.msk [vmem:[%s245] sm:$0x80] %vm230, %v229
  %v247 = vld [vmem:[%s0] sm:$0xff]
  %248 = vrot.lane.b32.xlu0 %v247, 72
  %v249 = vpop.permute.xlu0 %248
  %vm250 = vcmask 113664
  %s251 = scalar_lea.vmem %s1, 4
  %252 = vst.msk [vmem:[%s251] sm:$0x1] %vm250, %v249
  %s253 = scalar_lea.vmem %s1, 35
  %254 = vst.msk [vmem:[%s253] sm:$0x2] %vm250, %v249
  %s255 = scalar_lea.vmem %s1, 66
  %256 = vst.msk [vmem:[%s255] sm:$0x4] %vm250, %v249
  %s257 = scalar_lea.vmem %s1, 97
  %258 = vst.msk [vmem:[%s257] sm:$0x8] %vm250, %v249
  %s259 = scalar_lea.vmem %s1, 128
  %260 = vst.msk [vmem:[%s259] sm:$0x10] %vm250, %v249
  %s261 = scalar_lea.vmem %s1, 159
  %262 = vst.msk [vmem:[%s261] sm:$0x20] %vm250, %v249
  %s263 = scalar_lea.vmem %s1, 190
  %264 = vst.msk [vmem:[%s263] sm:$0x40] %vm250, %v249
  %s265 = scalar_lea.vmem %s1, 221
  %266 = vst.msk [vmem:[%s265] sm:$0x80] %vm250, %v249
  %s267 = scalar_lea.vmem %s0, 16
  %v268 = vld [vmem:[%s267] sm:$0xff]
  %269 = vrot.lane.b32.xlu0 %v268, 62
  %v270 = vpop.permute.xlu0 %269
  %vm271 = vcmask 113664
  %s272 = scalar_lea.vmem %s1, 25
  %273 = vst.msk [vmem:[%s272] sm:$0x1] %vm271, %v270
  %s274 = scalar_lea.vmem %s1, 56
  %275 = vst.msk [vmem:[%s274] sm:$0x2] %vm271, %v270
  %s276 = scalar_lea.vmem %s1, 87
  %277 = vst.msk [vmem:[%s276] sm:$0x4] %vm271, %v270
  %s278 = scalar_lea.vmem %s1, 118
  %279 = vst.msk [vmem:[%s278] sm:$0x8] %vm271, %v270
  %s280 = scalar_lea.vmem %s1, 149
  %281 = vst.msk [vmem:[%s280] sm:$0x10] %vm271, %v270
  %s282 = scalar_lea.vmem %s1, 180
  %283 = vst.msk [vmem:[%s282] sm:$0x20] %vm271, %v270
  %s284 = scalar_lea.vmem %s1, 211
  %285 = vst.msk [vmem:[%s284] sm:$0x40] %vm271, %v270
  %s286 = scalar_lea.vmem %s1, 242
  %287 = vst.msk [vmem:[%s286] sm:$0x80] %vm271, %v270
  %s288 = scalar_lea.vmem %s0, 8
  %v289 = vld [vmem:[%s288] sm:$0xff]
  %290 = vrot.lane.b32.xlu0 %v289, 60
  %v291 = vpop.permute.xlu0 %290
  %vm292 = vcmask 113664
  %s293 = scalar_lea.vmem %s1, 16
  %294 = vst.msk [vmem:[%s293] sm:$0x1] %vm292, %v291
  %s295 = scalar_lea.vmem %s1, 47
  %296 = vst.msk [vmem:[%s295] sm:$0x2] %vm292, %v291
  %s297 = scalar_lea.vmem %s1, 78
  %298 = vst.msk [vmem:[%s297] sm:$0x4] %vm292, %v291
  %s299 = scalar_lea.vmem %s1, 109
  %300 = vst.msk [vmem:[%s299] sm:$0x8] %vm292, %v291
  %s301 = scalar_lea.vmem %s1, 140
  %302 = vst.msk [vmem:[%s301] sm:$0x10] %vm292, %v291
  %s303 = scalar_lea.vmem %s1, 171
  %304 = vst.msk [vmem:[%s303] sm:$0x20] %vm292, %v291
  %s305 = scalar_lea.vmem %s1, 202
  %306 = vst.msk [vmem:[%s305] sm:$0x40] %vm292, %v291
  %s307 = scalar_lea.vmem %s1, 233
  %308 = vst.msk [vmem:[%s307] sm:$0x80] %vm292, %v291
  %v309 = vld [vmem:[%s0] sm:$0xff]
  %310 = vrot.lane.b32.xlu0 %v309, 58
  %v311 = vpop.permute.xlu0 %310
  %vm312 = vcmask 113664
  %s313 = scalar_lea.vmem %s1, 5
  %314 = vst.msk [vmem:[%s313] sm:$0x1] %vm312, %v311
  %s315 = scalar_lea.vmem %s1, 36
  %316 = vst.msk [vmem:[%s315] sm:$0x2] %vm312, %v311
  %s317 = scalar_lea.vmem %s1, 67
  %318 = vst.msk [vmem:[%s317] sm:$0x4] %vm312, %v311
  %s319 = scalar_lea.vmem %s1, 98
  %320 = vst.msk [vmem:[%s319] sm:$0x8] %vm312, %v311
  %s321 = scalar_lea.vmem %s1, 129
  %322 = vst.msk [vmem:[%s321] sm:$0x10] %vm312, %v311
  %s323 = scalar_lea.vmem %s1, 160
  %324 = vst.msk [vmem:[%s323] sm:$0x20] %vm312, %v311
  %s325 = scalar_lea.vmem %s1, 191
  %326 = vst.msk [vmem:[%s325] sm:$0x40] %vm312, %v311
  %s327 = scalar_lea.vmem %s1, 222
  %328 = vst.msk [vmem:[%s327] sm:$0x80] %vm312, %v311
  %s329 = scalar_lea.vmem %s0, 16
  %v330 = vld [vmem:[%s329] sm:$0xff]
  %331 = vrot.lane.b32.xlu0 %v330, 48
  %v332 = vpop.permute.xlu0 %331
  %vm333 = vcmask 113664
  %s334 = scalar_lea.vmem %s1, 26
  %335 = vst.msk [vmem:[%s334] sm:$0x1] %vm333, %v332
  %s336 = scalar_lea.vmem %s1, 57
  %337 = vst.msk [vmem:[%s336] sm:$0x2] %vm333, %v332
  %s338 = scalar_lea.vmem %s1, 88
  %339 = vst.msk [vmem:[%s338] sm:$0x4] %vm333, %v332
  %s340 = scalar_lea.vmem %s1, 119
  %341 = vst.msk [vmem:[%s340] sm:$0x8] %vm333, %v332
  %s342 = scalar_lea.vmem %s1, 150
  %343 = vst.msk [vmem:[%s342] sm:$0x10] %vm333, %v332
  %s344 = scalar_lea.vmem %s1, 181
  %345 = vst.msk [vmem:[%s344] sm:$0x20] %vm333, %v332
  %s346 = scalar_lea.vmem %s1, 212
  %347 = vst.msk [vmem:[%s346] sm:$0x40] %vm333, %v332
  %s348 = scalar_lea.vmem %s1, 243
  %349 = vst.msk [vmem:[%s348] sm:$0x80] %vm333, %v332
  %s350 = scalar_lea.vmem %s0, 8
  %v351 = vld [vmem:[%s350] sm:$0xff]
  %352 = vrot.lane.b32.xlu0 %v351, 46
  %v353 = vpop.permute.xlu0 %352
  %vm354 = vcmask 113664
  %s355 = scalar_lea.vmem %s1, 17
  %356 = vst.msk [vmem:[%s355] sm:$0x1] %vm354, %v353
  %s357 = scalar_lea.vmem %s1, 48
  %358 = vst.msk [vmem:[%s357] sm:$0x2] %vm354, %v353
  %s359 = scalar_lea.vmem %s1, 79
  %360 = vst.msk [vmem:[%s359] sm:$0x4] %vm354, %v353
  %s361 = scalar_lea.vmem %s1, 110
  %362 = vst.msk [vmem:[%s361] sm:$0x8] %vm354, %v353
  %s363 = scalar_lea.vmem %s1, 141
  %364 = vst.msk [vmem:[%s363] sm:$0x10] %vm354, %v353
  %s365 = scalar_lea.vmem %s1, 172
  %366 = vst.msk [vmem:[%s365] sm:$0x20] %vm354, %v353
  %s367 = scalar_lea.vmem %s1, 203
  %368 = vst.msk [vmem:[%s367] sm:$0x40] %vm354, %v353
  %s369 = scalar_lea.vmem %s1, 234
  %370 = vst.msk [vmem:[%s369] sm:$0x80] %vm354, %v353
  %v371 = vld [vmem:[%s0] sm:$0xff]
  %372 = vrot.lane.b32.xlu0 %v371, 44
  %v373 = vpop.permute.xlu0 %372
  %vm374 = vcmask 113664
  %s375 = scalar_lea.vmem %s1, 6
  %376 = vst.msk [vmem:[%s375] sm:$0x1] %vm374, %v373
  %s377 = scalar_lea.vmem %s1, 37
  %378 = vst.msk [vmem:[%s377] sm:$0x2] %vm374, %v373
  %s379 = scalar_lea.vmem %s1, 68
  %380 = vst.msk [vmem:[%s379] sm:$0x4] %vm374, %v373
  %s381 = scalar_lea.vmem %s1, 99
  %382 = vst.msk [vmem:[%s381] sm:$0x8] %vm374, %v373
  %s383 = scalar_lea.vmem %s1, 130
  %384 = vst.msk [vmem:[%s383] sm:$0x10] %vm374, %v373
  %s385 = scalar_lea.vmem %s1, 161
  %386 = vst.msk [vmem:[%s385] sm:$0x20] %vm374, %v373
  %s387 = scalar_lea.vmem %s1, 192
  %388 = vst.msk [vmem:[%s387] sm:$0x40] %vm374, %v373
  %s389 = scalar_lea.vmem %s1, 223
  %390 = vst.msk [vmem:[%s389] sm:$0x80] %vm374, %v373
  %s391 = scalar_lea.vmem %s0, 16
  %v392 = vld [vmem:[%s391] sm:$0xff]
  %393 = vrot.lane.b32.xlu0 %v392, 34
  %v394 = vpop.permute.xlu0 %393
  %vm395 = vcmask 113664
  %s396 = scalar_lea.vmem %s1, 27
  %397 = vst.msk [vmem:[%s396] sm:$0x1] %vm395, %v394
  %s398 = scalar_lea.vmem %s1, 58
  %399 = vst.msk [vmem:[%s398] sm:$0x2] %vm395, %v394
  %s400 = scalar_lea.vmem %s1, 89
  %401 = vst.msk [vmem:[%s400] sm:$0x4] %vm395, %v394
  %s402 = scalar_lea.vmem %s1, 120
  %403 = vst.msk [vmem:[%s402] sm:$0x8] %vm395, %v394
  %s404 = scalar_lea.vmem %s1, 151
  %405 = vst.msk [vmem:[%s404] sm:$0x10] %vm395, %v394
  %s406 = scalar_lea.vmem %s1, 182
  %407 = vst.msk [vmem:[%s406] sm:$0x20] %vm395, %v394
  %s408 = scalar_lea.vmem %s1, 213
  %409 = vst.msk [vmem:[%s408] sm:$0x40] %vm395, %v394
  %s410 = scalar_lea.vmem %s1, 244
  %411 = vst.msk [vmem:[%s410] sm:$0x80] %vm395, %v394
  %s412 = scalar_lea.vmem %s0, 8
  %v413 = vld [vmem:[%s412] sm:$0xff]
  %414 = vrot.lane.b32.xlu0 %v413, 32
  %v415 = vpop.permute.xlu0 %414
  %vm416 = vcmask 113664
  %s417 = scalar_lea.vmem %s1, 18
  %418 = vst.msk [vmem:[%s417] sm:$0x1] %vm416, %v415
  %s419 = scalar_lea.vmem %s1, 49
  %420 = vst.msk [vmem:[%s419] sm:$0x2] %vm416, %v415
  %s421 = scalar_lea.vmem %s1, 80
  %422 = vst.msk [vmem:[%s421] sm:$0x4] %vm416, %v415
  %s423 = scalar_lea.vmem %s1, 111
  %424 = vst.msk [vmem:[%s423] sm:$0x8] %vm416, %v415
  %s425 = scalar_lea.vmem %s1, 142
  %426 = vst.msk [vmem:[%s425] sm:$0x10] %vm416, %v415
  %s427 = scalar_lea.vmem %s1, 173
  %428 = vst.msk [vmem:[%s427] sm:$0x20] %vm416, %v415
  %s429 = scalar_lea.vmem %s1, 204
  %430 = vst.msk [vmem:[%s429] sm:$0x40] %vm416, %v415
  %s431 = scalar_lea.vmem %s1, 235
  %432 = vst.msk [vmem:[%s431] sm:$0x80] %vm416, %v415
  %v433 = vld [vmem:[%s0] sm:$0xff]
  %434 = vrot.lane.b32.xlu0 %v433, 30
  %v435 = vpop.permute.xlu0 %434
  %vm436 = vcmask 113664
  %s437 = scalar_lea.vmem %s1, 7
  %438 = vst.msk [vmem:[%s437] sm:$0x1] %vm436, %v435
  %s439 = scalar_lea.vmem %s1, 38
  %440 = vst.msk [vmem:[%s439] sm:$0x2] %vm436, %v435
  %s441 = scalar_lea.vmem %s1, 69
  %442 = vst.msk [vmem:[%s441] sm:$0x4] %vm436, %v435
  %s443 = scalar_lea.vmem %s1, 100
  %444 = vst.msk [vmem:[%s443] sm:$0x8] %vm436, %v435
  %s445 = scalar_lea.vmem %s1, 131
  %446 = vst.msk [vmem:[%s445] sm:$0x10] %vm436, %v435
  %s447 = scalar_lea.vmem %s1, 162
  %448 = vst.msk [vmem:[%s447] sm:$0x20] %vm436, %v435
  %s449 = scalar_lea.vmem %s1, 193
  %450 = vst.msk [vmem:[%s449] sm:$0x40] %vm436, %v435
  %s451 = scalar_lea.vmem %s1, 224
  %452 = vst.msk [vmem:[%s451] sm:$0x80] %vm436, %v435
  %s453 = scalar_lea.vmem %s0, 16
  %v454 = vld [vmem:[%s453] sm:$0xff]
  %455 = vrot.lane.b32.xlu0 %v454, 20
  %v456 = vpop.permute.xlu0 %455
  %vm457 = vcmask 113664
  %s458 = scalar_lea.vmem %s1, 28
  %459 = vst.msk [vmem:[%s458] sm:$0x1] %vm457, %v456
  %s460 = scalar_lea.vmem %s1, 59
  %461 = vst.msk [vmem:[%s460] sm:$0x2] %vm457, %v456
  %s462 = scalar_lea.vmem %s1, 90
  %463 = vst.msk [vmem:[%s462] sm:$0x4] %vm457, %v456
  %s464 = scalar_lea.vmem %s1, 121
  %465 = vst.msk [vmem:[%s464] sm:$0x8] %vm457, %v456
  %s466 = scalar_lea.vmem %s1, 152
  %467 = vst.msk [vmem:[%s466] sm:$0x10] %vm457, %v456
  %s468 = scalar_lea.vmem %s1, 183
  %469 = vst.msk [vmem:[%s468] sm:$0x20] %vm457, %v456
  %s470 = scalar_lea.vmem %s1, 214
  %471 = vst.msk [vmem:[%s470] sm:$0x40] %vm457, %v456
  %s472 = scalar_lea.vmem %s1, 245
  %473 = vst.msk [vmem:[%s472] sm:$0x80] %vm457, %v456
  %s474 = scalar_lea.vmem %s0, 8
  %v475 = vld [vmem:[%s474] sm:$0xff]
  %476 = vrot.lane.b32.xlu0 %v475, 18
  %v477 = vpop.permute.xlu0 %476
  %vm478 = vcmask 113664
  %s479 = scalar_lea.vmem %s1, 19
  %480 = vst.msk [vmem:[%s479] sm:$0x1] %vm478, %v477
  %s481 = scalar_lea.vmem %s1, 50
  %482 = vst.msk [vmem:[%s481] sm:$0x2] %vm478, %v477
  %s483 = scalar_lea.vmem %s1, 81
  %484 = vst.msk [vmem:[%s483] sm:$0x4] %vm478, %v477
  %s485 = scalar_lea.vmem %s1, 112
  %486 = vst.msk [vmem:[%s485] sm:$0x8] %vm478, %v477
  %s487 = scalar_lea.vmem %s1, 143
  %488 = vst.msk [vmem:[%s487] sm:$0x10] %vm478, %v477
  %s489 = scalar_lea.vmem %s1, 174
  %490 = vst.msk [vmem:[%s489] sm:$0x20] %vm478, %v477
  %s491 = scalar_lea.vmem %s1, 205
  %492 = vst.msk [vmem:[%s491] sm:$0x40] %vm478, %v477
  %s493 = scalar_lea.vmem %s1, 236
  %494 = vst.msk [vmem:[%s493] sm:$0x80] %vm478, %v477
  %v495 = vld [vmem:[%s0] sm:$0xff]
  %496 = vrot.lane.b32.xlu0 %v495, 16
  %v497 = vpop.permute.xlu0 %496
  %vm498 = vcmask 113664
  %s499 = scalar_lea.vmem %s1, 8
  %500 = vst.msk [vmem:[%s499] sm:$0x1] %vm498, %v497
  %s501 = scalar_lea.vmem %s1, 39
  %502 = vst.msk [vmem:[%s501] sm:$0x2] %vm498, %v497
  %s503 = scalar_lea.vmem %s1, 70
  %504 = vst.msk [vmem:[%s503] sm:$0x4] %vm498, %v497
  %s505 = scalar_lea.vmem %s1, 101
  %506 = vst.msk [vmem:[%s505] sm:$0x8] %vm498, %v497
  %s507 = scalar_lea.vmem %s1, 132
  %508 = vst.msk [vmem:[%s507] sm:$0x10] %vm498, %v497
  %s509 = scalar_lea.vmem %s1, 163
  %510 = vst.msk [vmem:[%s509] sm:$0x20] %vm498, %v497
  %s511 = scalar_lea.vmem %s1, 194
  %512 = vst.msk [vmem:[%s511] sm:$0x40] %vm498, %v497
  %s513 = scalar_lea.vmem %s1, 225
  %514 = vst.msk [vmem:[%s513] sm:$0x80] %vm498, %v497
  %s515 = scalar_lea.vmem %s0, 16
  %v516 = vld [vmem:[%s515] sm:$0xff]
  %s517 = scalar_lea.vmem %s0, 24
  %v518 = vld [vmem:[%s517] sm:$0xff]
  %vm519 = vcmask 998400
  %v520 = vsel %vm519, %v518, %v516
  %521 = vrot.lane.b32.xlu0 %v520, 6
  %v522 = vpop.permute.xlu0 %521
  %vm523 = vcmask 48128
  %s524 = scalar_lea.vmem %s1, 29
  %525 = vst.msk [vmem:[%s524] sm:$0x1] %vm523, %v522
  %s526 = scalar_lea.vmem %s1, 60
  %527 = vst.msk [vmem:[%s526] sm:$0x2] %vm523, %v522
  %s528 = scalar_lea.vmem %s1, 91
  %529 = vst.msk [vmem:[%s528] sm:$0x4] %vm523, %v522
  %s530 = scalar_lea.vmem %s1, 122
  %531 = vst.msk [vmem:[%s530] sm:$0x8] %vm523, %v522
  %s532 = scalar_lea.vmem %s1, 153
  %533 = vst.msk [vmem:[%s532] sm:$0x10] %vm523, %v522
  %s534 = scalar_lea.vmem %s1, 184
  %535 = vst.msk [vmem:[%s534] sm:$0x20] %vm523, %v522
  %s536 = scalar_lea.vmem %s1, 215
  %537 = vst.msk [vmem:[%s536] sm:$0x40] %vm523, %v522
  %s538 = scalar_lea.vmem %s1, 246
  %539 = vst.msk [vmem:[%s538] sm:$0x80] %vm523, %v522
  %vm540 = vcmask 113712
  %s541 = scalar_lea.vmem %s1, 29
  %542 = vst.msk [vmem:[%s541] sm:$0x1] %vm540, %v522
  %s543 = scalar_lea.vmem %s1, 60
  %544 = vst.msk [vmem:[%s543] sm:$0x2] %vm540, %v522
  %s545 = scalar_lea.vmem %s1, 91
  %546 = vst.msk [vmem:[%s545] sm:$0x4] %vm540, %v522
  %s547 = scalar_lea.vmem %s1, 122
  %548 = vst.msk [vmem:[%s547] sm:$0x8] %vm540, %v522
  %s549 = scalar_lea.vmem %s1, 153
  %550 = vst.msk [vmem:[%s549] sm:$0x10] %vm540, %v522
  %s551 = scalar_lea.vmem %s1, 184
  %552 = vst.msk [vmem:[%s551] sm:$0x20] %vm540, %v522
  %s553 = scalar_lea.vmem %s1, 215
  %554 = vst.msk [vmem:[%s553] sm:$0x40] %vm540, %v522
  %s555 = scalar_lea.vmem %s1, 246
  %556 = vst.msk [vmem:[%s555] sm:$0x80] %vm540, %v522
  %s557 = scalar_lea.vmem %s0, 8
  %v558 = vld [vmem:[%s557] sm:$0xff]
  %s559 = scalar_lea.vmem %s0, 16
  %v560 = vld [vmem:[%s559] sm:$0xff]
  %vm561 = vcmask 1014784
  %v562 = vsel %vm561, %v560, %v558
  %563 = vrot.lane.b32.xlu0 %v562, 4
  %v564 = vpop.permute.xlu0 %563
  %vm565 = vcmask 31744
  %s566 = scalar_lea.vmem %s1, 20
  %567 = vst.msk [vmem:[%s566] sm:$0x1] %vm565, %v564
  %s568 = scalar_lea.vmem %s1, 51
  %569 = vst.msk [vmem:[%s568] sm:$0x2] %vm565, %v564
  %s570 = scalar_lea.vmem %s1, 82
  %571 = vst.msk [vmem:[%s570] sm:$0x4] %vm565, %v564
  %s572 = scalar_lea.vmem %s1, 113
  %573 = vst.msk [vmem:[%s572] sm:$0x8] %vm565, %v564
  %s574 = scalar_lea.vmem %s1, 144
  %575 = vst.msk [vmem:[%s574] sm:$0x10] %vm565, %v564
  %s576 = scalar_lea.vmem %s1, 175
  %577 = vst.msk [vmem:[%s576] sm:$0x20] %vm565, %v564
  %s578 = scalar_lea.vmem %s1, 206
  %579 = vst.msk [vmem:[%s578] sm:$0x40] %vm565, %v564
  %s580 = scalar_lea.vmem %s1, 237
  %581 = vst.msk [vmem:[%s580] sm:$0x80] %vm565, %v564
  %vm582 = vcmask 113696
  %s583 = scalar_lea.vmem %s1, 20
  %584 = vst.msk [vmem:[%s583] sm:$0x1] %vm582, %v564
  %s585 = scalar_lea.vmem %s1, 51
  %586 = vst.msk [vmem:[%s585] sm:$0x2] %vm582, %v564
  %s587 = scalar_lea.vmem %s1, 82
  %588 = vst.msk [vmem:[%s587] sm:$0x4] %vm582, %v564
  %s589 = scalar_lea.vmem %s1, 113
  %590 = vst.msk [vmem:[%s589] sm:$0x8] %vm582, %v564
  %s591 = scalar_lea.vmem %s1, 144
  %592 = vst.msk [vmem:[%s591] sm:$0x10] %vm582, %v564
  %s593 = scalar_lea.vmem %s1, 175
  %594 = vst.msk [vmem:[%s593] sm:$0x20] %vm582, %v564
  %s595 = scalar_lea.vmem %s1, 206
  %596 = vst.msk [vmem:[%s595] sm:$0x40] %vm582, %v564
  %s597 = scalar_lea.vmem %s1, 237
  %598 = vst.msk [vmem:[%s597] sm:$0x80] %vm582, %v564
  %v599 = vld [vmem:[%s0] sm:$0xff]
  %s600 = scalar_lea.vmem %s0, 8
  %v601 = vld [vmem:[%s600] sm:$0xff]
  %vm602 = vcmask 1031168
  %v603 = vsel %vm602, %v601, %v599
  %604 = vrot.lane.b32.xlu0 %v603, 2
  %v605 = vpop.permute.xlu0 %604
  %vm606 = vcmask 15360
  %s607 = scalar_lea.vmem %s1, 9
  %608 = vst.msk [vmem:[%s607] sm:$0x1] %vm606, %v605
  %s609 = scalar_lea.vmem %s1, 40
  %610 = vst.msk [vmem:[%s609] sm:$0x2] %vm606, %v605
  %s611 = scalar_lea.vmem %s1, 71
  %612 = vst.msk [vmem:[%s611] sm:$0x4] %vm606, %v605
  %s613 = scalar_lea.vmem %s1, 102
  %614 = vst.msk [vmem:[%s613] sm:$0x8] %vm606, %v605
  %s615 = scalar_lea.vmem %s1, 133
  %616 = vst.msk [vmem:[%s615] sm:$0x10] %vm606, %v605
  %s617 = scalar_lea.vmem %s1, 164
  %618 = vst.msk [vmem:[%s617] sm:$0x20] %vm606, %v605
  %s619 = scalar_lea.vmem %s1, 195
  %620 = vst.msk [vmem:[%s619] sm:$0x40] %vm606, %v605
  %s621 = scalar_lea.vmem %s1, 226
  %622 = vst.msk [vmem:[%s621] sm:$0x80] %vm606, %v605
  %vm623 = vcmask 113680
  %s624 = scalar_lea.vmem %s1, 9
  %625 = vst.msk [vmem:[%s624] sm:$0x1] %vm623, %v605
  %s626 = scalar_lea.vmem %s1, 40
  %627 = vst.msk [vmem:[%s626] sm:$0x2] %vm623, %v605
  %s628 = scalar_lea.vmem %s1, 71
  %629 = vst.msk [vmem:[%s628] sm:$0x4] %vm623, %v605
  %s630 = scalar_lea.vmem %s1, 102
  %631 = vst.msk [vmem:[%s630] sm:$0x8] %vm623, %v605
  %s632 = scalar_lea.vmem %s1, 133
  %633 = vst.msk [vmem:[%s632] sm:$0x10] %vm623, %v605
  %s634 = scalar_lea.vmem %s1, 164
  %635 = vst.msk [vmem:[%s634] sm:$0x20] %vm623, %v605
  %s636 = scalar_lea.vmem %s1, 195
  %637 = vst.msk [vmem:[%s636] sm:$0x40] %vm623, %v605
  %s638 = scalar_lea.vmem %s1, 226
  %639 = vst.msk [vmem:[%s638] sm:$0x80] %vm623, %v605

// kernel: clt_conv_forward.1
$region0: #{clt_conv_forward.1}
  #allocation0 [shape = 'u32[]', space=smem, size = 0x4, offset = 0x4, fixed_abs, tag = 'smem constant byte address 0x4 - core index']
  #allocation1 [shape = 'u32[72,128]{1,0:T(1,128)}', space=vmem, size = 0x9000, scoped, tag = 'internal scratch']
  %s0 = inlined_call_operand.vmem [shape: bf16[400,256], index: 0, kind: input, shape index: {}]
  %s1 = inlined_call_operand.vmem [shape: bf16[256,128], index: 1, kind: input, shape index: {}]
  %s2 = inlined_call_operand.vmem [shape: bf16[256,128], index: 2, kind: input, shape index: {}]
  %s3 = inlined_call_operand.vmem [shape: f32[1,128], index: 3, kind: input, shape index: {}]
  %s4 = inlined_call_operand.vmem [shape: f32[2,400,128], index: 4, kind: output, shape index: {}]
  %s5 = sld [smem:[#allocation0]]
  $region83: #{clt_conv_forward.1} parent=0
    _
  %s7 = ssub.s32 1, %s5
  %s8 = scalar_select 0, %s7, %s5
  $region1: #{clt_conv_forward.1} parent=0
    #allocation2 [shape = 'u8[409600]{0}', space=vmem, size = 0x64000, scoped, tag = 'output window, operand 0']
    loop: start=0, step=1, limit=4
    $region2: #{clt_conv_forward.1} parent=1 // loop_pre_header
      _
    $region3: #{clt_conv_forward.1} parent=1 // loop_header
      %s10 = sphi 0, %s14
      %p11 = scmp.ge.s32.totalorder %s10, 4
      %s20 = sphi 0, %s22
      %s23 = sphi 0, %s20
      %s24 = sphi 0, %s23
      %s40 = sphi 0, %s24
      %s44 = sphi 0, %s44
      %s46 = sphi 0, %s44
      %s47 = sphi 0, %s46
      %s61 = sphi 0, %s47
      %s65 = sphi 0, %s65
      %s67 = sphi 0, %s65
      %s68 = sphi 0, %s67
      %s82 = sphi 0, %s68
      %s86 = sphi 0, %s86
      %s88 = sphi 0, %s86
      %s89 = sphi 0, %s88
      %s103 = sphi 0, %s89
      %s109 = sphi 0, %s111
      %s112 = sphi 0, %s109
      %s113 = sphi 0, %s112
      %s129 = sphi 0, %s113
    $region4: #{clt_conv_forward.1} parent=1 // loop_header_branch
      %13 = sbr.rel (%p11) target = $region8
    $region5: #{clt_conv_forward.1} parent=1 // loop_body
      %s15 = ssub.s32 %s10, 1
      %s16 = ssub.s32 %s10, 2
      %s17 = sadd.s32 %s10, 1
      %s18 = ssub.s32 %s10, %s17
      %p19 = scmp.eq.s32.totalorder %s18, 0
      %s21 = sadd.s32 %s20, 1
      %s22 = scalar_select %p19, %s20, %s21
      %p25 = pneg %p19
      %p26 = scmp.eq.s32.totalorder %s10, 1
      %p27 = por %p25, %p26
      %p28 = scmp.ne.s32.totalorder %s20, %s23
      %p29 = scmp.eq.s32.totalorder %s10, 0
      %p30 = por %p28, %p29
      %p31 = scmp.ne.s32.totalorder %s20, %s23
      %p32 = scmp.eq.s32.totalorder %s15, 1
      %p33 = por %p31, %p32
      %p34 = scmp.ne.s32.totalorder %s23, %s24
      %p35 = scmp.eq.s32.totalorder %s15, 0
      %p36 = por %p34, %p35
      %p37 = scmp.ne.s32.totalorder %s23, %s24
      %p38 = scmp.eq.s32.totalorder %s16, 1
      %p39 = por %p37, %p38
      %p41 = scmp.ne.s32.totalorder %s24, %s40
      %p42 = scmp.eq.s32.totalorder %s16, 0
      %p43 = por %p41, %p42
      %s45 = sadd.s32 %s44, 1
      %p48 = scmp.eq.s32.totalorder %s10, 1
      %p49 = scmp.ne.s32.totalorder %s44, %s46
      %p50 = scmp.eq.s32.totalorder %s10, 0
      %p51 = por %p49, %p50
      %p52 = scmp.ne.s32.totalorder %s44, %s46
      %p53 = scmp.eq.s32.totalorder %s15, 1
      %p54 = por %p52, %p53
      %p55 = scmp.ne.s32.totalorder %s46, %s47
      %p56 = scmp.eq.s32.totalorder %s15, 0
      %p57 = por %p55, %p56
      %p58 = scmp.ne.s32.totalorder %s46, %s47
      %p59 = scmp.eq.s32.totalorder %s16, 1
      %p60 = por %p58, %p59
      %p62 = scmp.ne.s32.totalorder %s47, %s61
      %p63 = scmp.eq.s32.totalorder %s16, 0
      %p64 = por %p62, %p63
      %s66 = sadd.s32 %s65, 1
      %p69 = scmp.eq.s32.totalorder %s10, 1
      %p70 = scmp.ne.s32.totalorder %s65, %s67
      %p71 = scmp.eq.s32.totalorder %s10, 0
      %p72 = por %p70, %p71
      %p73 = scmp.ne.s32.totalorder %s65, %s67
      %p74 = scmp.eq.s32.totalorder %s15, 1
      %p75 = por %p73, %p74
      %p76 = scmp.ne.s32.totalorder %s67, %s68
      %p77 = scmp.eq.s32.totalorder %s15, 0
      %p78 = por %p76, %p77
      %p79 = scmp.ne.s32.totalorder %s67, %s68
      %p80 = scmp.eq.s32.totalorder %s16, 1
      %p81 = por %p79, %p80
      %p83 = scmp.ne.s32.totalorder %s68, %s82
      %p84 = scmp.eq.s32.totalorder %s16, 0
      %p85 = por %p83, %p84
      %s87 = sadd.s32 %s86, 1
      %p90 = scmp.eq.s32.totalorder %s10, 1
      %p91 = scmp.ne.s32.totalorder %s86, %s88
      %p92 = scmp.eq.s32.totalorder %s10, 0
      %p93 = por %p91, %p92
      %p94 = scmp.ne.s32.totalorder %s86, %s88
      %p95 = scmp.eq.s32.totalorder %s15, 1
      %p96 = por %p94, %p95
      %p97 = scmp.ne.s32.totalorder %s88, %s89
      %p98 = scmp.eq.s32.totalorder %s15, 0
      %p99 = por %p97, %p98
      %p100 = scmp.ne.s32.totalorder %s88, %s89
      %p101 = scmp.eq.s32.totalorder %s16, 1
      %p102 = por %p100, %p101
      %p104 = scmp.ne.s32.totalorder %s89, %s103
      %p105 = scmp.eq.s32.totalorder %s16, 0
      %p106 = por %p104, %p105
      %s107 = ssub.s32 %s10, %s17
      %p108 = scmp.eq.s32.totalorder %s107, 0
      %s110 = sadd.s32 %s109, 1
      %s111 = scalar_select %p108, %s109, %s110
      %p114 = pneg %p108
      %p115 = scmp.eq.s32.totalorder %s10, 1
      %p116 = por %p114, %p115
      %p117 = scmp.ne.s32.totalorder %s109, %s112
      %p118 = scmp.eq.s32.totalorder %s10, 0
      %p119 = por %p117, %p118
      %p120 = scmp.ne.s32.totalorder %s109, %s112
      %p121 = scmp.eq.s32.totalorder %s15, 1
      %p122 = por %p120, %p121
      %p123 = scmp.ne.s32.totalorder %s112, %s113
      %p124 = scmp.eq.s32.totalorder %s15, 0
      %p125 = por %p123, %p124
      %p126 = scmp.ne.s32.totalorder %s112, %s113
      %p127 = scmp.eq.s32.totalorder %s16, 1
      %p128 = por %p126, %p127
      %p130 = scmp.ne.s32.totalorder %s113, %s129
      %p131 = scmp.eq.s32.totalorder %s16, 0
      %p132 = por %p130, %p131
      %p133 = scmp.le.s32.totalorder 1, %s10
      %p134 = scmp.lt.s32.totalorder %s10, 3
      %p135 = pnand %p133, %p134
      %p136 = pneg %p135
      // Predicated region
      $region9: #{clt_conv_forward.1} parent=5 // pred_check
        _
      $region10: #{clt_conv_forward.1} parent=5 // pred_check_branch
        %138 = sbr.rel (%p135) target = $region12
      $region11: #{clt_conv_forward.1} parent=5 // pred_region
        %s139 = ssub.s32 %s10, 1
        // Predicated region
        $region13: #{clt_conv_forward.1} parent=11 // pred_check
          %p140 = pneg %p57
        $region14: #{clt_conv_forward.1} parent=11 // pred_check_branch
          %142 = sbr.rel (%p140) target = $region16
        $region15: #{clt_conv_forward.1} parent=11 // pred_region
          _
        $region16: #{clt_conv_forward.1} parent=11 // pred_fallthru
          _
        // Predicated region
        $region17: #{clt_conv_forward.1} parent=11 // pred_check
          %p143 = pneg %p78
        $region18: #{clt_conv_forward.1} parent=11 // pred_check_branch
          %145 = sbr.rel (%p143) target = $region20
        $region19: #{clt_conv_forward.1} parent=11 // pred_region
          _
        $region20: #{clt_conv_forward.1} parent=11 // pred_fallthru
          _
        // Predicated region
        $region21: #{clt_conv_forward.1} parent=11 // pred_check
          %p146 = pneg %p99
        $region22: #{clt_conv_forward.1} parent=11 // pred_check_branch
          %148 = sbr.rel (%p146) target = $region24
        $region23: #{clt_conv_forward.1} parent=11 // pred_region
          _
        $region24: #{clt_conv_forward.1} parent=11 // pred_fallthru
          _
      $region12: #{clt_conv_forward.1} parent=5 // pred_fallthru
        _
      %p149 = scmp.lt.s32.totalorder %s10, 2
      // Predicated region
      $region25: #{clt_conv_forward.1} parent=5 // pred_check
        %p150 = pneg %p149
      $region26: #{clt_conv_forward.1} parent=5 // pred_check_branch
        %152 = sbr.rel (%p150) target = $region28
      $region27: #{clt_conv_forward.1} parent=5 // pred_region
        // Predicated region
        $region29: #{clt_conv_forward.1} parent=27 // pred_check
          %p153 = pneg %p30
        $region30: #{clt_conv_forward.1} parent=27 // pred_check_branch
          %155 = sbr.rel (%p153) target = $region32
        $region31: #{clt_conv_forward.1} parent=27 // pred_region
          %s156 = smul.u32 25, %s10
          %p157 = scmp.lt.s32.totalorder %s156, 49
          %s158 = scalar_select %p157, %s156, 49
          %s159 = smul.addr %s158, 2
          %s160 = smul.addr %s159, 4
          %s161 = scalar_lea.vmem %s0, %s160
          %s162 = smul.u32 25, %s10
        $region32: #{clt_conv_forward.1} parent=27 // pred_fallthru
          _
      $region28: #{clt_conv_forward.1} parent=5 // pred_fallthru
        _
      %p163 = scmp.le.s32.totalorder 1, %s10
      %p164 = scmp.lt.s32.totalorder %s10, 3
      %p165 = pnand %p163, %p164
      %p166 = pneg %p165
      // Predicated region
      $region33: #{clt_conv_forward.1} parent=5 // pred_check
        _
      $region34: #{clt_conv_forward.1} parent=5 // pred_check_branch
        %168 = sbr.rel (%p165) target = $region36
      $region35: #{clt_conv_forward.1} parent=5 // pred_region
        %s169 = ssub.s32 %s10, 1
        %s170 = smul.u32 25, %s15
        %p171 = scmp.lt.s32.totalorder %s170, 49
        %s172 = scalar_select %p171, %s170, 49
        %s173 = smul.addr %s172, 2
        %s174 = smul.addr %s173, 4
        %s175 = scalar_lea.vmem %s0, %s174
        %p176 = pneg %p36
        %p177 = pneg %p33
        %p178 = pneg %p57
        %p179 = pneg %p54
        %p180 = pneg %p78
        %p181 = pneg %p75
        %p182 = pneg %p99
        %p183 = pneg %p96
        %p184 = pneg %p125
        %p185 = pneg %p122
        %s186 = sand.u32 %s112, 1
        %s187 = sand.u32 %s112, 1
        %s188 = smul.addr %s187, 400
        %s189 = scalar_lea.vmem [#allocation2], %s188
        %s190 = smul.u32 25, %s15
        %p191 = scmp.lt.s32.totalorder %s190, 49
        %s192 = scalar_select %p191, %s190, 49
        %s193 = smul.addr %s192, 2
        %s194 = smul.addr %s193, 4
        %s195 = scalar_lea.vmem %s0, %s194
        %s196 = smul.u32 25, %s15
        %s197 = smul.u32 25, %s15
        %v198 = vld [vmem:[%s195] sm:$0xff]
        %v199 = vld [vmem:[%s195 + $0x8] sm:$0xff]
        %v200 = vld [vmem:[%s195 + $0x10] sm:$0xff]
        %v201 = vld [vmem:[%s195 + $0x18] sm:$0xff]
        %v202 = vld [vmem:[%s195 + $0x20] sm:$0xff]
        %v203 = vld [vmem:[%s195 + $0x28] sm:$0xff]
        %v204 = vld [vmem:[%s195 + $0x30] sm:$0xff]
        %v205 = vld [vmem:[%s195 + $0x38] sm:$0xff]
        %v206 = vld [vmem:[%s195 + $0x40] sm:$0xff]
        %v207 = vld [vmem:[%s195 + $0x48] sm:$0xff]
        %v208 = vld [vmem:[%s195 + $0x50] sm:$0xff]
        %v209 = vld [vmem:[%s195 + $0x58] sm:$0xff]
        %v210 = vld [vmem:[%s195 + $0x60] sm:$0xff]
        %v211 = vld [vmem:[%s195 + $0x68] sm:$0xff]
        %v212 = vld [vmem:[%s195 + $0x70] sm:$0xff]
        %v213 = vld [vmem:[%s195 + $0x78] sm:$0xff]
        %v214 = vld [vmem:[%s195 + $0x80] sm:$0xff]
        %v215 = vld [vmem:[%s195 + $0x88] sm:$0xff]
        %v216 = vld [vmem:[%s195 + $0x90] sm:$0xff]
        %v217 = vld [vmem:[%s195 + $0x98] sm:$0xff]
        %v218 = vld [vmem:[%s195 + $0xa0] sm:$0xff]
        %v219 = vld [vmem:[%s195 + $0xa8] sm:$0xff]
        %v220 = vld [vmem:[%s195 + $0xb0] sm:$0xff]
        %v221 = vld [vmem:[%s195 + $0xb8] sm:$0xff]
        %v222 = vld [vmem:[%s195 + $0xc0] sm:$0xff]
        %v223 = vld [vmem:[%s1] sm:$0xf]
        %v224 = vld [vmem:[%s1 + $0x4] sm:$0xf]
        %v225 = vld [vmem:[%s1 + $0x8] sm:$0xf]
        %v226 = vld [vmem:[%s1 + $0xc] sm:$0xf]
        %v227 = vld [vmem:[%s1 + $0x10] sm:$0xf]
        %v228 = vld [vmem:[%s1 + $0x14] sm:$0xf]
        %v229 = vld [vmem:[%s1 + $0x18] sm:$0xf]
        %v230 = vld [vmem:[%s1 + $0x1c] sm:$0xf]
        %v231 = vld [vmem:[%s1 + $0x20] sm:$0xf]
        %v232 = vld [vmem:[%s1 + $0x24] sm:$0xf]
        %v233 = vld [vmem:[%s1 + $0x28] sm:$0xf]
        %v234 = vld [vmem:[%s1 + $0x2c] sm:$0xf]
        %v235 = vld [vmem:[%s1 + $0x30] sm:$0xf]
        %v236 = vld [vmem:[%s1 + $0x34] sm:$0xf]
        %v237 = vld [vmem:[%s1 + $0x38] sm:$0xf]
        %v238 = vld [vmem:[%s1 + $0x3c] sm:$0xf]
        %v239 = vld [vmem:[%s1 + $0x40] sm:$0xf]
        %v240 = vld [vmem:[%s1 + $0x44] sm:$0xf]
        %v241 = vld [vmem:[%s1 + $0x48] sm:$0xf]
        %v242 = vld [vmem:[%s1 + $0x4c] sm:$0xf]
        %v243 = vld [vmem:[%s1 + $0x50] sm:$0xf]
        %v244 = vld [vmem:[%s1 + $0x54] sm:$0xf]
        %v245 = vld [vmem:[%s1 + $0x58] sm:$0xf]
        %v246 = vld [vmem:[%s1 + $0x5c] sm:$0xf]
        %v247 = vld [vmem:[%s1 + $0x60] sm:$0xf]
        %v248 = vld [vmem:[%s1 + $0x64] sm:$0xf]
        %v249 = vld [vmem:[%s1 + $0x68] sm:$0xf]
        %v250 = vld [vmem:[%s1 + $0x6c] sm:$0xf]
        %v251 = vld [vmem:[%s1 + $0x70] sm:$0xf]
        %v252 = vld [vmem:[%s1 + $0x74] sm:$0xf]
        %v253 = vld [vmem:[%s1 + $0x78] sm:$0xf]
        %v254 = vld [vmem:[%s1 + $0x7c] sm:$0xf]
        %v255 = vld [vmem:[%s3] sm:$0x1]
        %v257 = vperm.slane %v255, 0
        %v284 = vunpack.c.l.b16 %v198
        %v285 = vunpack.c.h.b16 %v198
        %v286 = vunpack.c.l.b16 %v199
        %v287 = vunpack.c.h.b16 %v199
        %v288 = vunpack.c.l.b16 %v200
        %v289 = vunpack.c.h.b16 %v200
        %v290 = vunpack.c.l.b16 %v201
        %v291 = vunpack.c.h.b16 %v201
        %v292 = vunpack.c.l.b16 %v202
        %v293 = vunpack.c.h.b16 %v202
        %v294 = vunpack.c.l.b16 %v203
        %v295 = vunpack.c.h.b16 %v203
        %v296 = vunpack.c.l.b16 %v204
        %v297 = vunpack.c.h.b16 %v204
        %v298 = vunpack.c.l.b16 %v205
        %v299 = vunpack.c.h.b16 %v205
        %v300 = vunpack.c.l.b16 %v206
        %v301 = vunpack.c.h.b16 %v206
        %v302 = vunpack.c.l.b16 %v207
        %v303 = vunpack.c.h.b16 %v207
        %v304 = vunpack.c.l.b16 %v208
        %v305 = vunpack.c.h.b16 %v208
        %v306 = vunpack.c.l.b16 %v209
        %v307 = vunpack.c.h.b16 %v209
        %v308 = vunpack.c.l.b16 %v210
        %v309 = vunpack.c.h.b16 %v210
        %v310 = vunpack.c.l.b16 %v211
        %v311 = vunpack.c.h.b16 %v211
        %v312 = vunpack.c.l.b16 %v212
        %v313 = vunpack.c.h.b16 %v212
        %v314 = vunpack.c.l.b16 %v213
        %v315 = vunpack.c.h.b16 %v213
        %v316 = vunpack.c.l.b16 %v214
        %v317 = vunpack.c.h.b16 %v214
        %v318 = vunpack.c.l.b16 %v215
        %v319 = vunpack.c.h.b16 %v215
        %v320 = vunpack.c.l.b16 %v216
        %v321 = vunpack.c.h.b16 %v216
        %v322 = vunpack.c.l.b16 %v217
        %v323 = vunpack.c.h.b16 %v217
        %v324 = vunpack.c.l.b16 %v218
        %v325 = vunpack.c.h.b16 %v218
        %v326 = vunpack.c.l.b16 %v219
        %v327 = vunpack.c.h.b16 %v219
        %v328 = vunpack.c.l.b16 %v220
        %v329 = vunpack.c.h.b16 %v220
        %v330 = vunpack.c.l.b16 %v221
        %v331 = vunpack.c.h.b16 %v221
        %v332 = vunpack.c.l.b16 %v222
        %v333 = vunpack.c.h.b16 %v222
        %v334 = vpack.c.b16 %v286, %v284
        %v335 = vpack.c.b16 %v287, %v285
        %v336 = vpack.c.b16 %v290, %v288
        %v337 = vpack.c.b16 %v291, %v289
        %v338 = vpack.c.b16 %v294, %v292
        %v339 = vpack.c.b16 %v295, %v293
        %v340 = vpack.c.b16 %v298, %v296
        %v341 = vpack.c.b16 %v299, %v297
        %v342 = vpack.c.b16 %v302, %v300
        %v343 = vpack.c.b16 %v303, %v301
        %v344 = vpack.c.b16 %v306, %v304
        %v345 = vpack.c.b16 %v307, %v305
        %v346 = vpack.c.b16 %v310, %v308
        %v347 = vpack.c.b16 %v311, %v309
        %v348 = vpack.c.b16 %v314, %v312
        %v349 = vpack.c.b16 %v315, %v313
        %v350 = vpack.c.b16 %v318, %v316
        %v351 = vpack.c.b16 %v319, %v317
        %v352 = vpack.c.b16 %v322, %v320
        %v353 = vpack.c.b16 %v323, %v321
        %v354 = vpack.c.b16 %v326, %v324
        %v355 = vpack.c.b16 %v327, %v325
        %v356 = vpack.c.b16 %v330, %v328
        %v357 = vpack.c.b16 %v331, %v329
        %v358 = vpack.c.b16 %v332, %v332
        %v359 = vpack.c.b16 %v333, %v333
        %v418 = vunpack.c.l.b16 %v223
        %v419 = vunpack.c.l.b16 %v224
        %v420 = vunpack.c.l.b16 %v225
        %v421 = vunpack.c.l.b16 %v226
        %v422 = vunpack.c.l.b16 %v227
        %v423 = vunpack.c.l.b16 %v228
        %v424 = vunpack.c.l.b16 %v229
        %v425 = vunpack.c.l.b16 %v230
        %v426 = vunpack.c.l.b16 %v231
        %v427 = vunpack.c.l.b16 %v232
        %v428 = vunpack.c.l.b16 %v233
        %v429 = vunpack.c.l.b16 %v234
        %v430 = vunpack.c.l.b16 %v235
        %v431 = vunpack.c.l.b16 %v236
        %v432 = vunpack.c.l.b16 %v237
        %v433 = vunpack.c.l.b16 %v238
        %v434 = vunpack.c.l.b16 %v239
        %v435 = vunpack.c.l.b16 %v240
        %v436 = vunpack.c.l.b16 %v241
        %v437 = vunpack.c.l.b16 %v242
        %v438 = vunpack.c.l.b16 %v243
        %v439 = vunpack.c.l.b16 %v244
        %v440 = vunpack.c.l.b16 %v245
        %v441 = vunpack.c.l.b16 %v246
        %v442 = vunpack.c.l.b16 %v247
        %v443 = vunpack.c.l.b16 %v248
        %v444 = vunpack.c.l.b16 %v249
        %v445 = vunpack.c.l.b16 %v250
        %v446 = vunpack.c.l.b16 %v251
        %v447 = vunpack.c.l.b16 %v252
        %v448 = vunpack.c.l.b16 %v253
        %v449 = vunpack.c.l.b16 %v254
        %v450 = vpack.c.b16 %v419, %v418
        %v451 = vpack.c.b16 %v421, %v420
        %v452 = vpack.c.b16 %v423, %v422
        %v453 = vpack.c.b16 %v425, %v424
        %v454 = vpack.c.b16 %v427, %v426
        %v455 = vpack.c.b16 %v429, %v428
        %v456 = vpack.c.b16 %v431, %v430
        %v457 = vpack.c.b16 %v433, %v432
        %v458 = vpack.c.b16 %v435, %v434
        %v459 = vpack.c.b16 %v437, %v436
        %v460 = vpack.c.b16 %v439, %v438
        %v461 = vpack.c.b16 %v441, %v440
        %v462 = vpack.c.b16 %v443, %v442
        %v463 = vpack.c.b16 %v445, %v444
        %v464 = vpack.c.b16 %v447, %v446
        %v465 = vpack.c.b16 %v449, %v448
        %482 = vmatpush.bf16.msra.mxu0 %v457
        %483 = vmatpush.bf16.msra.mxu0 %v456
        %484 = vmatpush.bf16.msra.mxu0 %v455
        %485 = vmatpush.bf16.msra.mxu0 %v454
        %486 = vmatpush.bf16.msra.mxu0 %v453
        %487 = vmatpush.bf16.msra.mxu0 %v452
        %488 = vmatpush.bf16.msra.mxu0 %v451
        %489 = vmatpush.bf16.msra.mxu0 %v450
        %490 = vmatmul.bf16.gmra.mxu0 %v334
        %v491 = vpop.f32.mrf.mxu0
        %v492 = vadd.f32 %v257, %v491
        %v493 = vpop.f32.mrf.mxu0
        %v494 = vadd.f32 %v257, %v493
        %495 = vmatmul.bf16.gmra.mxu0 %v336
        %v496 = vpop.f32.mrf.mxu0
        %v497 = vadd.f32 %v257, %v496
        %v498 = vpop.f32.mrf.mxu0
        %v499 = vadd.f32 %v257, %v498
        %500 = vmatmul.bf16.gmra.mxu0 %v338
        %v501 = vpop.f32.mrf.mxu0
        %v502 = vadd.f32 %v257, %v501
        %v503 = vpop.f32.mrf.mxu0
        %v504 = vadd.f32 %v257, %v503
        %505 = vmatmul.bf16.gmra.mxu0 %v340
        %v506 = vpop.f32.mrf.mxu0
        %v507 = vadd.f32 %v257, %v506
        %v508 = vpop.f32.mrf.mxu0
        %v509 = vadd.f32 %v257, %v508
        %510 = vmatmul.bf16.gmra.mxu0 %v342
        %v511 = vpop.f32.mrf.mxu0
        %v512 = vadd.f32 %v257, %v511
        %v513 = vpop.f32.mrf.mxu0
        %v514 = vadd.f32 %v257, %v513
        %515 = vmatmul.bf16.gmra.mxu0 %v344
        %v516 = vpop.f32.mrf.mxu0
        %v517 = vadd.f32 %v257, %v516
        %v518 = vpop.f32.mrf.mxu0
        %v519 = vadd.f32 %v257, %v518
        %520 = vmatmul.bf16.gmra.mxu0 %v346
        %v521 = vpop.f32.mrf.mxu0
        %v522 = vadd.f32 %v257, %v521
        %v523 = vpop.f32.mrf.mxu0
        %v524 = vadd.f32 %v257, %v523
        %525 = vmatmul.bf16.gmra.mxu0 %v348
        %v526 = vpop.f32.mrf.mxu0
        %v527 = vadd.f32 %v257, %v526
        %v528 = vpop.f32.mrf.mxu0
        %v529 = vadd.f32 %v257, %v528
        %530 = vmatmul.bf16.gmra.mxu0 %v350
        %v531 = vpop.f32.mrf.mxu0
        %v532 = vadd.f32 %v257, %v531
        %v533 = vpop.f32.mrf.mxu0
        %v534 = vadd.f32 %v257, %v533
        %535 = vmatmul.bf16.gmra.mxu0 %v352
        %v536 = vpop.f32.mrf.mxu0
        %v537 = vadd.f32 %v257, %v536
        %v538 = vpop.f32.mrf.mxu0
        %v539 = vadd.f32 %v257, %v538
        %540 = vmatmul.bf16.gmra.mxu0 %v354
        %v541 = vpop.f32.mrf.mxu0
        %v542 = vadd.f32 %v257, %v541
        %v543 = vpop.f32.mrf.mxu0
        %v544 = vadd.f32 %v257, %v543
        %545 = vmatmul.bf16.gmra.mxu0 %v356
        %v546 = vpop.f32.mrf.mxu0
        %v547 = vadd.f32 %v257, %v546
        %v548 = vpop.f32.mrf.mxu0
        %v549 = vadd.f32 %v257, %v548
        %550 = vmatmul.bf16.gmra.mxu0 %v358
        %v551 = vpop.f32.mrf.mxu0
        %v552 = vadd.f32 %v257, %v551
        %v553 = vpop.f32.mrf.mxu0
        %554 = vdwg.mxu0
        %555 = vmatpush.bf16.msra.mxu0 %v465
        %556 = vmatpush.bf16.msra.mxu0 %v464
        %557 = vmatpush.bf16.msra.mxu0 %v463
        %558 = vmatpush.bf16.msra.mxu0 %v462
        %559 = vmatpush.bf16.msra.mxu0 %v461
        %560 = vmatpush.bf16.msra.mxu0 %v460
        %561 = vmatpush.bf16.msra.mxu0 %v459
        %562 = vmatpush.bf16.msra.mxu0 %v458
        %563 = vmatmul.bf16.gmra.mxu0 %v335
        %v564 = vpop.f32.mrf.mxu0
        %v565 = vadd.f32 %v492, %v564
        %v566 = vpop.f32.mrf.mxu0
        %v567 = vadd.f32 %v494, %v566
        %568 = vmatmul.bf16.gmra.mxu0 %v337
        %v569 = vpop.f32.mrf.mxu0
        %v570 = vadd.f32 %v497, %v569
        %v571 = vpop.f32.mrf.mxu0
        %v572 = vadd.f32 %v499, %v571
        %573 = vmatmul.bf16.gmra.mxu0 %v339
        %v574 = vpop.f32.mrf.mxu0
        %v575 = vadd.f32 %v502, %v574
        %v576 = vpop.f32.mrf.mxu0
        %v577 = vadd.f32 %v504, %v576
        %578 = vmatmul.bf16.gmra.mxu0 %v341
        %v579 = vpop.f32.mrf.mxu0
        %v580 = vadd.f32 %v507, %v579
        %v581 = vpop.f32.mrf.mxu0
        %v582 = vadd.f32 %v509, %v581
        %583 = vmatmul.bf16.gmra.mxu0 %v343
        %v584 = vpop.f32.mrf.mxu0
        %v585 = vadd.f32 %v512, %v584
        %v586 = vpop.f32.mrf.mxu0
        %v587 = vadd.f32 %v514, %v586
        %588 = vmatmul.bf16.gmra.mxu0 %v345
        %v589 = vpop.f32.mrf.mxu0
        %v590 = vadd.f32 %v517, %v589
        %v591 = vpop.f32.mrf.mxu0
        %v592 = vadd.f32 %v519, %v591
        %593 = vmatmul.bf16.gmra.mxu0 %v347
        %v594 = vpop.f32.mrf.mxu0
        %v595 = vadd.f32 %v522, %v594
        %v596 = vpop.f32.mrf.mxu0
        %v597 = vadd.f32 %v524, %v596
        %598 = vmatmul.bf16.gmra.mxu0 %v349
        %v599 = vpop.f32.mrf.mxu0
        %v600 = vadd.f32 %v527, %v599
        %v601 = vpop.f32.mrf.mxu0
        %v602 = vadd.f32 %v529, %v601
        %603 = vmatmul.bf16.gmra.mxu0 %v351
        %v604 = vpop.f32.mrf.mxu0
        %v605 = vadd.f32 %v532, %v604
        %v606 = vpop.f32.mrf.mxu0
        %v607 = vadd.f32 %v534, %v606
        %608 = vmatmul.bf16.gmra.mxu0 %v353
        %v609 = vpop.f32.mrf.mxu0
        %v610 = vadd.f32 %v537, %v609
        %v611 = vpop.f32.mrf.mxu0
        %v612 = vadd.f32 %v539, %v611
        %613 = vmatmul.bf16.gmra.mxu0 %v355
        %v614 = vpop.f32.mrf.mxu0
        %v615 = vadd.f32 %v542, %v614
        %v616 = vpop.f32.mrf.mxu0
        %v617 = vadd.f32 %v544, %v616
        %618 = vmatmul.bf16.gmra.mxu0 %v357
        %v619 = vpop.f32.mrf.mxu0
        %v620 = vadd.f32 %v547, %v619
        %v621 = vpop.f32.mrf.mxu0
        %v622 = vadd.f32 %v549, %v621
        %623 = vmatmul.bf16.gmra.mxu0 %v359
        %v624 = vpop.f32.mrf.mxu0
        %v625 = vadd.f32 %v552, %v624
        %v626 = vpop.f32.mrf.mxu0
        %627 = vdwg.mxu0
        %v628 = vunpack.c.l.bf16 %v198
        %v629 = vunpack.c.h.bf16 %v198
        %v630 = vunpack.c.l.bf16 %v199
        %v631 = vunpack.c.h.bf16 %v199
        %v632 = vunpack.c.l.bf16 %v200
        %v633 = vunpack.c.h.bf16 %v200
        %v634 = vunpack.c.l.bf16 %v201
        %v635 = vunpack.c.h.bf16 %v201
        %v636 = vunpack.c.l.bf16 %v202
        %v637 = vunpack.c.h.bf16 %v202
        %v638 = vunpack.c.l.bf16 %v203
        %v639 = vunpack.c.h.bf16 %v203
        %v640 = vunpack.c.l.bf16 %v204
        %v641 = vunpack.c.h.bf16 %v204
        %v642 = vunpack.c.l.bf16 %v205
        %v643 = vunpack.c.h.bf16 %v205
        %v644 = vunpack.c.l.bf16 %v206
        %v645 = vunpack.c.h.bf16 %v206
        %v646 = vunpack.c.l.bf16 %v207
        %v647 = vunpack.c.h.bf16 %v207
        %v648 = vunpack.c.l.bf16 %v208
        %v649 = vunpack.c.h.bf16 %v208
        %v650 = vunpack.c.l.bf16 %v209
        %v651 = vunpack.c.h.bf16 %v209
        %v652 = vunpack.c.l.bf16 %v210
        %v653 = vunpack.c.h.bf16 %v210
        %v654 = vunpack.c.l.bf16 %v211
        %v655 = vunpack.c.h.bf16 %v211
        %v656 = vunpack.c.l.bf16 %v212
        %v657 = vunpack.c.h.bf16 %v212
        %v658 = vunpack.c.l.bf16 %v213
        %v659 = vunpack.c.h.bf16 %v213
        %v660 = vunpack.c.l.bf16 %v214
        %v661 = vunpack.c.h.bf16 %v214
        %v662 = vunpack.c.l.bf16 %v215
        %v663 = vunpack.c.h.bf16 %v215
        %v664 = vunpack.c.l.bf16 %v216
        %v665 = vunpack.c.h.bf16 %v216
        %v666 = vunpack.c.l.bf16 %v217
        %v667 = vunpack.c.h.bf16 %v217
        %v668 = vunpack.c.l.bf16 %v218
        %v669 = vunpack.c.h.bf16 %v218
        %v670 = vunpack.c.l.bf16 %v219
        %v671 = vunpack.c.h.bf16 %v219
        %v672 = vunpack.c.l.bf16 %v220
        %v673 = vunpack.c.h.bf16 %v220
        %v674 = vunpack.c.l.bf16 %v221
        %v675 = vunpack.c.h.bf16 %v221
        %v676 = vunpack.c.l.bf16 %v222
        %v677 = vunpack.c.h.bf16 %v222
        %v678 = vmul.f32 %v628, %v628
        %v679 = vmul.f32 %v629, %v629
        %v680 = vmul.f32 %v630, %v630
        %v681 = vmul.f32 %v631, %v631
        %v682 = vmul.f32 %v632, %v632
        %v683 = vmul.f32 %v633, %v633
        %v684 = vmul.f32 %v634, %v634
        %v685 = vmul.f32 %v635, %v635
        %v686 = vmul.f32 %v636, %v636
        %v687 = vmul.f32 %v637, %v637
        %v688 = vmul.f32 %v638, %v638
        %v689 = vmul.f32 %v639, %v639
        %v690 = vmul.f32 %v640, %v640
        %v691 = vmul.f32 %v641, %v641
        %v692 = vmul.f32 %v642, %v642
        %v693 = vmul.f32 %v643, %v643
        %v694 = vmul.f32 %v644, %v644
        %v695 = vmul.f32 %v645, %v645
        %v696 = vmul.f32 %v646, %v646
        %v697 = vmul.f32 %v647, %v647
        %v698 = vmul.f32 %v648, %v648
        %v699 = vmul.f32 %v649, %v649
        %v700 = vmul.f32 %v650, %v650
        %v701 = vmul.f32 %v651, %v651
        %v702 = vmul.f32 %v652, %v652
        %v703 = vmul.f32 %v653, %v653
        %v704 = vmul.f32 %v654, %v654
        %v705 = vmul.f32 %v655, %v655
        %v706 = vmul.f32 %v656, %v656
        %v707 = vmul.f32 %v657, %v657
        %v708 = vmul.f32 %v658, %v658
        %v709 = vmul.f32 %v659, %v659
        %v710 = vmul.f32 %v660, %v660
        %v711 = vmul.f32 %v661, %v661
        %v712 = vmul.f32 %v662, %v662
        %v713 = vmul.f32 %v663, %v663
        %v714 = vmul.f32 %v664, %v664
        %v715 = vmul.f32 %v665, %v665
        %v716 = vmul.f32 %v666, %v666
        %v717 = vmul.f32 %v667, %v667
        %v718 = vmul.f32 %v668, %v668
        %v719 = vmul.f32 %v669, %v669
        %v720 = vmul.f32 %v670, %v670
        %v721 = vmul.f32 %v671, %v671
        %v722 = vmul.f32 %v672, %v672
        %v723 = vmul.f32 %v673, %v673
        %v724 = vmul.f32 %v674, %v674
        %v725 = vmul.f32 %v675, %v675
        %v726 = vmul.f32 %v676, %v676
        %v727 = vmul.f32 %v677, %v677
        %v728 = vpack.c.bf16 %v680, %v678
        %v729 = vpack.c.bf16 %v681, %v679
        %v730 = vpack.c.bf16 %v684, %v682
        %v731 = vpack.c.bf16 %v685, %v683
        %v732 = vpack.c.bf16 %v688, %v686
        %v733 = vpack.c.bf16 %v689, %v687
        %v734 = vpack.c.bf16 %v692, %v690
        %v735 = vpack.c.bf16 %v693, %v691
        %v736 = vpack.c.bf16 %v696, %v694
        %v737 = vpack.c.bf16 %v697, %v695
        %v738 = vpack.c.bf16 %v700, %v698
        %v739 = vpack.c.bf16 %v701, %v699
        %v740 = vpack.c.bf16 %v704, %v702
        %v741 = vpack.c.bf16 %v705, %v703
        %v742 = vpack.c.bf16 %v708, %v706
        %v743 = vpack.c.bf16 %v709, %v707
        %v744 = vpack.c.bf16 %v712, %v710
        %v745 = vpack.c.bf16 %v713, %v711
        %v746 = vpack.c.bf16 %v716, %v714
        %v747 = vpack.c.bf16 %v717, %v715
        %v748 = vpack.c.bf16 %v720, %v718
        %v749 = vpack.c.bf16 %v721, %v719
        %v750 = vpack.c.bf16 %v724, %v722
        %v751 = vpack.c.bf16 %v725, %v723
        %v752 = vpack.c.bf16 %v726, %v726
        %v753 = vpack.c.bf16 %v727, %v727
        %v754 = vld [vmem:[%s2] sm:$0xf]
        %v755 = vld [vmem:[%s2 + $0x4] sm:$0xf]
        %v756 = vld [vmem:[%s2 + $0x8] sm:$0xf]
        %v757 = vld [vmem:[%s2 + $0xc] sm:$0xf]
        %v758 = vld [vmem:[%s2 + $0x10] sm:$0xf]
        %v759 = vld [vmem:[%s2 + $0x14] sm:$0xf]
        %v760 = vld [vmem:[%s2 + $0x18] sm:$0xf]
        %v761 = vld [vmem:[%s2 + $0x1c] sm:$0xf]
        %v762 = vld [vmem:[%s2 + $0x20] sm:$0xf]
        %v763 = vld [vmem:[%s2 + $0x24] sm:$0xf]
        %v764 = vld [vmem:[%s2 + $0x28] sm:$0xf]
        %v765 = vld [vmem:[%s2 + $0x2c] sm:$0xf]
        %v766 = vld [vmem:[%s2 + $0x30] sm:$0xf]
        %v767 = vld [vmem:[%s2 + $0x34] sm:$0xf]
        %v768 = vld [vmem:[%s2 + $0x38] sm:$0xf]
        %v769 = vld [vmem:[%s2 + $0x3c] sm:$0xf]
        %v770 = vld [vmem:[%s2 + $0x40] sm:$0xf]
        %v771 = vld [vmem:[%s2 + $0x44] sm:$0xf]
        %v772 = vld [vmem:[%s2 + $0x48] sm:$0xf]
        %v773 = vld [vmem:[%s2 + $0x4c] sm:$0xf]
        %v774 = vld [vmem:[%s2 + $0x50] sm:$0xf]
        %v775 = vld [vmem:[%s2 + $0x54] sm:$0xf]
        %v776 = vld [vmem:[%s2 + $0x58] sm:$0xf]
        %v777 = vld [vmem:[%s2 + $0x5c] sm:$0xf]
        %v778 = vld [vmem:[%s2 + $0x60] sm:$0xf]
        %v779 = vld [vmem:[%s2 + $0x64] sm:$0xf]
        %v780 = vld [vmem:[%s2 + $0x68] sm:$0xf]
        %v781 = vld [vmem:[%s2 + $0x6c] sm:$0xf]
        %v782 = vld [vmem:[%s2 + $0x70] sm:$0xf]
        %v783 = vld [vmem:[%s2 + $0x74] sm:$0xf]
        %v784 = vld [vmem:[%s2 + $0x78] sm:$0xf]
        %v785 = vld [vmem:[%s2 + $0x7c] sm:$0xf]
        %v818 = vunpack.c.l.b16 %v754
        %v819 = vunpack.c.l.b16 %v755
        %v820 = vunpack.c.l.b16 %v756
        %v821 = vunpack.c.l.b16 %v757
        %v822 = vunpack.c.l.b16 %v758
        %v823 = vunpack.c.l.b16 %v759
        %v824 = vunpack.c.l.b16 %v760
        %v825 = vunpack.c.l.b16 %v761
        %v826 = vunpack.c.l.b16 %v762
        %v827 = vunpack.c.l.b16 %v763
        %v828 = vunpack.c.l.b16 %v764
        %v829 = vunpack.c.l.b16 %v765
        %v830 = vunpack.c.l.b16 %v766
        %v831 = vunpack.c.l.b16 %v767
        %v832 = vunpack.c.l.b16 %v768
        %v833 = vunpack.c.l.b16 %v769
        %v834 = vunpack.c.l.b16 %v770
        %v835 = vunpack.c.l.b16 %v771
        %v836 = vunpack.c.l.b16 %v772
        %v837 = vunpack.c.l.b16 %v773
        %v838 = vunpack.c.l.b16 %v774
        %v839 = vunpack.c.l.b16 %v775
        %v840 = vunpack.c.l.b16 %v776
        %v841 = vunpack.c.l.b16 %v777
        %v842 = vunpack.c.l.b16 %v778
        %v843 = vunpack.c.l.b16 %v779
        %v844 = vunpack.c.l.b16 %v780
        %v845 = vunpack.c.l.b16 %v781
        %v846 = vunpack.c.l.b16 %v782
        %v847 = vunpack.c.l.b16 %v783
        %v848 = vunpack.c.l.b16 %v784
        %v849 = vunpack.c.l.b16 %v785
        %v850 = vpack.c.b16 %v819, %v818
        %v851 = vpack.c.b16 %v821, %v820
        %v852 = vpack.c.b16 %v823, %v822
        %v853 = vpack.c.b16 %v825, %v824
        %v854 = vpack.c.b16 %v827, %v826
        %v855 = vpack.c.b16 %v829, %v828
        %v856 = vpack.c.b16 %v831, %v830
        %v857 = vpack.c.b16 %v833, %v832
        %v858 = vpack.c.b16 %v835, %v834
        %v859 = vpack.c.b16 %v837, %v836
        %v860 = vpack.c.b16 %v839, %v838
        %v861 = vpack.c.b16 %v841, %v840
        %v862 = vpack.c.b16 %v843, %v842
        %v863 = vpack.c.b16 %v845, %v844
        %v864 = vpack.c.b16 %v847, %v846
        %v865 = vpack.c.b16 %v849, %v848
        %882 = vmatpush.bf16.msra.mxu0 %v857
        %883 = vmatpush.bf16.msra.mxu0 %v856
        %884 = vmatpush.bf16.msra.mxu0 %v855
        %885 = vmatpush.bf16.msra.mxu0 %v854
        %886 = vmatpush.bf16.msra.mxu0 %v853
        %887 = vmatpush.bf16.msra.mxu0 %v852
        %888 = vmatpush.bf16.msra.mxu0 %v851
        %889 = vmatpush.bf16.msra.mxu0 %v850
        %890 = vmatmul.bf16.gmra.mxu0 %v728
        %v891 = vpop.f32.mrf.mxu0
        %v892 = vadd.f32 1e-08, %v891
        %v893 = vpop.f32.mrf.mxu0
        %v894 = vadd.f32 1e-08, %v893
        %895 = vmatmul.bf16.gmra.mxu0 %v730
        %v896 = vpop.f32.mrf.mxu0
        %v897 = vadd.f32 1e-08, %v896
        %v898 = vpop.f32.mrf.mxu0
        %v899 = vadd.f32 1e-08, %v898
        %900 = vmatmul.bf16.gmra.mxu0 %v732
        %v901 = vpop.f32.mrf.mxu0
        %v902 = vadd.f32 1e-08, %v901
        %v903 = vpop.f32.mrf.mxu0
        %v904 = vadd.f32 1e-08, %v903
        %905 = vmatmul.bf16.gmra.mxu0 %v734
        %v906 = vpop.f32.mrf.mxu0
        %v907 = vadd.f32 1e-08, %v906
        %v908 = vpop.f32.mrf.mxu0
        %v909 = vadd.f32 1e-08, %v908
        %910 = vmatmul.bf16.gmra.mxu0 %v736
        %v911 = vpop.f32.mrf.mxu0
        %v912 = vadd.f32 1e-08, %v911
        %v913 = vpop.f32.mrf.mxu0
        %v914 = vadd.f32 1e-08, %v913
        %915 = vmatmul.bf16.gmra.mxu0 %v738
        %v916 = vpop.f32.mrf.mxu0
        %v917 = vadd.f32 1e-08, %v916
        %v918 = vpop.f32.mrf.mxu0
        %v919 = vadd.f32 1e-08, %v918
        %920 = vmatmul.bf16.gmra.mxu0 %v740
        %v921 = vpop.f32.mrf.mxu0
        %v922 = vadd.f32 1e-08, %v921
        %v923 = vpop.f32.mrf.mxu0
        %v924 = vadd.f32 1e-08, %v923
        %925 = vmatmul.bf16.gmra.mxu0 %v742
        %v926 = vpop.f32.mrf.mxu0
        %v927 = vadd.f32 1e-08, %v926
        %v928 = vpop.f32.mrf.mxu0
        %v929 = vadd.f32 1e-08, %v928
        %930 = vmatmul.bf16.gmra.mxu0 %v744
        %v931 = vpop.f32.mrf.mxu0
        %v932 = vadd.f32 1e-08, %v931
        %v933 = vpop.f32.mrf.mxu0
        %v934 = vadd.f32 1e-08, %v933
        %935 = vmatmul.bf16.gmra.mxu0 %v746
        %v936 = vpop.f32.mrf.mxu0
        %v937 = vadd.f32 1e-08, %v936
        %v938 = vpop.f32.mrf.mxu0
        %v939 = vadd.f32 1e-08, %v938
        %940 = vmatmul.bf16.gmra.mxu0 %v748
        %v941 = vpop.f32.mrf.mxu0
        %v942 = vadd.f32 1e-08, %v941
        %v943 = vpop.f32.mrf.mxu0
        %v944 = vadd.f32 1e-08, %v943
        %945 = vmatmul.bf16.gmra.mxu0 %v750
        %v946 = vpop.f32.mrf.mxu0
        %v947 = vadd.f32 1e-08, %v946
        %v948 = vpop.f32.mrf.mxu0
        %v949 = vadd.f32 1e-08, %v948
        %950 = vmatmul.bf16.gmra.mxu0 %v752
        %v951 = vpop.f32.mrf.mxu0
        %v952 = vadd.f32 1e-08, %v951
        %v953 = vpop.f32.mrf.mxu0
        %954 = vdwg.mxu0
        %955 = vmatpush.bf16.msra.mxu0 %v865
        %956 = vmatpush.bf16.msra.mxu0 %v864
        %957 = vmatpush.bf16.msra.mxu0 %v863
        %958 = vmatpush.bf16.msra.mxu0 %v862
        %959 = vmatpush.bf16.msra.mxu0 %v861
        %960 = vmatpush.bf16.msra.mxu0 %v860
        %961 = vmatpush.bf16.msra.mxu0 %v859
        %962 = vmatpush.bf16.msra.mxu0 %v858
        %963 = vmatmul.bf16.gmra.mxu0 %v729
        %v964 = vpop.f32.mrf.mxu0
        %v965 = vadd.f32 %v892, %v964
        %v966 = vpop.f32.mrf.mxu0
        %v967 = vadd.f32 %v894, %v966
        %968 = vmatmul.bf16.gmra.mxu0 %v731
        %v969 = vpop.f32.mrf.mxu0
        %v970 = vadd.f32 %v897, %v969
        %v971 = vpop.f32.mrf.mxu0
        %v972 = vadd.f32 %v899, %v971
        %973 = vmatmul.bf16.gmra.mxu0 %v733
        %v974 = vpop.f32.mrf.mxu0
        %v975 = vadd.f32 %v902, %v974
        %v976 = vpop.f32.mrf.mxu0
        %v977 = vadd.f32 %v904, %v976
        %978 = vmatmul.bf16.gmra.mxu0 %v735
        %v979 = vpop.f32.mrf.mxu0
        %v980 = vadd.f32 %v907, %v979
        %v981 = vpop.f32.mrf.mxu0
        %v982 = vadd.f32 %v909, %v981
        %983 = vmatmul.bf16.gmra.mxu0 %v737
        %v984 = vpop.f32.mrf.mxu0
        %v985 = vadd.f32 %v912, %v984
        %v986 = vpop.f32.mrf.mxu0
        %v987 = vadd.f32 %v914, %v986
        %988 = vmatmul.bf16.gmra.mxu0 %v739
        %v989 = vpop.f32.mrf.mxu0
        %v990 = vadd.f32 %v917, %v989
        %v991 = vpop.f32.mrf.mxu0
        %v992 = vadd.f32 %v919, %v991
        %993 = vmatmul.bf16.gmra.mxu0 %v741
        %v994 = vpop.f32.mrf.mxu0
        %v995 = vadd.f32 %v922, %v994
        %v996 = vpop.f32.mrf.mxu0
        %v997 = vadd.f32 %v924, %v996
        %998 = vmatmul.bf16.gmra.mxu0 %v743
        %v999 = vpop.f32.mrf.mxu0
        %v1000 = vadd.f32 %v927, %v999
        %v1001 = vpop.f32.mrf.mxu0
        %v1002 = vadd.f32 %v929, %v1001
        %1003 = vmatmul.bf16.gmra.mxu0 %v745
        %v1004 = vpop.f32.mrf.mxu0
        %v1005 = vadd.f32 %v932, %v1004
        %v1006 = vpop.f32.mrf.mxu0
        %v1007 = vadd.f32 %v934, %v1006
        %1008 = vmatmul.bf16.gmra.mxu0 %v747
        %v1009 = vpop.f32.mrf.mxu0
        %v1010 = vadd.f32 %v937, %v1009
        %v1011 = vpop.f32.mrf.mxu0
        %v1012 = vadd.f32 %v939, %v1011
        %1013 = vmatmul.bf16.gmra.mxu0 %v749
        %v1014 = vpop.f32.mrf.mxu0
        %v1015 = vadd.f32 %v942, %v1014
        %v1016 = vpop.f32.mrf.mxu0
        %v1017 = vadd.f32 %v944, %v1016
        %1018 = vmatmul.bf16.gmra.mxu0 %v751
        %v1019 = vpop.f32.mrf.mxu0
        %v1020 = vadd.f32 %v947, %v1019
        %v1021 = vpop.f32.mrf.mxu0
        %v1022 = vadd.f32 %v949, %v1021
        %1023 = vmatmul.bf16.gmra.mxu0 %v753
        %v1024 = vpop.f32.mrf.mxu0
        %v1025 = vadd.f32 %v952, %v1024
        %v1026 = vpop.f32.mrf.mxu0
        %1027 = vdwg.mxu0
        %v1028 = vrsqrt.pop %v965
        %v1029 = vmul.f32 %v1028, %v965
        %v1030 = vmul.f32 %v1029, %v1028
        %v1031 = vmul.f32 0.5, %v1030
        %v1032 = vsub.f32 1.5, %v1031
        %v1033 = vmul.f32 %v1028, %v1032
        %vm1034 = vweird.f32 %v965
        %vm1035 = vweird.f32 %v1028
        %vm1036 = vmor %vm1034, %vm1035
        %v1037 = vsel %vm1036, %v1028, %v1033
        %v1038 = vrsqrt.pop %v967
        %v1039 = vmul.f32 %v1038, %v967
        %v1040 = vmul.f32 %v1039, %v1038
        %v1041 = vmul.f32 0.5, %v1040
        %v1042 = vsub.f32 1.5, %v1041
        %v1043 = vmul.f32 %v1038, %v1042
        %vm1044 = vweird.f32 %v967
        %vm1045 = vweird.f32 %v1038
        %vm1046 = vmor %vm1044, %vm1045
        %v1047 = vsel %vm1046, %v1038, %v1043
        %v1048 = vrsqrt.pop %v970
        %v1049 = vmul.f32 %v1048, %v970
        %v1050 = vmul.f32 %v1049, %v1048
        %v1051 = vmul.f32 0.5, %v1050
        %v1052 = vsub.f32 1.5, %v1051
        %v1053 = vmul.f32 %v1048, %v1052
        %vm1054 = vweird.f32 %v970
        %vm1055 = vweird.f32 %v1048
        %vm1056 = vmor %vm1054, %vm1055
        %v1057 = vsel %vm1056, %v1048, %v1053
        %v1058 = vrsqrt.pop %v972
        %v1059 = vmul.f32 %v1058, %v972
        %v1060 = vmul.f32 %v1059, %v1058
        %v1061 = vmul.f32 0.5, %v1060
        %v1062 = vsub.f32 1.5, %v1061
        %v1063 = vmul.f32 %v1058, %v1062
        %vm1064 = vweird.f32 %v972
        %vm1065 = vweird.f32 %v1058
        %vm1066 = vmor %vm1064, %vm1065
        %v1067 = vsel %vm1066, %v1058, %v1063
        %v1068 = vrsqrt.pop %v975
        %v1069 = vmul.f32 %v1068, %v975
        %v1070 = vmul.f32 %v1069, %v1068
        %v1071 = vmul.f32 0.5, %v1070
        %v1072 = vsub.f32 1.5, %v1071
        %v1073 = vmul.f32 %v1068, %v1072
        %vm1074 = vweird.f32 %v975
        %vm1075 = vweird.f32 %v1068
        %vm1076 = vmor %vm1074, %vm1075
        %v1077 = vsel %vm1076, %v1068, %v1073
        %v1078 = vrsqrt.pop %v977
        %v1079 = vmul.f32 %v1078, %v977
        %v1080 = vmul.f32 %v1079, %v1078
        %v1081 = vmul.f32 0.5, %v1080
        %v1082 = vsub.f32 1.5, %v1081
        %v1083 = vmul.f32 %v1078, %v1082
        %vm1084 = vweird.f32 %v977
        %vm1085 = vweird.f32 %v1078
        %vm1086 = vmor %vm1084, %vm1085
        %v1087 = vsel %vm1086, %v1078, %v1083
        %v1088 = vrsqrt.pop %v980
        %v1089 = vmul.f32 %v1088, %v980
        %v1090 = vmul.f32 %v1089, %v1088
        %v1091 = vmul.f32 0.5, %v1090
        %v1092 = vsub.f32 1.5, %v1091
        %v1093 = vmul.f32 %v1088, %v1092
        %vm1094 = vweird.f32 %v980
        %vm1095 = vweird.f32 %v1088
        %vm1096 = vmor %vm1094, %vm1095
        %v1097 = vsel %vm1096, %v1088, %v1093
        %v1098 = vrsqrt.pop %v982
        %v1099 = vmul.f32 %v1098, %v982
        %v1100 = vmul.f32 %v1099, %v1098
        %v1101 = vmul.f32 0.5, %v1100
        %v1102 = vsub.f32 1.5, %v1101
        %v1103 = vmul.f32 %v1098, %v1102
        %vm1104 = vweird.f32 %v982
        %vm1105 = vweird.f32 %v1098
        %vm1106 = vmor %vm1104, %vm1105
        %v1107 = vsel %vm1106, %v1098, %v1103
        %v1108 = vrsqrt.pop %v985
        %v1109 = vmul.f32 %v1108, %v985
        %v1110 = vmul.f32 %v1109, %v1108
        %v1111 = vmul.f32 0.5, %v1110
        %v1112 = vsub.f32 1.5, %v1111
        %v1113 = vmul.f32 %v1108, %v1112
        %vm1114 = vweird.f32 %v985
        %vm1115 = vweird.f32 %v1108
        %vm1116 = vmor %vm1114, %vm1115
        %v1117 = vsel %vm1116, %v1108, %v1113
        %v1118 = vrsqrt.pop %v987
        %v1119 = vmul.f32 %v1118, %v987
        %v1120 = vmul.f32 %v1119, %v1118
        %v1121 = vmul.f32 0.5, %v1120
        %v1122 = vsub.f32 1.5, %v1121
        %v1123 = vmul.f32 %v1118, %v1122
        %vm1124 = vweird.f32 %v987
        %vm1125 = vweird.f32 %v1118
        %vm1126 = vmor %vm1124, %vm1125
        %v1127 = vsel %vm1126, %v1118, %v1123
        %v1128 = vrsqrt.pop %v990
        %v1129 = vmul.f32 %v1128, %v990
        %v1130 = vmul.f32 %v1129, %v1128
        %v1131 = vmul.f32 0.5, %v1130
        %v1132 = vsub.f32 1.5, %v1131
        %v1133 = vmul.f32 %v1128, %v1132
        %vm1134 = vweird.f32 %v990
        %vm1135 = vweird.f32 %v1128
        %vm1136 = vmor %vm1134, %vm1135
        %v1137 = vsel %vm1136, %v1128, %v1133
        %v1138 = vrsqrt.pop %v992
        %v1139 = vmul.f32 %v1138, %v992
        %v1140 = vmul.f32 %v1139, %v1138
        %v1141 = vmul.f32 0.5, %v1140
        %v1142 = vsub.f32 1.5, %v1141
        %v1143 = vmul.f32 %v1138, %v1142
        %vm1144 = vweird.f32 %v992
        %vm1145 = vweird.f32 %v1138
        %vm1146 = vmor %vm1144, %vm1145
        %v1147 = vsel %vm1146, %v1138, %v1143
        %v1148 = vrsqrt.pop %v995
        %v1149 = vmul.f32 %v1148, %v995
        %v1150 = vmul.f32 %v1149, %v1148
        %v1151 = vmul.f32 0.5, %v1150
        %v1152 = vsub.f32 1.5, %v1151
        %v1153 = vmul.f32 %v1148, %v1152
        %vm1154 = vweird.f32 %v995
        %vm1155 = vweird.f32 %v1148
        %vm1156 = vmor %vm1154, %vm1155
        %v1157 = vsel %vm1156, %v1148, %v1153
        %v1158 = vrsqrt.pop %v997
        %v1159 = vmul.f32 %v1158, %v997
        %v1160 = vmul.f32 %v1159, %v1158
        %v1161 = vmul.f32 0.5, %v1160
        %v1162 = vsub.f32 1.5, %v1161
        %v1163 = vmul.f32 %v1158, %v1162
        %vm1164 = vweird.f32 %v997
        %vm1165 = vweird.f32 %v1158
        %vm1166 = vmor %vm1164, %vm1165
        %v1167 = vsel %vm1166, %v1158, %v1163
        %v1168 = vrsqrt.pop %v1000
        %v1169 = vmul.f32 %v1168, %v1000
        %v1170 = vmul.f32 %v1169, %v1168
        %v1171 = vmul.f32 0.5, %v1170
        %v1172 = vsub.f32 1.5, %v1171
        %v1173 = vmul.f32 %v1168, %v1172
        %vm1174 = vweird.f32 %v1000
        %vm1175 = vweird.f32 %v1168
        %vm1176 = vmor %vm1174, %vm1175
        %v1177 = vsel %vm1176, %v1168, %v1173
        %v1178 = vrsqrt.pop %v1002
        %v1179 = vmul.f32 %v1178, %v1002
        %v1180 = vmul.f32 %v1179, %v1178
        %v1181 = vmul.f32 0.5, %v1180
        %v1182 = vsub.f32 1.5, %v1181
        %v1183 = vmul.f32 %v1178, %v1182
        %vm1184 = vweird.f32 %v1002
        %vm1185 = vweird.f32 %v1178
        %vm1186 = vmor %vm1184, %vm1185
        %v1187 = vsel %vm1186, %v1178, %v1183
        %v1188 = vrsqrt.pop %v1005
        %v1189 = vmul.f32 %v1188, %v1005
        %v1190 = vmul.f32 %v1189, %v1188
        %v1191 = vmul.f32 0.5, %v1190
        %v1192 = vsub.f32 1.5, %v1191
        %v1193 = vmul.f32 %v1188, %v1192
        %vm1194 = vweird.f32 %v1005
        %vm1195 = vweird.f32 %v1188
        %vm1196 = vmor %vm1194, %vm1195
        %v1197 = vsel %vm1196, %v1188, %v1193
        %v1198 = vrsqrt.pop %v1007
        %v1199 = vmul.f32 %v1198, %v1007
        %v1200 = vmul.f32 %v1199, %v1198
        %v1201 = vmul.f32 0.5, %v1200
        %v1202 = vsub.f32 1.5, %v1201
        %v1203 = vmul.f32 %v1198, %v1202
        %vm1204 = vweird.f32 %v1007
        %vm1205 = vweird.f32 %v1198
        %vm1206 = vmor %vm1204, %vm1205
        %v1207 = vsel %vm1206, %v1198, %v1203
        %v1208 = vrsqrt.pop %v1010
        %v1209 = vmul.f32 %v1208, %v1010
        %v1210 = vmul.f32 %v1209, %v1208
        %v1211 = vmul.f32 0.5, %v1210
        %v1212 = vsub.f32 1.5, %v1211
        %v1213 = vmul.f32 %v1208, %v1212
        %vm1214 = vweird.f32 %v1010
        %vm1215 = vweird.f32 %v1208
        %vm1216 = vmor %vm1214, %vm1215
        %v1217 = vsel %vm1216, %v1208, %v1213
        %v1218 = vrsqrt.pop %v1012
        %v1219 = vmul.f32 %v1218, %v1012
        %v1220 = vmul.f32 %v1219, %v1218
        %v1221 = vmul.f32 0.5, %v1220
        %v1222 = vsub.f32 1.5, %v1221
        %v1223 = vmul.f32 %v1218, %v1222
        %vm1224 = vweird.f32 %v1012
        %vm1225 = vweird.f32 %v1218
        %vm1226 = vmor %vm1224, %vm1225
        %v1227 = vsel %vm1226, %v1218, %v1223
        %v1228 = vrsqrt.pop %v1015
        %v1229 = vmul.f32 %v1228, %v1015
        %v1230 = vmul.f32 %v1229, %v1228
        %v1231 = vmul.f32 0.5, %v1230
        %v1232 = vsub.f32 1.5, %v1231
        %v1233 = vmul.f32 %v1228, %v1232
        %vm1234 = vweird.f32 %v1015
        %vm1235 = vweird.f32 %v1228
        %vm1236 = vmor %vm1234, %vm1235
        %v1237 = vsel %vm1236, %v1228, %v1233
        %v1238 = vrsqrt.pop %v1017
        %v1239 = vmul.f32 %v1238, %v1017
        %v1240 = vmul.f32 %v1239, %v1238
        %v1241 = vmul.f32 0.5, %v1240
        %v1242 = vsub.f32 1.5, %v1241
        %v1243 = vmul.f32 %v1238, %v1242
        %vm1244 = vweird.f32 %v1017
        %vm1245 = vweird.f32 %v1238
        %vm1246 = vmor %vm1244, %vm1245
        %v1247 = vsel %vm1246, %v1238, %v1243
        %v1248 = vrsqrt.pop %v1020
        %v1249 = vmul.f32 %v1248, %v1020
        %v1250 = vmul.f32 %v1249, %v1248
        %v1251 = vmul.f32 0.5, %v1250
        %v1252 = vsub.f32 1.5, %v1251
        %v1253 = vmul.f32 %v1248, %v1252
        %vm1254 = vweird.f32 %v1020
        %vm1255 = vweird.f32 %v1248
        %vm1256 = vmor %vm1254, %vm1255
        %v1257 = vsel %vm1256, %v1248, %v1253
        %v1258 = vrsqrt.pop %v1022
        %v1259 = vmul.f32 %v1258, %v1022
        %v1260 = vmul.f32 %v1259, %v1258
        %v1261 = vmul.f32 0.5, %v1260
        %v1262 = vsub.f32 1.5, %v1261
        %v1263 = vmul.f32 %v1258, %v1262
        %vm1264 = vweird.f32 %v1022
        %vm1265 = vweird.f32 %v1258
        %vm1266 = vmor %vm1264, %vm1265
        %v1267 = vsel %vm1266, %v1258, %v1263
        %v1268 = vrsqrt.pop %v1025
        %v1269 = vmul.f32 %v1268, %v1025
        %v1270 = vmul.f32 %v1269, %v1268
        %v1271 = vmul.f32 0.5, %v1270
        %v1272 = vsub.f32 1.5, %v1271
        %v1273 = vmul.f32 %v1268, %v1272
        %vm1274 = vweird.f32 %v1025
        %vm1275 = vweird.f32 %v1268
        %vm1276 = vmor %vm1274, %vm1275
        %v1277 = vsel %vm1276, %v1268, %v1273
        %v1278 = vmul.f32 %v965, %v1037
        %v1279 = vmul.f32 %v967, %v1047
        %v1280 = vmul.f32 %v970, %v1057
        %v1281 = vmul.f32 %v972, %v1067
        %v1282 = vmul.f32 %v975, %v1077
        %v1283 = vmul.f32 %v977, %v1087
        %v1284 = vmul.f32 %v980, %v1097
        %v1285 = vmul.f32 %v982, %v1107
        %v1286 = vmul.f32 %v985, %v1117
        %v1287 = vmul.f32 %v987, %v1127
        %v1288 = vmul.f32 %v990, %v1137
        %v1289 = vmul.f32 %v992, %v1147
        %v1290 = vmul.f32 %v995, %v1157
        %v1291 = vmul.f32 %v997, %v1167
        %v1292 = vmul.f32 %v1000, %v1177
        %v1293 = vmul.f32 %v1002, %v1187
        %v1294 = vmul.f32 %v1005, %v1197
        %v1295 = vmul.f32 %v1007, %v1207
        %v1296 = vmul.f32 %v1010, %v1217
        %v1297 = vmul.f32 %v1012, %v1227
        %v1298 = vmul.f32 %v1015, %v1237
        %v1299 = vmul.f32 %v1017, %v1247
        %v1300 = vmul.f32 %v1020, %v1257
        %v1301 = vmul.f32 %v1022, %v1267
        %v1302 = vmul.f32 %v1025, %v1277
        %v1303 = vmul.f32 %v565, %v1037
        %v1304 = vmul.f32 %v567, %v1047
        %v1305 = vmul.f32 %v570, %v1057
        %v1306 = vmul.f32 %v572, %v1067
        %v1307 = vmul.f32 %v575, %v1077
        %v1308 = vmul.f32 %v577, %v1087
        %v1309 = vmul.f32 %v580, %v1097
        %v1310 = vmul.f32 %v582, %v1107
        %v1311 = vmul.f32 %v585, %v1117
        %v1312 = vmul.f32 %v587, %v1127
        %v1313 = vmul.f32 %v590, %v1137
        %v1314 = vmul.f32 %v592, %v1147
        %v1315 = vmul.f32 %v595, %v1157
        %v1316 = vmul.f32 %v597, %v1167
        %v1317 = vmul.f32 %v600, %v1177
        %v1318 = vmul.f32 %v602, %v1187
        %v1319 = vmul.f32 %v605, %v1197
        %v1320 = vmul.f32 %v607, %v1207
        %v1321 = vmul.f32 %v610, %v1217
        %v1322 = vmul.f32 %v612, %v1227
        %v1323 = vmul.f32 %v615, %v1237
        %v1324 = vmul.f32 %v617, %v1247
        %v1325 = vmul.f32 %v620, %v1257
        %v1326 = vmul.f32 %v622, %v1267
        %v1327 = vmul.f32 %v625, %v1277
        %v1328 = vmul.f32 %v1303, 0.70710677
        %v1329 = vmul.f32 %v1304, 0.70710677
        %v1330 = vmul.f32 %v1305, 0.70710677
        %v1331 = vmul.f32 %v1306, 0.70710677
        %v1332 = vmul.f32 %v1307, 0.70710677
        %v1333 = vmul.f32 %v1308, 0.70710677
        %v1334 = vmul.f32 %v1309, 0.70710677
        %v1335 = vmul.f32 %v1310, 0.70710677
        %v1336 = vmul.f32 %v1311, 0.70710677
        %v1337 = vmul.f32 %v1312, 0.70710677
        %v1338 = vmul.f32 %v1313, 0.70710677
        %v1339 = vmul.f32 %v1314, 0.70710677
        %v1340 = vmul.f32 %v1315, 0.70710677
        %v1341 = vmul.f32 %v1316, 0.70710677
        %v1342 = vmul.f32 %v1317, 0.70710677
        %v1343 = vmul.f32 %v1318, 0.70710677
        %v1344 = vmul.f32 %v1319, 0.70710677
        %v1345 = vmul.f32 %v1320, 0.70710677
        %v1346 = vmul.f32 %v1321, 0.70710677
        %v1347 = vmul.f32 %v1322, 0.70710677
        %v1348 = vmul.f32 %v1323, 0.70710677
        %v1349 = vmul.f32 %v1324, 0.70710677
        %v1350 = vmul.f32 %v1325, 0.70710677
        %v1351 = vmul.f32 %v1326, 0.70710677
        %v1352 = vmul.f32 %v1327, 0.70710677
        %v1353 = vand.u32 2147483647, %v1328
        %v1354 = vand.u32 2147483647, %v1329
        %v1355 = vand.u32 2147483647, %v1330
        %v1356 = vand.u32 2147483647, %v1331
        %v1357 = vand.u32 2147483647, %v1332
        %v1358 = vand.u32 2147483647, %v1333
        %v1359 = vand.u32 2147483647, %v1334
        %v1360 = vand.u32 2147483647, %v1335
        %v1361 = vand.u32 2147483647, %v1336
        %v1362 = vand.u32 2147483647, %v1337
        %v1363 = vand.u32 2147483647, %v1338
        %v1364 = vand.u32 2147483647, %v1339
        %v1365 = vand.u32 2147483647, %v1340
        %v1366 = vand.u32 2147483647, %v1341
        %v1367 = vand.u32 2147483647, %v1342
        %v1368 = vand.u32 2147483647, %v1343
        %v1369 = vand.u32 2147483647, %v1344
        %v1370 = vand.u32 2147483647, %v1345
        %v1371 = vand.u32 2147483647, %v1346
        %v1372 = vand.u32 2147483647, %v1347
        %v1373 = vand.u32 2147483647, %v1348
        %v1374 = vand.u32 2147483647, %v1349
        %v1375 = vand.u32 2147483647, %v1350
        %v1376 = vand.u32 2147483647, %v1351
        %v1377 = vand.u32 2147483647, %v1352
        %v1378 = vmul.f32 %v1353, 0.3275911
        %v1379 = vmul.f32 %v1354, 0.3275911
        %v1380 = vmul.f32 %v1355, 0.3275911
        %v1381 = vmul.f32 %v1356, 0.3275911
        %v1382 = vmul.f32 %v1357, 0.3275911
        %v1383 = vmul.f32 %v1358, 0.3275911
        %v1384 = vmul.f32 %v1359, 0.3275911
        %v1385 = vmul.f32 %v1360, 0.3275911
        %v1386 = vmul.f32 %v1361, 0.3275911
        %v1387 = vmul.f32 %v1362, 0.3275911
        %v1388 = vmul.f32 %v1363, 0.3275911
        %v1389 = vmul.f32 %v1364, 0.3275911
        %v1390 = vmul.f32 %v1365, 0.3275911
        %v1391 = vmul.f32 %v1366, 0.3275911
        %v1392 = vmul.f32 %v1367, 0.3275911
        %v1393 = vmul.f32 %v1368, 0.3275911
        %v1394 = vmul.f32 %v1369, 0.3275911
        %v1395 = vmul.f32 %v1370, 0.3275911
        %v1396 = vmul.f32 %v1371, 0.3275911
        %v1397 = vmul.f32 %v1372, 0.3275911
        %v1398 = vmul.f32 %v1373, 0.3275911
        %v1399 = vmul.f32 %v1374, 0.3275911
        %v1400 = vmul.f32 %v1375, 0.3275911
        %v1401 = vmul.f32 %v1376, 0.3275911
        %v1402 = vmul.f32 %v1377, 0.3275911
        %v1403 = vadd.f32 %v1378, 1.0
        %v1404 = vadd.f32 %v1379, 1.0
        %v1405 = vadd.f32 %v1380, 1.0
        %v1406 = vadd.f32 %v1381, 1.0
        %v1407 = vadd.f32 %v1382, 1.0
        %v1408 = vadd.f32 %v1383, 1.0
        %v1409 = vadd.f32 %v1384, 1.0
        %v1410 = vadd.f32 %v1385, 1.0
        %v1411 = vadd.f32 %v1386, 1.0
        %v1412 = vadd.f32 %v1387, 1.0
        %v1413 = vadd.f32 %v1388, 1.0
        %v1414 = vadd.f32 %v1389, 1.0
        %v1415 = vadd.f32 %v1390, 1.0
        %v1416 = vadd.f32 %v1391, 1.0
        %v1417 = vadd.f32 %v1392, 1.0
        %v1418 = vadd.f32 %v1393, 1.0
        %v1419 = vadd.f32 %v1394, 1.0
        %v1420 = vadd.f32 %v1395, 1.0
        %v1421 = vadd.f32 %v1396, 1.0
        %v1422 = vadd.f32 %v1397, 1.0
        %v1423 = vadd.f32 %v1398, 1.0
        %v1424 = vadd.f32 %v1399, 1.0
        %v1425 = vadd.f32 %v1400, 1.0
        %v1426 = vadd.f32 %v1401, 1.0
        %v1427 = vadd.f32 %v1402, 1.0
        %v1428 = vrcp.pop %v1403
        %v1429 = vrcp.pop %v1404
        %v1430 = vrcp.pop %v1405
        %v1431 = vrcp.pop %v1406
        %v1432 = vrcp.pop %v1407
        %v1433 = vrcp.pop %v1408
        %v1434 = vrcp.pop %v1409
        %v1435 = vrcp.pop %v1410
        %v1436 = vrcp.pop %v1411
        %v1437 = vrcp.pop %v1412
        %v1438 = vrcp.pop %v1413
        %v1439 = vrcp.pop %v1414
        %v1440 = vrcp.pop %v1415
        %v1441 = vrcp.pop %v1416
        %v1442 = vrcp.pop %v1417
        %v1443 = vrcp.pop %v1418
        %v1444 = vrcp.pop %v1419
        %v1445 = vrcp.pop %v1420
        %v1446 = vrcp.pop %v1421
        %v1447 = vrcp.pop %v1422
        %v1448 = vrcp.pop %v1423
        %v1449 = vrcp.pop %v1424
        %v1450 = vrcp.pop %v1425
        %v1451 = vrcp.pop %v1426
        %v1452 = vrcp.pop %v1427
        %v1453 = vmul.f32 %v1403, %v1428
        %v1454 = vmul.f32 %v1404, %v1429
        %v1455 = vmul.f32 %v1405, %v1430
        %v1456 = vmul.f32 %v1406, %v1431
        %v1457 = vmul.f32 %v1407, %v1432
        %v1458 = vmul.f32 %v1408, %v1433
        %v1459 = vmul.f32 %v1409, %v1434
        %v1460 = vmul.f32 %v1410, %v1435
        %v1461 = vmul.f32 %v1411, %v1436
        %v1462 = vmul.f32 %v1412, %v1437
        %v1463 = vmul.f32 %v1413, %v1438
        %v1464 = vmul.f32 %v1414, %v1439
        %v1465 = vmul.f32 %v1415, %v1440
        %v1466 = vmul.f32 %v1416, %v1441
        %v1467 = vmul.f32 %v1417, %v1442
        %v1468 = vmul.f32 %v1418, %v1443
        %v1469 = vmul.f32 %v1419, %v1444
        %v1470 = vmul.f32 %v1420, %v1445
        %v1471 = vmul.f32 %v1421, %v1446
        %v1472 = vmul.f32 %v1422, %v1447
        %v1473 = vmul.f32 %v1423, %v1448
        %v1474 = vmul.f32 %v1424, %v1449
        %v1475 = vmul.f32 %v1425, %v1450
        %v1476 = vmul.f32 %v1426, %v1451
        %v1477 = vmul.f32 %v1427, %v1452
        %v1478 = vsub.f32 2.0, %v1453
        %v1479 = vsub.f32 2.0, %v1454
        %v1480 = vsub.f32 2.0, %v1455
        %v1481 = vsub.f32 2.0, %v1456
        %v1482 = vsub.f32 2.0, %v1457
        %v1483 = vsub.f32 2.0, %v1458
        %v1484 = vsub.f32 2.0, %v1459
        %v1485 = vsub.f32 2.0, %v1460
        %v1486 = vsub.f32 2.0, %v1461
        %v1487 = vsub.f32 2.0, %v1462
        %v1488 = vsub.f32 2.0, %v1463
        %v1489 = vsub.f32 2.0, %v1464
        %v1490 = vsub.f32 2.0, %v1465
        %v1491 = vsub.f32 2.0, %v1466
        %v1492 = vsub.f32 2.0, %v1467
        %v1493 = vsub.f32 2.0, %v1468
        %v1494 = vsub.f32 2.0, %v1469
        %v1495 = vsub.f32 2.0, %v1470
        %v1496 = vsub.f32 2.0, %v1471
        %v1497 = vsub.f32 2.0, %v1472
        %v1498 = vsub.f32 2.0, %v1473
        %v1499 = vsub.f32 2.0, %v1474
        %v1500 = vsub.f32 2.0, %v1475
        %v1501 = vsub.f32 2.0, %v1476
        %v1502 = vsub.f32 2.0, %v1477
        %v1503 = vmul.f32 %v1428, %v1478
        %v1504 = vmul.f32 %v1429, %v1479
        %v1505 = vmul.f32 %v1430, %v1480
        %v1506 = vmul.f32 %v1431, %v1481
        %v1507 = vmul.f32 %v1432, %v1482
        %v1508 = vmul.f32 %v1433, %v1483
        %v1509 = vmul.f32 %v1434, %v1484
        %v1510 = vmul.f32 %v1435, %v1485
        %v1511 = vmul.f32 %v1436, %v1486
        %v1512 = vmul.f32 %v1437, %v1487
        %v1513 = vmul.f32 %v1438, %v1488
        %v1514 = vmul.f32 %v1439, %v1489
        %v1515 = vmul.f32 %v1440, %v1490
        %v1516 = vmul.f32 %v1441, %v1491
        %v1517 = vmul.f32 %v1442, %v1492
        %v1518 = vmul.f32 %v1443, %v1493
        %v1519 = vmul.f32 %v1444, %v1494
        %v1520 = vmul.f32 %v1445, %v1495
        %v1521 = vmul.f32 %v1446, %v1496
        %v1522 = vmul.f32 %v1447, %v1497
        %v1523 = vmul.f32 %v1448, %v1498
        %v1524 = vmul.f32 %v1449, %v1499
        %v1525 = vmul.f32 %v1450, %v1500
        %v1526 = vmul.f32 %v1451, %v1501
        %v1527 = vmul.f32 %v1452, %v1502
        %v1528 = vmul.f32 %v1503, 1.0614054
        %v1529 = vmul.f32 %v1504, 1.0614054
        %v1530 = vmul.f32 %v1505, 1.0614054
        %v1531 = vmul.f32 %v1506, 1.0614054
        %v1532 = vmul.f32 %v1507, 1.0614054
        %v1533 = vmul.f32 %v1508, 1.0614054
        %v1534 = vmul.f32 %v1509, 1.0614054
        %v1535 = vmul.f32 %v1510, 1.0614054
        %v1536 = vmul.f32 %v1511, 1.0614054
        %v1537 = vmul.f32 %v1512, 1.0614054
        %v1538 = vmul.f32 %v1513, 1.0614054
        %v1539 = vmul.f32 %v1514, 1.0614054
        %v1540 = vmul.f32 %v1515, 1.0614054
        %v1541 = vmul.f32 %v1516, 1.0614054
        %v1542 = vmul.f32 %v1517, 1.0614054
        %v1543 = vmul.f32 %v1518, 1.0614054
        %v1544 = vmul.f32 %v1519, 1.0614054
        %v1545 = vmul.f32 %v1520, 1.0614054
        %v1546 = vmul.f32 %v1521, 1.0614054
        %v1547 = vmul.f32 %v1522, 1.0614054
        %v1548 = vmul.f32 %v1523, 1.0614054
        %v1549 = vmul.f32 %v1524, 1.0614054
        %v1550 = vmul.f32 %v1525, 1.0614054
        %v1551 = vmul.f32 %v1526, 1.0614054
        %v1552 = vmul.f32 %v1527, 1.0614054
        %v1553 = vadd.f32 %v1528, -1.4531521
        %v1554 = vadd.f32 %v1529, -1.4531521
        %v1555 = vadd.f32 %v1530, -1.4531521
        %v1556 = vadd.f32 %v1531, -1.4531521
        %v1557 = vadd.f32 %v1532, -1.4531521
        %v1558 = vadd.f32 %v1533, -1.4531521
        %v1559 = vadd.f32 %v1534, -1.4531521
        %v1560 = vadd.f32 %v1535, -1.4531521
        %v1561 = vadd.f32 %v1536, -1.4531521
        %v1562 = vadd.f32 %v1537, -1.4531521
        %v1563 = vadd.f32 %v1538, -1.4531521
        %v1564 = vadd.f32 %v1539, -1.4531521
        %v1565 = vadd.f32 %v1540, -1.4531521
        %v1566 = vadd.f32 %v1541, -1.4531521
        %v1567 = vadd.f32 %v1542, -1.4531521
        %v1568 = vadd.f32 %v1543, -1.4531521
        %v1569 = vadd.f32 %v1544, -1.4531521
        %v1570 = vadd.f32 %v1545, -1.4531521
        %v1571 = vadd.f32 %v1546, -1.4531521
        %v1572 = vadd.f32 %v1547, -1.4531521
        %v1573 = vadd.f32 %v1548, -1.4531521
        %v1574 = vadd.f32 %v1549, -1.4531521
        %v1575 = vadd.f32 %v1550, -1.4531521
        %v1576 = vadd.f32 %v1551, -1.4531521
        %v1577 = vadd.f32 %v1552, -1.4531521
        %v1578 = vmul.f32 %v1553, %v1503
        %v1579 = vmul.f32 %v1554, %v1504
        %v1580 = vmul.f32 %v1555, %v1505
        %v1581 = vmul.f32 %v1556, %v1506
        %v1582 = vmul.f32 %v1557, %v1507
        %v1583 = vmul.f32 %v1558, %v1508
        %v1584 = vmul.f32 %v1559, %v1509
        %v1585 = vmul.f32 %v1560, %v1510
        %v1586 = vmul.f32 %v1561, %v1511
        %v1587 = vmul.f32 %v1562, %v1512
        %v1588 = vmul.f32 %v1563, %v1513
        %v1589 = vmul.f32 %v1564, %v1514
        %v1590 = vmul.f32 %v1565, %v1515
        %v1591 = vmul.f32 %v1566, %v1516
        %v1592 = vmul.f32 %v1567, %v1517
        %v1593 = vmul.f32 %v1568, %v1518
        %v1594 = vmul.f32 %v1569, %v1519
        %v1595 = vmul.f32 %v1570, %v1520
        %v1596 = vmul.f32 %v1571, %v1521
        %v1597 = vmul.f32 %v1572, %v1522
        %v1598 = vmul.f32 %v1573, %v1523
        %v1599 = vmul.f32 %v1574, %v1524
        %v1600 = vmul.f32 %v1575, %v1525
        %v1601 = vmul.f32 %v1576, %v1526
        %v1602 = vmul.f32 %v1577, %v1527
        %v1603 = vadd.f32 %v1578, 1.4214138
        %v1604 = vadd.f32 %v1579, 1.4214138
        %v1605 = vadd.f32 %v1580, 1.4214138
        %v1606 = vadd.f32 %v1581, 1.4214138
        %v1607 = vadd.f32 %v1582, 1.4214138
        %v1608 = vadd.f32 %v1583, 1.4214138
        %v1609 = vadd.f32 %v1584, 1.4214138
        %v1610 = vadd.f32 %v1585, 1.4214138
        %v1611 = vadd.f32 %v1586, 1.4214138
        %v1612 = vadd.f32 %v1587, 1.4214138
        %v1613 = vadd.f32 %v1588, 1.4214138
        %v1614 = vadd.f32 %v1589, 1.4214138
        %v1615 = vadd.f32 %v1590, 1.4214138
        %v1616 = vadd.f32 %v1591, 1.4214138
        %v1617 = vadd.f32 %v1592, 1.4214138
        %v1618 = vadd.f32 %v1593, 1.4214138
        %v1619 = vadd.f32 %v1594, 1.4214138
        %v1620 = vadd.f32 %v1595, 1.4214138
        %v1621 = vadd.f32 %v1596, 1.4214138
        %v1622 = vadd.f32 %v1597, 1.4214138
        %v1623 = vadd.f32 %v1598, 1.4214138
        %v1624 = vadd.f32 %v1599, 1.4214138
        %v1625 = vadd.f32 %v1600, 1.4214138
        %v1626 = vadd.f32 %v1601, 1.4214138
        %v1627 = vadd.f32 %v1602, 1.4214138
        %v1628 = vmul.f32 %v1603, %v1503
        %v1629 = vmul.f32 %v1604, %v1504
        %v1630 = vmul.f32 %v1605, %v1505
        %v1631 = vmul.f32 %v1606, %v1506
        %v1632 = vmul.f32 %v1607, %v1507
        %v1633 = vmul.f32 %v1608, %v1508
        %v1634 = vmul.f32 %v1609, %v1509
        %v1635 = vmul.f32 %v1610, %v1510
        %v1636 = vmul.f32 %v1611, %v1511
        %v1637 = vmul.f32 %v1612, %v1512
        %v1638 = vmul.f32 %v1613, %v1513
        %v1639 = vmul.f32 %v1614, %v1514
        %v1640 = vmul.f32 %v1615, %v1515
        %v1641 = vmul.f32 %v1616, %v1516
        %v1642 = vmul.f32 %v1617, %v1517
        %v1643 = vmul.f32 %v1618, %v1518
        %v1644 = vmul.f32 %v1619, %v1519
        %v1645 = vmul.f32 %v1620, %v1520
        %v1646 = vmul.f32 %v1621, %v1521
        %v1647 = vmul.f32 %v1622, %v1522
        %v1648 = vmul.f32 %v1623, %v1523
        %v1649 = vmul.f32 %v1624, %v1524
        %v1650 = vmul.f32 %v1625, %v1525
        %v1651 = vmul.f32 %v1626, %v1526
        %v1652 = vmul.f32 %v1627, %v1527
        %v1653 = vadd.f32 %v1628, -0.28449672
        %v1654 = vadd.f32 %v1629, -0.28449672
        %v1655 = vadd.f32 %v1630, -0.28449672
        %v1656 = vadd.f32 %v1631, -0.28449672
        %v1657 = vadd.f32 %v1632, -0.28449672
        %v1658 = vadd.f32 %v1633, -0.28449672
        %v1659 = vadd.f32 %v1634, -0.28449672
        %v1660 = vadd.f32 %v1635, -0.28449672
        %v1661 = vadd.f32 %v1636, -0.28449672
        %v1662 = vadd.f32 %v1637, -0.28449672
        %v1663 = vadd.f32 %v1638, -0.28449672
        %v1664 = vadd.f32 %v1639, -0.28449672
        %v1665 = vadd.f32 %v1640, -0.28449672
        %v1666 = vadd.f32 %v1641, -0.28449672
        %v1667 = vadd.f32 %v1642, -0.28449672
        %v1668 = vadd.f32 %v1643, -0.28449672
        %v1669 = vadd.f32 %v1644, -0.28449672
        %v1670 = vadd.f32 %v1645, -0.28449672
        %v1671 = vadd.f32 %v1646, -0.28449672
        %v1672 = vadd.f32 %v1647, -0.28449672
        %v1673 = vadd.f32 %v1648, -0.28449672
        %v1674 = vadd.f32 %v1649, -0.28449672
        %v1675 = vadd.f32 %v1650, -0.28449672
        %v1676 = vadd.f32 %v1651, -0.28449672
        %v1677 = vadd.f32 %v1652, -0.28449672
        %v1678 = vmul.f32 %v1653, %v1503
        %v1679 = vmul.f32 %v1654, %v1504
        %v1680 = vmul.f32 %v1655, %v1505
        %v1681 = vmul.f32 %v1656, %v1506
        %v1682 = vmul.f32 %v1657, %v1507
        %v1683 = vmul.f32 %v1658, %v1508
        %v1684 = vmul.f32 %v1659, %v1509
        %v1685 = vmul.f32 %v1660, %v1510
        %v1686 = vmul.f32 %v1661, %v1511
        %v1687 = vmul.f32 %v1662, %v1512
        %v1688 = vmul.f32 %v1663, %v1513
        %v1689 = vmul.f32 %v1664, %v1514
        %v1690 = vmul.f32 %v1665, %v1515
        %v1691 = vmul.f32 %v1666, %v1516
        %v1692 = vmul.f32 %v1667, %v1517
        %v1693 = vmul.f32 %v1668, %v1518
        %v1694 = vmul.f32 %v1669, %v1519
        %v1695 = vmul.f32 %v1670, %v1520
        %v1696 = vmul.f32 %v1671, %v1521
        %v1697 = vmul.f32 %v1672, %v1522
        %v1698 = vmul.f32 %v1673, %v1523
        %v1699 = vmul.f32 %v1674, %v1524
        %v1700 = vmul.f32 %v1675, %v1525
        %v1701 = vmul.f32 %v1676, %v1526
        %v1702 = vmul.f32 %v1677, %v1527
        %v1703 = vadd.f32 %v1678, 0.2548296
        %v1704 = vadd.f32 %v1679, 0.2548296
        %v1705 = vadd.f32 %v1680, 0.2548296
        %v1706 = vadd.f32 %v1681, 0.2548296
        %v1707 = vadd.f32 %v1682, 0.2548296
        %v1708 = vadd.f32 %v1683, 0.2548296
        %v1709 = vadd.f32 %v1684, 0.2548296
        %v1710 = vadd.f32 %v1685, 0.2548296
        %v1711 = vadd.f32 %v1686, 0.2548296
        %v1712 = vadd.f32 %v1687, 0.2548296
        %v1713 = vadd.f32 %v1688, 0.2548296
        %v1714 = vadd.f32 %v1689, 0.2548296
        %v1715 = vadd.f32 %v1690, 0.2548296
        %v1716 = vadd.f32 %v1691, 0.2548296
        %v1717 = vadd.f32 %v1692, 0.2548296
        %v1718 = vadd.f32 %v1693, 0.2548296
        %v1719 = vadd.f32 %v1694, 0.2548296
        %v1720 = vadd.f32 %v1695, 0.2548296
        %v1721 = vadd.f32 %v1696, 0.2548296
        %v1722 = vadd.f32 %v1697, 0.2548296
        %v1723 = vadd.f32 %v1698, 0.2548296
        %v1724 = vadd.f32 %v1699, 0.2548296
        %v1725 = vadd.f32 %v1700, 0.2548296
        %v1726 = vadd.f32 %v1701, 0.2548296
        %v1727 = vadd.f32 %v1702, 0.2548296
        %v1728 = vmul.f32 %v1703, %v1503
        %v1729 = vmul.f32 %v1704, %v1504
        %v1730 = vmul.f32 %v1705, %v1505
        %v1731 = vmul.f32 %v1706, %v1506
        %v1732 = vmul.f32 %v1707, %v1507
        %v1733 = vmul.f32 %v1708, %v1508
        %v1734 = vmul.f32 %v1709, %v1509
        %v1735 = vmul.f32 %v1710, %v1510
        %v1736 = vmul.f32 %v1711, %v1511
        %v1737 = vmul.f32 %v1712, %v1512
        %v1738 = vmul.f32 %v1713, %v1513
        %v1739 = vmul.f32 %v1714, %v1514
        %v1740 = vmul.f32 %v1715, %v1515
        %v1741 = vmul.f32 %v1716, %v1516
        %v1742 = vmul.f32 %v1717, %v1517
        %v1743 = vmul.f32 %v1718, %v1518
        %v1744 = vmul.f32 %v1719, %v1519
        %v1745 = vmul.f32 %v1720, %v1520
        %v1746 = vmul.f32 %v1721, %v1521
        %v1747 = vmul.f32 %v1722, %v1522
        %v1748 = vmul.f32 %v1723, %v1523
        %v1749 = vmul.f32 %v1724, %v1524
        %v1750 = vmul.f32 %v1725, %v1525
        %v1751 = vmul.f32 %v1726, %v1526
        %v1752 = vmul.f32 %v1727, %v1527
        %v1753 = vsub.f32 0.0, %v1353
        %v1754 = vsub.f32 0.0, %v1354
        %v1755 = vsub.f32 0.0, %v1355
        %v1756 = vsub.f32 0.0, %v1356
        %v1757 = vsub.f32 0.0, %v1357
        %v1758 = vsub.f32 0.0, %v1358
        %v1759 = vsub.f32 0.0, %v1359
        %v1760 = vsub.f32 0.0, %v1360
        %v1761 = vsub.f32 0.0, %v1361
        %v1762 = vsub.f32 0.0, %v1362
        %v1763 = vsub.f32 0.0, %v1363
        %v1764 = vsub.f32 0.0, %v1364
        %v1765 = vsub.f32 0.0, %v1365
        %v1766 = vsub.f32 0.0, %v1366
        %v1767 = vsub.f32 0.0, %v1367
        %v1768 = vsub.f32 0.0, %v1368
        %v1769 = vsub.f32 0.0, %v1369
        %v1770 = vsub.f32 0.0, %v1370
        %v1771 = vsub.f32 0.0, %v1371
        %v1772 = vsub.f32 0.0, %v1372
        %v1773 = vsub.f32 0.0, %v1373
        %v1774 = vsub.f32 0.0, %v1374
        %v1775 = vsub.f32 0.0, %v1375
        %v1776 = vsub.f32 0.0, %v1376
        %v1777 = vsub.f32 0.0, %v1377
        %v1778 = vmul.f32 %v1753, %v1353
        %v1779 = vmul.f32 %v1754, %v1354
        %v1780 = vmul.f32 %v1755, %v1355
        %v1781 = vmul.f32 %v1756, %v1356
        %v1782 = vmul.f32 %v1757, %v1357
        %v1783 = vmul.f32 %v1758, %v1358
        %v1784 = vmul.f32 %v1759, %v1359
        %v1785 = vmul.f32 %v1760, %v1360
        %v1786 = vmul.f32 %v1761, %v1361
        %v1787 = vmul.f32 %v1762, %v1362
        %v1788 = vmul.f32 %v1763, %v1363
        %v1789 = vmul.f32 %v1764, %v1364
        %v1790 = vmul.f32 %v1765, %v1365
        %v1791 = vmul.f32 %v1766, %v1366
        %v1792 = vmul.f32 %v1767, %v1367
        %v1793 = vmul.f32 %v1768, %v1368
        %v1794 = vmul.f32 %v1769, %v1369
        %v1795 = vmul.f32 %v1770, %v1370
        %v1796 = vmul.f32 %v1771, %v1371
        %v1797 = vmul.f32 %v1772, %v1372
        %v1798 = vmul.f32 %v1773, %v1373
        %v1799 = vmul.f32 %v1774, %v1374
        %v1800 = vmul.f32 %v1775, %v1375
        %v1801 = vmul.f32 %v1776, %v1376
        %v1802 = vmul.f32 %v1777, %v1377
        %v1803 = vmul.f32 %v1778, 1.442695
        %v1804 = vpow.pop %v1803
        %v1805 = vmul.f32 %v1779, 1.442695
        %v1806 = vpow.pop %v1805
        %v1807 = vmul.f32 %v1780, 1.442695
        %v1808 = vpow.pop %v1807
        %v1809 = vmul.f32 %v1781, 1.442695
        %v1810 = vpow.pop %v1809
        %v1811 = vmul.f32 %v1782, 1.442695
        %v1812 = vpow.pop %v1811
        %v1813 = vmul.f32 %v1783, 1.442695
        %v1814 = vpow.pop %v1813
        %v1815 = vmul.f32 %v1784, 1.442695
        %v1816 = vpow.pop %v1815
        %v1817 = vmul.f32 %v1785, 1.442695
        %v1818 = vpow.pop %v1817
        %v1819 = vmul.f32 %v1786, 1.442695
        %v1820 = vpow.pop %v1819
        %v1821 = vmul.f32 %v1787, 1.442695
        %v1822 = vpow.pop %v1821
        %v1823 = vmul.f32 %v1788, 1.442695
        %v1824 = vpow.pop %v1823
        %v1825 = vmul.f32 %v1789, 1.442695
        %v1826 = vpow.pop %v1825
        %v1827 = vmul.f32 %v1790, 1.442695
        %v1828 = vpow.pop %v1827
        %v1829 = vmul.f32 %v1791, 1.442695
        %v1830 = vpow.pop %v1829
        %v1831 = vmul.f32 %v1792, 1.442695
        %v1832 = vpow.pop %v1831
        %v1833 = vmul.f32 %v1793, 1.442695
        %v1834 = vpow.pop %v1833
        %v1835 = vmul.f32 %v1794, 1.442695
        %v1836 = vpow.pop %v1835
        %v1837 = vmul.f32 %v1795, 1.442695
        %v1838 = vpow.pop %v1837
        %v1839 = vmul.f32 %v1796, 1.442695
        %v1840 = vpow.pop %v1839
        %v1841 = vmul.f32 %v1797, 1.442695
        %v1842 = vpow.pop %v1841
        %v1843 = vmul.f32 %v1798, 1.442695
        %v1844 = vpow.pop %v1843
        %v1845 = vmul.f32 %v1799, 1.442695
        %v1846 = vpow.pop %v1845
        %v1847 = vmul.f32 %v1800, 1.442695
        %v1848 = vpow.pop %v1847
        %v1849 = vmul.f32 %v1801, 1.442695
        %v1850 = vpow.pop %v1849
        %v1851 = vmul.f32 %v1802, 1.442695
        %v1852 = vpow.pop %v1851
        %v1853 = vmul.f32 %v1728, %v1804
        %v1854 = vmul.f32 %v1729, %v1806
        %v1855 = vmul.f32 %v1730, %v1808
        %v1856 = vmul.f32 %v1731, %v1810
        %v1857 = vmul.f32 %v1732, %v1812
        %v1858 = vmul.f32 %v1733, %v1814
        %v1859 = vmul.f32 %v1734, %v1816
        %v1860 = vmul.f32 %v1735, %v1818
        %v1861 = vmul.f32 %v1736, %v1820
        %v1862 = vmul.f32 %v1737, %v1822
        %v1863 = vmul.f32 %v1738, %v1824
        %v1864 = vmul.f32 %v1739, %v1826
        %v1865 = vmul.f32 %v1740, %v1828
        %v1866 = vmul.f32 %v1741, %v1830
        %v1867 = vmul.f32 %v1742, %v1832
        %v1868 = vmul.f32 %v1743, %v1834
        %v1869 = vmul.f32 %v1744, %v1836
        %v1870 = vmul.f32 %v1745, %v1838
        %v1871 = vmul.f32 %v1746, %v1840
        %v1872 = vmul.f32 %v1747, %v1842
        %v1873 = vmul.f32 %v1748, %v1844
        %v1874 = vmul.f32 %v1749, %v1846
        %v1875 = vmul.f32 %v1750, %v1848
        %v1876 = vmul.f32 %v1751, %v1850
        %v1877 = vmul.f32 %v1752, %v1852
        %v1878 = vsub.f32 1.0, %v1853
        %v1879 = vsub.f32 1.0, %v1854
        %v1880 = vsub.f32 1.0, %v1855
        %v1881 = vsub.f32 1.0, %v1856
        %v1882 = vsub.f32 1.0, %v1857
        %v1883 = vsub.f32 1.0, %v1858
        %v1884 = vsub.f32 1.0, %v1859
        %v1885 = vsub.f32 1.0, %v1860
        %v1886 = vsub.f32 1.0, %v1861
        %v1887 = vsub.f32 1.0, %v1862
        %v1888 = vsub.f32 1.0, %v1863
        %v1889 = vsub.f32 1.0, %v1864
        %v1890 = vsub.f32 1.0, %v1865
        %v1891 = vsub.f32 1.0, %v1866
        %v1892 = vsub.f32 1.0, %v1867
        %v1893 = vsub.f32 1.0, %v1868
        %v1894 = vsub.f32 1.0, %v1869
        %v1895 = vsub.f32 1.0, %v1870
        %v1896 = vsub.f32 1.0, %v1871
        %v1897 = vsub.f32 1.0, %v1872
        %v1898 = vsub.f32 1.0, %v1873
        %v1899 = vsub.f32 1.0, %v1874
        %v1900 = vsub.f32 1.0, %v1875
        %v1901 = vsub.f32 1.0, %v1876
        %v1902 = vsub.f32 1.0, %v1877
        %vm1903 = vcmp.ge.f32.partialorder %v1328, 0.0
        %vm1904 = vcmp.ge.f32.partialorder %v1329, 0.0
        %vm1905 = vcmp.ge.f32.partialorder %v1330, 0.0
        %vm1906 = vcmp.ge.f32.partialorder %v1331, 0.0
        %vm1907 = vcmp.ge.f32.partialorder %v1332, 0.0
        %vm1908 = vcmp.ge.f32.partialorder %v1333, 0.0
        %vm1909 = vcmp.ge.f32.partialorder %v1334, 0.0
        %vm1910 = vcmp.ge.f32.partialorder %v1335, 0.0
        %vm1911 = vcmp.ge.f32.partialorder %v1336, 0.0
        %vm1912 = vcmp.ge.f32.partialorder %v1337, 0.0
        %vm1913 = vcmp.ge.f32.partialorder %v1338, 0.0
        %vm1914 = vcmp.ge.f32.partialorder %v1339, 0.0
        %vm1915 = vcmp.ge.f32.partialorder %v1340, 0.0
        %vm1916 = vcmp.ge.f32.partialorder %v1341, 0.0
        %vm1917 = vcmp.ge.f32.partialorder %v1342, 0.0
        %vm1918 = vcmp.ge.f32.partialorder %v1343, 0.0
        %vm1919 = vcmp.ge.f32.partialorder %v1344, 0.0
        %vm1920 = vcmp.ge.f32.partialorder %v1345, 0.0
        %vm1921 = vcmp.ge.f32.partialorder %v1346, 0.0
        %vm1922 = vcmp.ge.f32.partialorder %v1347, 0.0
        %vm1923 = vcmp.ge.f32.partialorder %v1348, 0.0
        %vm1924 = vcmp.ge.f32.partialorder %v1349, 0.0
        %vm1925 = vcmp.ge.f32.partialorder %v1350, 0.0
        %vm1926 = vcmp.ge.f32.partialorder %v1351, 0.0
        %vm1927 = vcmp.ge.f32.partialorder %v1352, 0.0
        %v1928 = vsub.f32 0.0, %v1878
        %v1929 = vsub.f32 0.0, %v1879
        %v1930 = vsub.f32 0.0, %v1880
        %v1931 = vsub.f32 0.0, %v1881
        %v1932 = vsub.f32 0.0, %v1882
        %v1933 = vsub.f32 0.0, %v1883
        %v1934 = vsub.f32 0.0, %v1884
        %v1935 = vsub.f32 0.0, %v1885
        %v1936 = vsub.f32 0.0, %v1886
        %v1937 = vsub.f32 0.0, %v1887
        %v1938 = vsub.f32 0.0, %v1888
        %v1939 = vsub.f32 0.0, %v1889
        %v1940 = vsub.f32 0.0, %v1890
        %v1941 = vsub.f32 0.0, %v1891
        %v1942 = vsub.f32 0.0, %v1892
        %v1943 = vsub.f32 0.0, %v1893
        %v1944 = vsub.f32 0.0, %v1894
        %v1945 = vsub.f32 0.0, %v1895
        %v1946 = vsub.f32 0.0, %v1896
        %v1947 = vsub.f32 0.0, %v1897
        %v1948 = vsub.f32 0.0, %v1898
        %v1949 = vsub.f32 0.0, %v1899
        %v1950 = vsub.f32 0.0, %v1900
        %v1951 = vsub.f32 0.0, %v1901
        %v1952 = vsub.f32 0.0, %v1902
        %v1953 = vsel %vm1903, %v1878, %v1928
        %v1954 = vsel %vm1904, %v1879, %v1929
        %v1955 = vsel %vm1905, %v1880, %v1930
        %v1956 = vsel %vm1906, %v1881, %v1931
        %v1957 = vsel %vm1907, %v1882, %v1932
        %v1958 = vsel %vm1908, %v1883, %v1933
        %v1959 = vsel %vm1909, %v1884, %v1934
        %v1960 = vsel %vm1910, %v1885, %v1935
        %v1961 = vsel %vm1911, %v1886, %v1936
        %v1962 = vsel %vm1912, %v1887, %v1937
        %v1963 = vsel %vm1913, %v1888, %v1938
        %v1964 = vsel %vm1914, %v1889, %v1939
        %v1965 = vsel %vm1915, %v1890, %v1940
        %v1966 = vsel %vm1916, %v1891, %v1941
        %v1967 = vsel %vm1917, %v1892, %v1942
        %v1968 = vsel %vm1918, %v1893, %v1943
        %v1969 = vsel %vm1919, %v1894, %v1944
        %v1970 = vsel %vm1920, %v1895, %v1945
        %v1971 = vsel %vm1921, %v1896, %v1946
        %v1972 = vsel %vm1922, %v1897, %v1947
        %v1973 = vsel %vm1923, %v1898, %v1948
        %v1974 = vsel %vm1924, %v1899, %v1949
        %v1975 = vsel %vm1925, %v1900, %v1950
        %v1976 = vsel %vm1926, %v1901, %v1951
        %v1977 = vsel %vm1927, %v1902, %v1952
        %v1978 = vadd.f32 %v1953, 1.0
        %v1979 = vadd.f32 %v1954, 1.0
        %v1980 = vadd.f32 %v1955, 1.0
        %v1981 = vadd.f32 %v1956, 1.0
        %v1982 = vadd.f32 %v1957, 1.0
        %v1983 = vadd.f32 %v1958, 1.0
        %v1984 = vadd.f32 %v1959, 1.0
        %v1985 = vadd.f32 %v1960, 1.0
        %v1986 = vadd.f32 %v1961, 1.0
        %v1987 = vadd.f32 %v1962, 1.0
        %v1988 = vadd.f32 %v1963, 1.0
        %v1989 = vadd.f32 %v1964, 1.0
        %v1990 = vadd.f32 %v1965, 1.0
        %v1991 = vadd.f32 %v1966, 1.0
        %v1992 = vadd.f32 %v1967, 1.0
        %v1993 = vadd.f32 %v1968, 1.0
        %v1994 = vadd.f32 %v1969, 1.0
        %v1995 = vadd.f32 %v1970, 1.0
        %v1996 = vadd.f32 %v1971, 1.0
        %v1997 = vadd.f32 %v1972, 1.0
        %v1998 = vadd.f32 %v1973, 1.0
        %v1999 = vadd.f32 %v1974, 1.0
        %v2000 = vadd.f32 %v1975, 1.0
        %v2001 = vadd.f32 %v1976, 1.0
        %v2002 = vadd.f32 %v1977, 1.0
        %v2003 = vmul.f32 %v1978, 0.5
        %v2004 = vmul.f32 %v1979, 0.5
        %v2005 = vmul.f32 %v1980, 0.5
        %v2006 = vmul.f32 %v1981, 0.5
        %v2007 = vmul.f32 %v1982, 0.5
        %v2008 = vmul.f32 %v1983, 0.5
        %v2009 = vmul.f32 %v1984, 0.5
        %v2010 = vmul.f32 %v1985, 0.5
        %v2011 = vmul.f32 %v1986, 0.5
        %v2012 = vmul.f32 %v1987, 0.5
        %v2013 = vmul.f32 %v1988, 0.5
        %v2014 = vmul.f32 %v1989, 0.5
        %v2015 = vmul.f32 %v1990, 0.5
        %v2016 = vmul.f32 %v1991, 0.5
        %v2017 = vmul.f32 %v1992, 0.5
        %v2018 = vmul.f32 %v1993, 0.5
        %v2019 = vmul.f32 %v1994, 0.5
        %v2020 = vmul.f32 %v1995, 0.5
        %v2021 = vmul.f32 %v1996, 0.5
        %v2022 = vmul.f32 %v1997, 0.5
        %v2023 = vmul.f32 %v1998, 0.5
        %v2024 = vmul.f32 %v1999, 0.5
        %v2025 = vmul.f32 %v2000, 0.5
        %v2026 = vmul.f32 %v2001, 0.5
        %v2027 = vmul.f32 %v2002, 0.5
        %v2028 = vmul.f32 %v1303, -0.5
        %v2029 = vmul.f32 %v1304, -0.5
        %v2030 = vmul.f32 %v1305, -0.5
        %v2031 = vmul.f32 %v1306, -0.5
        %v2032 = vmul.f32 %v1307, -0.5
        %v2033 = vmul.f32 %v1308, -0.5
        %v2034 = vmul.f32 %v1309, -0.5
        %v2035 = vmul.f32 %v1310, -0.5
        %v2036 = vmul.f32 %v1311, -0.5
        %v2037 = vmul.f32 %v1312, -0.5
        %v2038 = vmul.f32 %v1313, -0.5
        %v2039 = vmul.f32 %v1314, -0.5
        %v2040 = vmul.f32 %v1315, -0.5
        %v2041 = vmul.f32 %v1316, -0.5
        %v2042 = vmul.f32 %v1317, -0.5
        %v2043 = vmul.f32 %v1318, -0.5
        %v2044 = vmul.f32 %v1319, -0.5
        %v2045 = vmul.f32 %v1320, -0.5
        %v2046 = vmul.f32 %v1321, -0.5
        %v2047 = vmul.f32 %v1322, -0.5
        %v2048 = vmul.f32 %v1323, -0.5
        %v2049 = vmul.f32 %v1324, -0.5
        %v2050 = vmul.f32 %v1325, -0.5
        %v2051 = vmul.f32 %v1326, -0.5
        %v2052 = vmul.f32 %v1327, -0.5
        %v2053 = vmul.f32 %v2028, %v1303
        %v2054 = vmul.f32 %v2029, %v1304
        %v2055 = vmul.f32 %v2030, %v1305
        %v2056 = vmul.f32 %v2031, %v1306
        %v2057 = vmul.f32 %v2032, %v1307
        %v2058 = vmul.f32 %v2033, %v1308
        %v2059 = vmul.f32 %v2034, %v1309
        %v2060 = vmul.f32 %v2035, %v1310
        %v2061 = vmul.f32 %v2036, %v1311
        %v2062 = vmul.f32 %v2037, %v1312
        %v2063 = vmul.f32 %v2038, %v1313
        %v2064 = vmul.f32 %v2039, %v1314
        %v2065 = vmul.f32 %v2040, %v1315
        %v2066 = vmul.f32 %v2041, %v1316
        %v2067 = vmul.f32 %v2042, %v1317
        %v2068 = vmul.f32 %v2043, %v1318
        %v2069 = vmul.f32 %v2044, %v1319
        %v2070 = vmul.f32 %v2045, %v1320
        %v2071 = vmul.f32 %v2046, %v1321
        %v2072 = vmul.f32 %v2047, %v1322
        %v2073 = vmul.f32 %v2048, %v1323
        %v2074 = vmul.f32 %v2049, %v1324
        %v2075 = vmul.f32 %v2050, %v1325
        %v2076 = vmul.f32 %v2051, %v1326
        %v2077 = vmul.f32 %v2052, %v1327
        %v2078 = vmul.f32 %v2053, 1.442695
        %v2079 = vpow.pop %v2078
        %v2080 = vmul.f32 %v2054, 1.442695
        %v2081 = vpow.pop %v2080
        %v2082 = vmul.f32 %v2055, 1.442695
        %v2083 = vpow.pop %v2082
        %v2084 = vmul.f32 %v2056, 1.442695
        %v2085 = vpow.pop %v2084
        %v2086 = vmul.f32 %v2057, 1.442695
        %v2087 = vpow.pop %v2086
        %v2088 = vmul.f32 %v2058, 1.442695
        %v2089 = vpow.pop %v2088
        %v2090 = vmul.f32 %v2059, 1.442695
        %v2091 = vpow.pop %v2090
        %v2092 = vmul.f32 %v2060, 1.442695
        %v2093 = vpow.pop %v2092
        %v2094 = vmul.f32 %v2061, 1.442695
        %v2095 = vpow.pop %v2094
        %v2096 = vmul.f32 %v2062, 1.442695
        %v2097 = vpow.pop %v2096
        %v2098 = vmul.f32 %v2063, 1.442695
        %v2099 = vpow.pop %v2098
        %v2100 = vmul.f32 %v2064, 1.442695
        %v2101 = vpow.pop %v2100
        %v2102 = vmul.f32 %v2065, 1.442695
        %v2103 = vpow.pop %v2102
        %v2104 = vmul.f32 %v2066, 1.442695
        %v2105 = vpow.pop %v2104
        %v2106 = vmul.f32 %v2067, 1.442695
        %v2107 = vpow.pop %v2106
        %v2108 = vmul.f32 %v2068, 1.442695
        %v2109 = vpow.pop %v2108
        %v2110 = vmul.f32 %v2069, 1.442695
        %v2111 = vpow.pop %v2110
        %v2112 = vmul.f32 %v2070, 1.442695
        %v2113 = vpow.pop %v2112
        %v2114 = vmul.f32 %v2071, 1.442695
        %v2115 = vpow.pop %v2114
        %v2116 = vmul.f32 %v2072, 1.442695
        %v2117 = vpow.pop %v2116
        %v2118 = vmul.f32 %v2073, 1.442695
        %v2119 = vpow.pop %v2118
        %v2120 = vmul.f32 %v2074, 1.442695
        %v2121 = vpow.pop %v2120
        %v2122 = vmul.f32 %v2075, 1.442695
        %v2123 = vpow.pop %v2122
        %v2124 = vmul.f32 %v2076, 1.442695
        %v2125 = vpow.pop %v2124
        %v2126 = vmul.f32 %v2077, 1.442695
        %v2127 = vpow.pop %v2126
        %v2128 = vmul.f32 %v2079, 0.3989423
        %v2129 = vmul.f32 %v2081, 0.3989423
        %v2130 = vmul.f32 %v2083, 0.3989423
        %v2131 = vmul.f32 %v2085, 0.3989423
        %v2132 = vmul.f32 %v2087, 0.3989423
        %v2133 = vmul.f32 %v2089, 0.3989423
        %v2134 = vmul.f32 %v2091, 0.3989423
        %v2135 = vmul.f32 %v2093, 0.3989423
        %v2136 = vmul.f32 %v2095, 0.3989423
        %v2137 = vmul.f32 %v2097, 0.3989423
        %v2138 = vmul.f32 %v2099, 0.3989423
        %v2139 = vmul.f32 %v2101, 0.3989423
        %v2140 = vmul.f32 %v2103, 0.3989423
        %v2141 = vmul.f32 %v2105, 0.3989423
        %v2142 = vmul.f32 %v2107, 0.3989423
        %v2143 = vmul.f32 %v2109, 0.3989423
        %v2144 = vmul.f32 %v2111, 0.3989423
        %v2145 = vmul.f32 %v2113, 0.3989423
        %v2146 = vmul.f32 %v2115, 0.3989423
        %v2147 = vmul.f32 %v2117, 0.3989423
        %v2148 = vmul.f32 %v2119, 0.3989423
        %v2149 = vmul.f32 %v2121, 0.3989423
        %v2150 = vmul.f32 %v2123, 0.3989423
        %v2151 = vmul.f32 %v2125, 0.3989423
        %v2152 = vmul.f32 %v2127, 0.3989423
        %v2153 = vmul.f32 %v565, %v2003
        %v2154 = vmul.f32 %v567, %v2004
        %v2155 = vmul.f32 %v570, %v2005
        %v2156 = vmul.f32 %v572, %v2006
        %v2157 = vmul.f32 %v575, %v2007
        %v2158 = vmul.f32 %v577, %v2008
        %v2159 = vmul.f32 %v580, %v2009
        %v2160 = vmul.f32 %v582, %v2010
        %v2161 = vmul.f32 %v585, %v2011
        %v2162 = vmul.f32 %v587, %v2012
        %v2163 = vmul.f32 %v590, %v2013
        %v2164 = vmul.f32 %v592, %v2014
        %v2165 = vmul.f32 %v595, %v2015
        %v2166 = vmul.f32 %v597, %v2016
        %v2167 = vmul.f32 %v600, %v2017
        %v2168 = vmul.f32 %v602, %v2018
        %v2169 = vmul.f32 %v605, %v2019
        %v2170 = vmul.f32 %v607, %v2020
        %v2171 = vmul.f32 %v610, %v2021
        %v2172 = vmul.f32 %v612, %v2022
        %v2173 = vmul.f32 %v615, %v2023
        %v2174 = vmul.f32 %v617, %v2024
        %v2175 = vmul.f32 %v620, %v2025
        %v2176 = vmul.f32 %v622, %v2026
        %v2177 = vmul.f32 %v625, %v2027
        %v2178 = vmul.f32 %v1278, %v2128
        %v2179 = vmul.f32 %v1279, %v2129
        %v2180 = vmul.f32 %v1280, %v2130
        %v2181 = vmul.f32 %v1281, %v2131
        %v2182 = vmul.f32 %v1282, %v2132
        %v2183 = vmul.f32 %v1283, %v2133
        %v2184 = vmul.f32 %v1284, %v2134
        %v2185 = vmul.f32 %v1285, %v2135
        %v2186 = vmul.f32 %v1286, %v2136
        %v2187 = vmul.f32 %v1287, %v2137
        %v2188 = vmul.f32 %v1288, %v2138
        %v2189 = vmul.f32 %v1289, %v2139
        %v2190 = vmul.f32 %v1290, %v2140
        %v2191 = vmul.f32 %v1291, %v2141
        %v2192 = vmul.f32 %v1292, %v2142
        %v2193 = vmul.f32 %v1293, %v2143
        %v2194 = vmul.f32 %v1294, %v2144
        %v2195 = vmul.f32 %v1295, %v2145
        %v2196 = vmul.f32 %v1296, %v2146
        %v2197 = vmul.f32 %v1297, %v2147
        %v2198 = vmul.f32 %v1298, %v2148
        %v2199 = vmul.f32 %v1299, %v2149
        %v2200 = vmul.f32 %v1300, %v2150
        %v2201 = vmul.f32 %v1301, %v2151
        %v2202 = vmul.f32 %v1302, %v2152
        %v2203 = vadd.f32 %v2153, %v2178
        %v2204 = vadd.f32 %v2154, %v2179
        %v2205 = vadd.f32 %v2155, %v2180
        %v2206 = vadd.f32 %v2156, %v2181
        %v2207 = vadd.f32 %v2157, %v2182
        %v2208 = vadd.f32 %v2158, %v2183
        %v2209 = vadd.f32 %v2159, %v2184
        %v2210 = vadd.f32 %v2160, %v2185
        %v2211 = vadd.f32 %v2161, %v2186
        %v2212 = vadd.f32 %v2162, %v2187
        %v2213 = vadd.f32 %v2163, %v2188
        %v2214 = vadd.f32 %v2164, %v2189
        %v2215 = vadd.f32 %v2165, %v2190
        %v2216 = vadd.f32 %v2166, %v2191
        %v2217 = vadd.f32 %v2167, %v2192
        %v2218 = vadd.f32 %v2168, %v2193
        %v2219 = vadd.f32 %v2169, %v2194
        %v2220 = vadd.f32 %v2170, %v2195
        %v2221 = vadd.f32 %v2171, %v2196
        %v2222 = vadd.f32 %v2172, %v2197
        %v2223 = vadd.f32 %v2173, %v2198
        %v2224 = vadd.f32 %v2174, %v2199
        %v2225 = vadd.f32 %v2175, %v2200
        %v2226 = vadd.f32 %v2176, %v2201
        %v2227 = vadd.f32 %v2177, %v2202
        %v2228 = vmul.f32 %v565, %v565
        %v2229 = vmul.f32 %v567, %v567
        %v2230 = vmul.f32 %v570, %v570
        %v2231 = vmul.f32 %v572, %v572
        %v2232 = vmul.f32 %v575, %v575
        %v2233 = vmul.f32 %v577, %v577
        %v2234 = vmul.f32 %v580, %v580
        %v2235 = vmul.f32 %v582, %v582
        %v2236 = vmul.f32 %v585, %v585
        %v2237 = vmul.f32 %v587, %v587
        %v2238 = vmul.f32 %v590, %v590
        %v2239 = vmul.f32 %v592, %v592
        %v2240 = vmul.f32 %v595, %v595
        %v2241 = vmul.f32 %v597, %v597
        %v2242 = vmul.f32 %v600, %v600
        %v2243 = vmul.f32 %v602, %v602
        %v2244 = vmul.f32 %v605, %v605
        %v2245 = vmul.f32 %v607, %v607
        %v2246 = vmul.f32 %v610, %v610
        %v2247 = vmul.f32 %v612, %v612
        %v2248 = vmul.f32 %v615, %v615
        %v2249 = vmul.f32 %v617, %v617
        %v2250 = vmul.f32 %v620, %v620
        %v2251 = vmul.f32 %v622, %v622
        %v2252 = vmul.f32 %v625, %v625
        %v2253 = vadd.f32 %v965, %v2228
        %v2254 = vadd.f32 %v967, %v2229
        %v2255 = vadd.f32 %v970, %v2230
        %v2256 = vadd.f32 %v972, %v2231
        %v2257 = vadd.f32 %v975, %v2232
        %v2258 = vadd.f32 %v977, %v2233
        %v2259 = vadd.f32 %v980, %v2234
        %v2260 = vadd.f32 %v982, %v2235
        %v2261 = vadd.f32 %v985, %v2236
        %v2262 = vadd.f32 %v987, %v2237
        %v2263 = vadd.f32 %v990, %v2238
        %v2264 = vadd.f32 %v992, %v2239
        %v2265 = vadd.f32 %v995, %v2240
        %v2266 = vadd.f32 %v997, %v2241
        %v2267 = vadd.f32 %v1000, %v2242
        %v2268 = vadd.f32 %v1002, %v2243
        %v2269 = vadd.f32 %v1005, %v2244
        %v2270 = vadd.f32 %v1007, %v2245
        %v2271 = vadd.f32 %v1010, %v2246
        %v2272 = vadd.f32 %v1012, %v2247
        %v2273 = vadd.f32 %v1015, %v2248
        %v2274 = vadd.f32 %v1017, %v2249
        %v2275 = vadd.f32 %v1020, %v2250
        %v2276 = vadd.f32 %v1022, %v2251
        %v2277 = vadd.f32 %v1025, %v2252
        %v2278 = vmul.f32 %v2253, %v2003
        %v2279 = vmul.f32 %v2254, %v2004
        %v2280 = vmul.f32 %v2255, %v2005
        %v2281 = vmul.f32 %v2256, %v2006
        %v2282 = vmul.f32 %v2257, %v2007
        %v2283 = vmul.f32 %v2258, %v2008
        %v2284 = vmul.f32 %v2259, %v2009
        %v2285 = vmul.f32 %v2260, %v2010
        %v2286 = vmul.f32 %v2261, %v2011
        %v2287 = vmul.f32 %v2262, %v2012
        %v2288 = vmul.f32 %v2263, %v2013
        %v2289 = vmul.f32 %v2264, %v2014
        %v2290 = vmul.f32 %v2265, %v2015
        %v2291 = vmul.f32 %v2266, %v2016
        %v2292 = vmul.f32 %v2267, %v2017
        %v2293 = vmul.f32 %v2268, %v2018
        %v2294 = vmul.f32 %v2269, %v2019
        %v2295 = vmul.f32 %v2270, %v2020
        %v2296 = vmul.f32 %v2271, %v2021
        %v2297 = vmul.f32 %v2272, %v2022
        %v2298 = vmul.f32 %v2273, %v2023
        %v2299 = vmul.f32 %v2274, %v2024
        %v2300 = vmul.f32 %v2275, %v2025
        %v2301 = vmul.f32 %v2276, %v2026
        %v2302 = vmul.f32 %v2277, %v2027
        %v2303 = vmul.f32 %v565, %v1278
        %v2304 = vmul.f32 %v567, %v1279
        %v2305 = vmul.f32 %v570, %v1280
        %v2306 = vmul.f32 %v572, %v1281
        %v2307 = vmul.f32 %v575, %v1282
        %v2308 = vmul.f32 %v577, %v1283
        %v2309 = vmul.f32 %v580, %v1284
        %v2310 = vmul.f32 %v582, %v1285
        %v2311 = vmul.f32 %v585, %v1286
        %v2312 = vmul.f32 %v587, %v1287
        %v2313 = vmul.f32 %v590, %v1288
        %v2314 = vmul.f32 %v592, %v1289
        %v2315 = vmul.f32 %v595, %v1290
        %v2316 = vmul.f32 %v597, %v1291
        %v2317 = vmul.f32 %v600, %v1292
        %v2318 = vmul.f32 %v602, %v1293
        %v2319 = vmul.f32 %v605, %v1294
        %v2320 = vmul.f32 %v607, %v1295
        %v2321 = vmul.f32 %v610, %v1296
        %v2322 = vmul.f32 %v612, %v1297
        %v2323 = vmul.f32 %v615, %v1298
        %v2324 = vmul.f32 %v617, %v1299
        %v2325 = vmul.f32 %v620, %v1300
        %v2326 = vmul.f32 %v622, %v1301
        %v2327 = vmul.f32 %v625, %v1302
        %v2328 = vmul.f32 %v2303, %v2128
        %v2329 = vmul.f32 %v2304, %v2129
        %v2330 = vmul.f32 %v2305, %v2130
        %v2331 = vmul.f32 %v2306, %v2131
        %v2332 = vmul.f32 %v2307, %v2132
        %v2333 = vmul.f32 %v2308, %v2133
        %v2334 = vmul.f32 %v2309, %v2134
        %v2335 = vmul.f32 %v2310, %v2135
        %v2336 = vmul.f32 %v2311, %v2136
        %v2337 = vmul.f32 %v2312, %v2137
        %v2338 = vmul.f32 %v2313, %v2138
        %v2339 = vmul.f32 %v2314, %v2139
        %v2340 = vmul.f32 %v2315, %v2140
        %v2341 = vmul.f32 %v2316, %v2141
        %v2342 = vmul.f32 %v2317, %v2142
        %v2343 = vmul.f32 %v2318, %v2143
        %v2344 = vmul.f32 %v2319, %v2144
        %v2345 = vmul.f32 %v2320, %v2145
        %v2346 = vmul.f32 %v2321, %v2146
        %v2347 = vmul.f32 %v2322, %v2147
        %v2348 = vmul.f32 %v2323, %v2148
        %v2349 = vmul.f32 %v2324, %v2149
        %v2350 = vmul.f32 %v2325, %v2150
        %v2351 = vmul.f32 %v2326, %v2151
        %v2352 = vmul.f32 %v2327, %v2152
        %v2353 = vadd.f32 %v2278, %v2328
        %v2354 = vadd.f32 %v2279, %v2329
        %v2355 = vadd.f32 %v2280, %v2330
        %v2356 = vadd.f32 %v2281, %v2331
        %v2357 = vadd.f32 %v2282, %v2332
        %v2358 = vadd.f32 %v2283, %v2333
        %v2359 = vadd.f32 %v2284, %v2334
        %v2360 = vadd.f32 %v2285, %v2335
        %v2361 = vadd.f32 %v2286, %v2336
        %v2362 = vadd.f32 %v2287, %v2337
        %v2363 = vadd.f32 %v2288, %v2338
        %v2364 = vadd.f32 %v2289, %v2339
        %v2365 = vadd.f32 %v2290, %v2340
        %v2366 = vadd.f32 %v2291, %v2341
        %v2367 = vadd.f32 %v2292, %v2342
        %v2368 = vadd.f32 %v2293, %v2343
        %v2369 = vadd.f32 %v2294, %v2344
        %v2370 = vadd.f32 %v2295, %v2345
        %v2371 = vadd.f32 %v2296, %v2346
        %v2372 = vadd.f32 %v2297, %v2347
        %v2373 = vadd.f32 %v2298, %v2348
        %v2374 = vadd.f32 %v2299, %v2349
        %v2375 = vadd.f32 %v2300, %v2350
        %v2376 = vadd.f32 %v2301, %v2351
        %v2377 = vadd.f32 %v2302, %v2352
        %v2378 = vmul.f32 %v2203, %v2203
        %v2379 = vmul.f32 %v2204, %v2204
        %v2380 = vmul.f32 %v2205, %v2205
        %v2381 = vmul.f32 %v2206, %v2206
        %v2382 = vmul.f32 %v2207, %v2207
        %v2383 = vmul.f32 %v2208, %v2208
        %v2384 = vmul.f32 %v2209, %v2209
        %v2385 = vmul.f32 %v2210, %v2210
        %v2386 = vmul.f32 %v2211, %v2211
        %v2387 = vmul.f32 %v2212, %v2212
        %v2388 = vmul.f32 %v2213, %v2213
        %v2389 = vmul.f32 %v2214, %v2214
        %v2390 = vmul.f32 %v2215, %v2215
        %v2391 = vmul.f32 %v2216, %v2216
        %v2392 = vmul.f32 %v2217, %v2217
        %v2393 = vmul.f32 %v2218, %v2218
        %v2394 = vmul.f32 %v2219, %v2219
        %v2395 = vmul.f32 %v2220, %v2220
        %v2396 = vmul.f32 %v2221, %v2221
        %v2397 = vmul.f32 %v2222, %v2222
        %v2398 = vmul.f32 %v2223, %v2223
        %v2399 = vmul.f32 %v2224, %v2224
        %v2400 = vmul.f32 %v2225, %v2225
        %v2401 = vmul.f32 %v2226, %v2226
        %v2402 = vmul.f32 %v2227, %v2227
        %v2403 = vsub.f32 %v2353, %v2378
        %v2404 = vsub.f32 %v2354, %v2379
        %v2405 = vsub.f32 %v2355, %v2380
        %v2406 = vsub.f32 %v2356, %v2381
        %v2407 = vsub.f32 %v2357, %v2382
        %v2408 = vsub.f32 %v2358, %v2383
        %v2409 = vsub.f32 %v2359, %v2384
        %v2410 = vsub.f32 %v2360, %v2385
        %v2411 = vsub.f32 %v2361, %v2386
        %v2412 = vsub.f32 %v2362, %v2387
        %v2413 = vsub.f32 %v2363, %v2388
        %v2414 = vsub.f32 %v2364, %v2389
        %v2415 = vsub.f32 %v2365, %v2390
        %v2416 = vsub.f32 %v2366, %v2391
        %v2417 = vsub.f32 %v2367, %v2392
        %v2418 = vsub.f32 %v2368, %v2393
        %v2419 = vsub.f32 %v2369, %v2394
        %v2420 = vsub.f32 %v2370, %v2395
        %v2421 = vsub.f32 %v2371, %v2396
        %v2422 = vsub.f32 %v2372, %v2397
        %v2423 = vsub.f32 %v2373, %v2398
        %v2424 = vsub.f32 %v2374, %v2399
        %v2425 = vsub.f32 %v2375, %v2400
        %v2426 = vsub.f32 %v2376, %v2401
        %v2427 = vsub.f32 %v2377, %v2402
        %v2428 = vmax.f32 %v2403, 1e-08
        %v2429 = vmax.f32 %v2404, 1e-08
        %v2430 = vmax.f32 %v2405, 1e-08
        %v2431 = vmax.f32 %v2406, 1e-08
        %v2432 = vmax.f32 %v2407, 1e-08
        %v2433 = vmax.f32 %v2408, 1e-08
        %v2434 = vmax.f32 %v2409, 1e-08
        %v2435 = vmax.f32 %v2410, 1e-08
        %v2436 = vmax.f32 %v2411, 1e-08
        %v2437 = vmax.f32 %v2412, 1e-08
        %v2438 = vmax.f32 %v2413, 1e-08
        %v2439 = vmax.f32 %v2414, 1e-08
        %v2440 = vmax.f32 %v2415, 1e-08
        %v2441 = vmax.f32 %v2416, 1e-08
        %v2442 = vmax.f32 %v2417, 1e-08
        %v2443 = vmax.f32 %v2418, 1e-08
        %v2444 = vmax.f32 %v2419, 1e-08
        %v2445 = vmax.f32 %v2420, 1e-08
        %v2446 = vmax.f32 %v2421, 1e-08
        %v2447 = vmax.f32 %v2422, 1e-08
        %v2448 = vmax.f32 %v2423, 1e-08
        %v2449 = vmax.f32 %v2424, 1e-08
        %v2450 = vmax.f32 %v2425, 1e-08
        %v2451 = vmax.f32 %v2426, 1e-08
        %v2452 = vmax.f32 %v2427, 1e-08
        %2453 = vst [vmem:[%s189] sm:$0xff] %v2203
        %2454 = vst [vmem:[%s189 + $0x8] sm:$0xff] %v2204
        %2455 = vst [vmem:[%s189 + $0x10] sm:$0xff] %v2205
        %2456 = vst [vmem:[%s189 + $0x18] sm:$0xff] %v2206
        %2457 = vst [vmem:[%s189 + $0x20] sm:$0xff] %v2207
        %2458 = vst [vmem:[%s189 + $0x28] sm:$0xff] %v2208
        %2459 = vst [vmem:[%s189 + $0x30] sm:$0xff] %v2209
        %2460 = vst [vmem:[%s189 + $0x38] sm:$0xff] %v2210
        %2461 = vst [vmem:[%s189 + $0x40] sm:$0xff] %v2211
        %2462 = vst [vmem:[%s189 + $0x48] sm:$0xff] %v2212
        %2463 = vst [vmem:[%s189 + $0x50] sm:$0xff] %v2213
        %2464 = vst [vmem:[%s189 + $0x58] sm:$0xff] %v2214
        %2465 = vst [vmem:[%s189 + $0x60] sm:$0xff] %v2215
        %2466 = vst [vmem:[%s189 + $0x68] sm:$0xff] %v2216
        %2467 = vst [vmem:[%s189 + $0x70] sm:$0xff] %v2217
        %2468 = vst [vmem:[%s189 + $0x78] sm:$0xff] %v2218
        %2469 = vst [vmem:[%s189 + $0x80] sm:$0xff] %v2219
        %2470 = vst [vmem:[%s189 + $0x88] sm:$0xff] %v2220
        %2471 = vst [vmem:[%s189 + $0x90] sm:$0xff] %v2221
        %2472 = vst [vmem:[%s189 + $0x98] sm:$0xff] %v2222
        %2473 = vst [vmem:[%s189 + $0xa0] sm:$0xff] %v2223
        %2474 = vst [vmem:[%s189 + $0xa8] sm:$0xff] %v2224
        %2475 = vst [vmem:[%s189 + $0xb0] sm:$0xff] %v2225
        %2476 = vst [vmem:[%s189 + $0xb8] sm:$0xff] %v2226
        %2477 = vst [vmem:[%s189 + $0xc0] sm:$0xff] %v2227
        %s2478 = scalar_lea.vmem %s189, 200 [#allocation2]
        %2479 = vst [vmem:[%s2478] sm:$0xff] %v2428
        %2480 = vst [vmem:[%s2478 + $0x8] sm:$0xff] %v2429
        %2481 = vst [vmem:[%s2478 + $0x10] sm:$0xff] %v2430
        %2482 = vst [vmem:[%s2478 + $0x18] sm:$0xff] %v2431
        %2483 = vst [vmem:[%s2478 + $0x20] sm:$0xff] %v2432
        %2484 = vst [vmem:[%s2478 + $0x28] sm:$0xff] %v2433
        %2485 = vst [vmem:[%s2478 + $0x30] sm:$0xff] %v2434
        %2486 = vst [vmem:[%s2478 + $0x38] sm:$0xff] %v2435
        %2487 = vst [vmem:[%s2478 + $0x40] sm:$0xff] %v2436
        %2488 = vst [vmem:[%s2478 + $0x48] sm:$0xff] %v2437
        %2489 = vst [vmem:[%s2478 + $0x50] sm:$0xff] %v2438
        %2490 = vst [vmem:[%s2478 + $0x58] sm:$0xff] %v2439
        %2491 = vst [vmem:[%s2478 + $0x60] sm:$0xff] %v2440
        %2492 = vst [vmem:[%s2478 + $0x68] sm:$0xff] %v2441
        %2493 = vst [vmem:[%s2478 + $0x70] sm:$0xff] %v2442
        %2494 = vst [vmem:[%s2478 + $0x78] sm:$0xff] %v2443
        %2495 = vst [vmem:[%s2478 + $0x80] sm:$0xff] %v2444
        %2496 = vst [vmem:[%s2478 + $0x88] sm:$0xff] %v2445
        %2497 = vst [vmem:[%s2478 + $0x90] sm:$0xff] %v2446
        %2498 = vst [vmem:[%s2478 + $0x98] sm:$0xff] %v2447
        %2499 = vst [vmem:[%s2478 + $0xa0] sm:$0xff] %v2448
        %2500 = vst [vmem:[%s2478 + $0xa8] sm:$0xff] %v2449
        %2501 = vst [vmem:[%s2478 + $0xb0] sm:$0xff] %v2450
        %2502 = vst [vmem:[%s2478 + $0xb8] sm:$0xff] %v2451
        %2503 = vst [vmem:[%s2478 + $0xc0] sm:$0xff] %v2452
        %s2504 = sand.u32 %s112, 1
        %s2505 = sand.u32 %s112, 1
        %s2506 = smul.addr %s2505, 400
        %s2507 = scalar_lea.vmem [#allocation2], %s2506
        // Predicated region
        $region37: #{clt_conv_forward.1} parent=35 // pred_check
          %p2508 = pneg %p122
        $region38: #{clt_conv_forward.1} parent=35 // pred_check_branch
          %2510 = sbr.rel (%p2508) target = $region40
        $region39: #{clt_conv_forward.1} parent=35 // pred_region
          %s2511 = smul.u32 25, %s15
          %s2512 = smul.addr %s2511, 8
          %s2513 = scalar_lea.vmem %s4, %s2512
          // Predicated region
          $region41: #{clt_conv_forward.1} parent=39 // pred_check
            _
          $region42: #{clt_conv_forward.1} parent=39 // pred_check_branch
            %2515 = sbr.rel (0) target = $region44
          $region43: #{clt_conv_forward.1} parent=39 // pred_region
            // Predicated region
            $region45: #{clt_conv_forward.1} parent=43 // pred_check
              _
            $region46: #{clt_conv_forward.1} parent=43 // pred_check_branch
              %2517 = sbr.rel (0) target = $region48
            $region47: #{clt_conv_forward.1} parent=43 // pred_region
              // Predicated region
              $region60: #{clt_conv_forward.1} parent=47 // pred_check
                _
              $region61: #{clt_conv_forward.1} parent=47 // pred_check_branch
                %2631 = sbr.rel (0) target = $region63
              $region62: #{clt_conv_forward.1} parent=47 // pred_region
                loop: start=0, step=1, limit=1
                $region64: #{clt_conv_forward.1} parent=62 // loop_pre_header
                  _
                $region65: #{clt_conv_forward.1} parent=62 // loop_header
                  %s2633 = sphi 0, %s2637
                  %p2634 = scmp.ge.s32.totalorder %s2633, 1
                  %s2638 = sphi %s2507, %s2507
                  %s2639 = sphi %s2513, %s2513
                $region66: #{clt_conv_forward.1} parent=62 // loop_header_branch
                  %2636 = sbr.rel (%p2634) target = $region70
                $region67: #{clt_conv_forward.1} parent=62 // loop_body
                  %v2640 = vld [vmem:[%s2638] sm:$0xff]
                  %2641 = vst [vmem:[%s2639] sm:$0xff] %v2640
                  %v2642 = vld [vmem:[%s2638 + $0x8] sm:$0xff]
                  %2643 = vst [vmem:[%s2639 + $0x8] sm:$0xff] %v2642
                  %v2644 = vld [vmem:[%s2638 + $0x10] sm:$0xff]
                  %2645 = vst [vmem:[%s2639 + $0x10] sm:$0xff] %v2644
                  %v2646 = vld [vmem:[%s2638 + $0x18] sm:$0xff]
                  %2647 = vst [vmem:[%s2639 + $0x18] sm:$0xff] %v2646
                  %v2648 = vld [vmem:[%s2638 + $0x20] sm:$0xff]
                  %2649 = vst [vmem:[%s2639 + $0x20] sm:$0xff] %v2648
                  %v2650 = vld [vmem:[%s2638 + $0x28] sm:$0xff]
                  %2651 = vst [vmem:[%s2639 + $0x28] sm:$0xff] %v2650
                  %v2652 = vld [vmem:[%s2638 + $0x30] sm:$0xff]
                  %2653 = vst [vmem:[%s2639 + $0x30] sm:$0xff] %v2652
                  %v2654 = vld [vmem:[%s2638 + $0x38] sm:$0xff]
                  %2655 = vst [vmem:[%s2639 + $0x38] sm:$0xff] %v2654
                  %v2656 = vld [vmem:[%s2638 + $0x40] sm:$0xff]
                  %2657 = vst [vmem:[%s2639 + $0x40] sm:$0xff] %v2656
                  %v2658 = vld [vmem:[%s2638 + $0x48] sm:$0xff]
                  %2659 = vst [vmem:[%s2639 + $0x48] sm:$0xff] %v2658
                  %v2660 = vld [vmem:[%s2638 + $0x50] sm:$0xff]
                  %2661 = vst [vmem:[%s2639 + $0x50] sm:$0xff] %v2660
                  %v2662 = vld [vmem:[%s2638 + $0x58] sm:$0xff]
                  %2663 = vst [vmem:[%s2639 + $0x58] sm:$0xff] %v2662
                  %v2664 = vld [vmem:[%s2638 + $0x60] sm:$0xff]
                  %2665 = vst [vmem:[%s2639 + $0x60] sm:$0xff] %v2664
                  %v2666 = vld [vmem:[%s2638 + $0x68] sm:$0xff]
                  %2667 = vst [vmem:[%s2639 + $0x68] sm:$0xff] %v2666
                  %v2668 = vld [vmem:[%s2638 + $0x70] sm:$0xff]
                  %2669 = vst [vmem:[%s2639 + $0x70] sm:$0xff] %v2668
                  %v2670 = vld [vmem:[%s2638 + $0x78] sm:$0xff]
                  %2671 = vst [vmem:[%s2639 + $0x78] sm:$0xff] %v2670
                  %v2672 = vld [vmem:[%s2638 + $0x80] sm:$0xff]
                  %2673 = vst [vmem:[%s2639 + $0x80] sm:$0xff] %v2672
                  %v2674 = vld [vmem:[%s2638 + $0x88] sm:$0xff]
                  %2675 = vst [vmem:[%s2639 + $0x88] sm:$0xff] %v2674
                  %v2676 = vld [vmem:[%s2638 + $0x90] sm:$0xff]
                  %2677 = vst [vmem:[%s2639 + $0x90] sm:$0xff] %v2676
                  %v2678 = vld [vmem:[%s2638 + $0x98] sm:$0xff]
                  %2679 = vst [vmem:[%s2639 + $0x98] sm:$0xff] %v2678
                  %v2680 = vld [vmem:[%s2638 + $0xa0] sm:$0xff]
                  %2681 = vst [vmem:[%s2639 + $0xa0] sm:$0xff] %v2680
                  %v2682 = vld [vmem:[%s2638 + $0xa8] sm:$0xff]
                  %2683 = vst [vmem:[%s2639 + $0xa8] sm:$0xff] %v2682
                  %v2684 = vld [vmem:[%s2638 + $0xb0] sm:$0xff]
                  %2685 = vst [vmem:[%s2639 + $0xb0] sm:$0xff] %v2684
                  %v2686 = vld [vmem:[%s2638 + $0xb8] sm:$0xff]
                  %2687 = vst [vmem:[%s2639 + $0xb8] sm:$0xff] %v2686
                  %v2688 = vld [vmem:[%s2638 + $0xc0] sm:$0xff]
                  %2689 = vst [vmem:[%s2639 + $0xc0] sm:$0xff] %v2688
                  %v2690 = vld [vmem:[%s2638 + $0xc8] sm:$0xff]
                  %2691 = vst [vmem:[%s2639 + $0x190] sm:$0xff] %v2690
                  %v2692 = vld [vmem:[%s2638 + $0xd0] sm:$0xff]
                  %2693 = vst [vmem:[%s2639 + $0x198] sm:$0xff] %v2692
                  %v2694 = vld [vmem:[%s2638 + $0xd8] sm:$0xff]
                  %2695 = vst [vmem:[%s2639 + $0x1a0] sm:$0xff] %v2694
                  %v2696 = vld [vmem:[%s2638 + $0xe0] sm:$0xff]
                  %2697 = vst [vmem:[%s2639 + $0x1a8] sm:$0xff] %v2696
                  %v2698 = vld [vmem:[%s2638 + $0xe8] sm:$0xff]
                  %2699 = vst [vmem:[%s2639 + $0x1b0] sm:$0xff] %v2698
                  %v2700 = vld [vmem:[%s2638 + $0xf0] sm:$0xff]
                  %2701 = vst [vmem:[%s2639 + $0x1b8] sm:$0xff] %v2700
                  %v2702 = vld [vmem:[%s2638 + $0xf8] sm:$0xff]
                  %2703 = vst [vmem:[%s2639 + $0x1c0] sm:$0xff] %v2702
                  %v2704 = vld [vmem:[%s2638 + $0x100] sm:$0xff]
                  %2705 = vst [vmem:[%s2639 + $0x1c8] sm:$0xff] %v2704
                  %v2706 = vld [vmem:[%s2638 + $0x108] sm:$0xff]
                  %2707 = vst [vmem:[%s2639 + $0x1d0] sm:$0xff] %v2706
                  %v2708 = vld [vmem:[%s2638 + $0x110] sm:$0xff]
                  %2709 = vst [vmem:[%s2639 + $0x1d8] sm:$0xff] %v2708
                  %v2710 = vld [vmem:[%s2638 + $0x118] sm:$0xff]
                  %2711 = vst [vmem:[%s2639 + $0x1e0] sm:$0xff] %v2710
                  %v2712 = vld [vmem:[%s2638 + $0x120] sm:$0xff]
                  %2713 = vst [vmem:[%s2639 + $0x1e8] sm:$0xff] %v2712
                  %v2714 = vld [vmem:[%s2638 + $0x128] sm:$0xff]
                  %2715 = vst [vmem:[%s2639 + $0x1f0] sm:$0xff] %v2714
                  %v2716 = vld [vmem:[%s2638 + $0x130] sm:$0xff]
                  %2717 = vst [vmem:[%s2639 + $0x1f8] sm:$0xff] %v2716
                  %v2718 = vld [vmem:[%s2638 + $0x138] sm:$0xff]
                  %2719 = vst [vmem:[%s2639 + $0x200] sm:$0xff] %v2718
                  %v2720 = vld [vmem:[%s2638 + $0x140] sm:$0xff]
                  %2721 = vst [vmem:[%s2639 + $0x208] sm:$0xff] %v2720
                  %v2722 = vld [vmem:[%s2638 + $0x148] sm:$0xff]
                  %2723 = vst [vmem:[%s2639 + $0x210] sm:$0xff] %v2722
                  %v2724 = vld [vmem:[%s2638 + $0x150] sm:$0xff]
                  %2725 = vst [vmem:[%s2639 + $0x218] sm:$0xff] %v2724
                  %v2726 = vld [vmem:[%s2638 + $0x158] sm:$0xff]
                  %2727 = vst [vmem:[%s2639 + $0x220] sm:$0xff] %v2726
                  %v2728 = vld [vmem:[%s2638 + $0x160] sm:$0xff]
                  %2729 = vst [vmem:[%s2639 + $0x228] sm:$0xff] %v2728
                  %v2730 = vld [vmem:[%s2638 + $0x168] sm:$0xff]
                  %2731 = vst [vmem:[%s2639 + $0x230] sm:$0xff] %v2730
                  %v2732 = vld [vmem:[%s2638 + $0x170] sm:$0xff]
                  %2733 = vst [vmem:[%s2639 + $0x238] sm:$0xff] %v2732
                  %v2734 = vld [vmem:[%s2638 + $0x178] sm:$0xff]
                  %2735 = vst [vmem:[%s2639 + $0x240] sm:$0xff] %v2734
                  %v2736 = vld [vmem:[%s2638 + $0x180] sm:$0xff]
                  %2737 = vst [vmem:[%s2639 + $0x248] sm:$0xff] %v2736
                  %v2738 = vld [vmem:[%s2638 + $0x188] sm:$0xff]
                  %2739 = vst [vmem:[%s2639 + $0x250] sm:$0xff] %v2738
                $region68: #{clt_conv_forward.1} parent=62 // loop_footer
                  %s2637 = sadd.s32 1, %s2633
                $region69: #{clt_conv_forward.1} parent=62 // loop_footer_branch
                  %2632 = sbr.rel target = $region65
                $region70: #{clt_conv_forward.1} parent=62 // loop_exit
                  _
              $region63: #{clt_conv_forward.1} parent=47 // pred_fallthru
                _
              // Predicated region
              $region71: #{clt_conv_forward.1} parent=47 // pred_check
                _
              $region72: #{clt_conv_forward.1} parent=47 // pred_check_branch
                %2741 = sbr.rel target = $region74
              $region73: #{clt_conv_forward.1} parent=47 // pred_region
                _
              $region74: #{clt_conv_forward.1} parent=47 // pred_fallthru
                _
            $region48: #{clt_conv_forward.1} parent=43 // pred_fallthru
              _
            // Predicated region
            $region49: #{clt_conv_forward.1} parent=43 // pred_check
              _
            $region50: #{clt_conv_forward.1} parent=43 // pred_check_branch
              %2519 = sbr.rel target = $region52
            $region51: #{clt_conv_forward.1} parent=43 // pred_region
              %s2521 = ssub.s32 256, 1
              loop: start=0, step=1, limit=1
              $region53: #{clt_conv_forward.1} parent=51 // loop_pre_header
                _
              $region54: #{clt_conv_forward.1} parent=51 // loop_header
                %s2523 = sphi 0, %s2527
                %p2524 = scmp.ge.s32.totalorder %s2523, 1
                %s2528 = sphi %s2507, %s2507
                %s2529 = sphi %s2513, %s2513
              $region55: #{clt_conv_forward.1} parent=51 // loop_header_branch
                %2526 = sbr.rel (%p2524) target = $region59
              $region56: #{clt_conv_forward.1} parent=51 // loop_body
                %v2530 = vld [vmem:[%s2528] sm:%s2521]
                %2531 = vst [vmem:[%s2529] sm:%s2521] %v2530
                %v2532 = vld [vmem:[%s2528 + $0x8] sm:%s2521]
                %2533 = vst [vmem:[%s2529 + $0x8] sm:%s2521] %v2532
                %v2534 = vld [vmem:[%s2528 + $0x10] sm:%s2521]
                %2535 = vst [vmem:[%s2529 + $0x10] sm:%s2521] %v2534
                %v2536 = vld [vmem:[%s2528 + $0x18] sm:%s2521]
                %2537 = vst [vmem:[%s2529 + $0x18] sm:%s2521] %v2536
                %v2538 = vld [vmem:[%s2528 + $0x20] sm:%s2521]
                %2539 = vst [vmem:[%s2529 + $0x20] sm:%s2521] %v2538
                %v2540 = vld [vmem:[%s2528 + $0x28] sm:%s2521]
                %2541 = vst [vmem:[%s2529 + $0x28] sm:%s2521] %v2540
                %v2542 = vld [vmem:[%s2528 + $0x30] sm:%s2521]
                %2543 = vst [vmem:[%s2529 + $0x30] sm:%s2521] %v2542
                %v2544 = vld [vmem:[%s2528 + $0x38] sm:%s2521]
                %2545 = vst [vmem:[%s2529 + $0x38] sm:%s2521] %v2544
                %v2546 = vld [vmem:[%s2528 + $0x40] sm:%s2521]
                %2547 = vst [vmem:[%s2529 + $0x40] sm:%s2521] %v2546
                %v2548 = vld [vmem:[%s2528 + $0x48] sm:%s2521]
                %2549 = vst [vmem:[%s2529 + $0x48] sm:%s2521] %v2548
                %v2550 = vld [vmem:[%s2528 + $0x50] sm:%s2521]
                %2551 = vst [vmem:[%s2529 + $0x50] sm:%s2521] %v2550
                %v2552 = vld [vmem:[%s2528 + $0x58] sm:%s2521]
                %2553 = vst [vmem:[%s2529 + $0x58] sm:%s2521] %v2552
                %v2554 = vld [vmem:[%s2528 + $0x60] sm:%s2521]
                %2555 = vst [vmem:[%s2529 + $0x60] sm:%s2521] %v2554
                %v2556 = vld [vmem:[%s2528 + $0x68] sm:%s2521]
                %2557 = vst [vmem:[%s2529 + $0x68] sm:%s2521] %v2556
                %v2558 = vld [vmem:[%s2528 + $0x70] sm:%s2521]
                %2559 = vst [vmem:[%s2529 + $0x70] sm:%s2521] %v2558
                %v2560 = vld [vmem:[%s2528 + $0x78] sm:%s2521]
                %2561 = vst [vmem:[%s2529 + $0x78] sm:%s2521] %v2560
                %v2562 = vld [vmem:[%s2528 + $0x80] sm:%s2521]
                %2563 = vst [vmem:[%s2529 + $0x80] sm:%s2521] %v2562
                %v2564 = vld [vmem:[%s2528 + $0x88] sm:%s2521]
                %2565 = vst [vmem:[%s2529 + $0x88] sm:%s2521] %v2564
                %v2566 = vld [vmem:[%s2528 + $0x90] sm:%s2521]
                %2567 = vst [vmem:[%s2529 + $0x90] sm:%s2521] %v2566
                %v2568 = vld [vmem:[%s2528 + $0x98] sm:%s2521]
                %2569 = vst [vmem:[%s2529 + $0x98] sm:%s2521] %v2568
                %v2570 = vld [vmem:[%s2528 + $0xa0] sm:%s2521]
                %2571 = vst [vmem:[%s2529 + $0xa0] sm:%s2521] %v2570
                %v2572 = vld [vmem:[%s2528 + $0xa8] sm:%s2521]
                %2573 = vst [vmem:[%s2529 + $0xa8] sm:%s2521] %v2572
                %v2574 = vld [vmem:[%s2528 + $0xb0] sm:%s2521]
                %2575 = vst [vmem:[%s2529 + $0xb0] sm:%s2521] %v2574
                %v2576 = vld [vmem:[%s2528 + $0xb8] sm:%s2521]
                %2577 = vst [vmem:[%s2529 + $0xb8] sm:%s2521] %v2576
                %v2578 = vld [vmem:[%s2528 + $0xc0] sm:%s2521]
                %2579 = vst [vmem:[%s2529 + $0xc0] sm:%s2521] %v2578
                %v2580 = vld [vmem:[%s2528 + $0xc8] sm:%s2521]
                %2581 = vst [vmem:[%s2529 + $0x190] sm:%s2521] %v2580
                %v2582 = vld [vmem:[%s2528 + $0xd0] sm:%s2521]
                %2583 = vst [vmem:[%s2529 + $0x198] sm:%s2521] %v2582
                %v2584 = vld [vmem:[%s2528 + $0xd8] sm:%s2521]
                %2585 = vst [vmem:[%s2529 + $0x1a0] sm:%s2521] %v2584
                %v2586 = vld [vmem:[%s2528 + $0xe0] sm:%s2521]
                %2587 = vst [vmem:[%s2529 + $0x1a8] sm:%s2521] %v2586
                %v2588 = vld [vmem:[%s2528 + $0xe8] sm:%s2521]
                %2589 = vst [vmem:[%s2529 + $0x1b0] sm:%s2521] %v2588
                %v2590 = vld [vmem:[%s2528 + $0xf0] sm:%s2521]
                %2591 = vst [vmem:[%s2529 + $0x1b8] sm:%s2521] %v2590
                %v2592 = vld [vmem:[%s2528 + $0xf8] sm:%s2521]
                %2593 = vst [vmem:[%s2529 + $0x1c0] sm:%s2521] %v2592
                %v2594 = vld [vmem:[%s2528 + $0x100] sm:%s2521]
                %2595 = vst [vmem:[%s2529 + $0x1c8] sm:%s2521] %v2594
                %v2596 = vld [vmem:[%s2528 + $0x108] sm:%s2521]
                %2597 = vst [vmem:[%s2529 + $0x1d0] sm:%s2521] %v2596
                %v2598 = vld [vmem:[%s2528 + $0x110] sm:%s2521]
                %2599 = vst [vmem:[%s2529 + $0x1d8] sm:%s2521] %v2598
                %v2600 = vld [vmem:[%s2528 + $0x118] sm:%s2521]
                %2601 = vst [vmem:[%s2529 + $0x1e0] sm:%s2521] %v2600
                %v2602 = vld [vmem:[%s2528 + $0x120] sm:%s2521]
                %2603 = vst [vmem:[%s2529 + $0x1e8] sm:%s2521] %v2602
                %v2604 = vld [vmem:[%s2528 + $0x128] sm:%s2521]
                %2605 = vst [vmem:[%s2529 + $0x1f0] sm:%s2521] %v2604
                %v2606 = vld [vmem:[%s2528 + $0x130] sm:%s2521]
                %2607 = vst [vmem:[%s2529 + $0x1f8] sm:%s2521] %v2606
                %v2608 = vld [vmem:[%s2528 + $0x138] sm:%s2521]
                %2609 = vst [vmem:[%s2529 + $0x200] sm:%s2521] %v2608
                %v2610 = vld [vmem:[%s2528 + $0x140] sm:%s2521]
                %2611 = vst [vmem:[%s2529 + $0x208] sm:%s2521] %v2610
                %v2612 = vld [vmem:[%s2528 + $0x148] sm:%s2521]
                %2613 = vst [vmem:[%s2529 + $0x210] sm:%s2521] %v2612
                %v2614 = vld [vmem:[%s2528 + $0x150] sm:%s2521]
                %2615 = vst [vmem:[%s2529 + $0x218] sm:%s2521] %v2614
                %v2616 = vld [vmem:[%s2528 + $0x158] sm:%s2521]
                %2617 = vst [vmem:[%s2529 + $0x220] sm:%s2521] %v2616
                %v2618 = vld [vmem:[%s2528 + $0x160] sm:%s2521]
                %2619 = vst [vmem:[%s2529 + $0x228] sm:%s2521] %v2618
                %v2620 = vld [vmem:[%s2528 + $0x168] sm:%s2521]
                %2621 = vst [vmem:[%s2529 + $0x230] sm:%s2521] %v2620
                %v2622 = vld [vmem:[%s2528 + $0x170] sm:%s2521]
                %2623 = vst [vmem:[%s2529 + $0x238] sm:%s2521] %v2622
                %v2624 = vld [vmem:[%s2528 + $0x178] sm:%s2521]
                %2625 = vst [vmem:[%s2529 + $0x240] sm:%s2521] %v2624
                %v2626 = vld [vmem:[%s2528 + $0x180] sm:%s2521]
                %2627 = vst [vmem:[%s2529 + $0x248] sm:%s2521] %v2626
                %v2628 = vld [vmem:[%s2528 + $0x188] sm:%s2521]
                %2629 = vst [vmem:[%s2529 + $0x250] sm:%s2521] %v2628
              $region57: #{clt_conv_forward.1} parent=51 // loop_footer
                %s2527 = sadd.s32 1, %s2523
              $region58: #{clt_conv_forward.1} parent=51 // loop_footer_branch
                %2522 = sbr.rel target = $region54
              $region59: #{clt_conv_forward.1} parent=51 // loop_exit
                _
            $region52: #{clt_conv_forward.1} parent=43 // pred_fallthru
              _
          $region44: #{clt_conv_forward.1} parent=39 // pred_fallthru
            _
          %2742 = vnop
        $region40: #{clt_conv_forward.1} parent=35 // pred_fallthru
          _
      $region36: #{clt_conv_forward.1} parent=5 // pred_fallthru
        _
      %p2743 = scmp.le.s32.totalorder 2, %s10
      // Predicated region
      $region75: #{clt_conv_forward.1} parent=5 // pred_check
        %p2744 = pneg %p2743
      $region76: #{clt_conv_forward.1} parent=5 // pred_check_branch
        %2746 = sbr.rel (%p2744) target = $region78
      $region77: #{clt_conv_forward.1} parent=5 // pred_region
        %s2747 = ssub.s32 %s10, 2
        // Predicated region
        $region79: #{clt_conv_forward.1} parent=77 // pred_check
          %p2748 = pneg %p128
        $region80: #{clt_conv_forward.1} parent=77 // pred_check_branch
          %2750 = sbr.rel (%p2748) target = $region82
        $region81: #{clt_conv_forward.1} parent=77 // pred_region
          %s2751 = sand.u32 %s113, 1
          %s2752 = sand.u32 %s113, 1
          %s2753 = smul.addr %s2752, 400
          %s2754 = scalar_lea.vmem [#allocation2], %s2753
        $region82: #{clt_conv_forward.1} parent=77 // pred_fallthru
          _
      $region78: #{clt_conv_forward.1} parent=5 // pred_fallthru
        _
    $region6: #{clt_conv_forward.1} parent=1 // loop_footer
      %s14 = sadd.s32 1, %s10
    $region7: #{clt_conv_forward.1} parent=1 // loop_footer_branch
      %9 = sbr.rel target = $region3
    $region8: #{clt_conv_forward.1} parent=1 // loop_exit
      _

</llo_original>
